<compile_context>
chip_gen: v5e
topology: v5e:2x2
jax: 0.10.0
libtpu: 0.0.40
codegen_flags: <defaults>
</compile_context>

<pallas_src>
import functools
import math

import jax
import jax.numpy as jnp
import numpy as np
from jax import lax
from jax.experimental import pallas as pl
from jax.experimental.pallas import tpu as pltpu

F32 = jnp.float32
BF16 = jnp.bfloat16


def _silu(x):
    return x * jax.nn.sigmoid(x)


def _rowsum(x):
    return jnp.sum(x, axis=1, keepdims=True)


def _cross3(a, b):
    # TODO(synk): width-1 lane slices; a pltpu.roll-based swizzle would move
    # this onto the XLU, left as simple slices for robustness.
    a0, a1, a2 = a[:, 0:1], a[:, 1:2], a[:, 2:3]
    b0, b1, b2 = b[:, 0:1], b[:, 1:2], b[:, 2:3]
    return jnp.concatenate(
        [a1 * b2 - a2 * b1, a2 * b0 - a0 * b2, a0 * b1 - a1 * b0], axis=1)


def _mxdot(a, b):
    # bf16 MXU operands, f32 accumulation; element-wise math stays f32.
    return jnp.dot(a.astype(BF16), b.astype(BF16), preferred_element_type=F32)


# --------------------------- fused per-graph kernel ---------------------------
def _clofnet_kernel(
    # per-graph data
    h0_ref, xc_ref, rowc_ref, colc_ref, roww_ref, nmask_ref, emask_ref,
    # embedding / edge-fusion weights
    emb_w_ref, emb_b_ref, fw1_ref, fb1_ref, fw2_ref, fb2_ref,
    # stacked per-layer weights [L, ...]
    ew1_ref, eb1_ref, ew2_ref, eb2_ref,
    cw1_ref, cb1_ref, cw2_ref,
    nw1_ref, nb1_ref, nw2_ref, nb2_ref,
    lnw_ref, lnb_ref,
    # output projection
    ow_ref, ob_ref,
    # packed output [h_out | x_out]
    out_ref,
    *, hidden_real,
):
    n = nmask_ref.shape[1]
    e = emask_ref.shape[1]
    Hp = emb_w_ref.shape[1]
    L = ew1_ref.shape[0]

    # ------- gather/scatter one-hots built in VMEM from int32 indices --------
    rowc = rowc_ref[0]                                     # (e, 1)
    colc = colc_ref[0]                                     # (e, 1)
    roww = roww_ref[0]                                     # (1, e)
    iota_en = lax.broadcasted_iota(jnp.int32, (e, n), 1)
    iota_ne = lax.broadcasted_iota(jnp.int32, (n, e), 0)
    roh_f = jnp.where(iota_en == rowc, 1.0, 0.0).astype(F32)   # (e, n)
    coh_f = jnp.where(iota_en == colc, 1.0, 0.0).astype(F32)   # (e, n)
    rts_f = jnp.where(iota_ne == roww, 1.0, 0.0).astype(F32)   # (n, e) scatter
    roh_b = roh_f.astype(BF16)
    coh_b = coh_f.astype(BF16)
    rts_b = rts_f.astype(BF16)

    # segment-mean reciprocal counts: 1 / clamp(count, 1)   (hoisted)
    cnt = jnp.maximum(_rowsum(rts_f), 1.0)                 # (n, 1)
    invc3 = jnp.broadcast_to(pl.reciprocal(cnt, approx=True), (n, 3))

    nmask = nmask_ref[0]                                   # (n, 1)
    nmask_h = jnp.broadcast_to(nmask, (n, Hp))             # hoisted broadcasts
    emask_h = jnp.broadcast_to(emask_ref[0], (e, Hp))

    # ------------------------------ node embedding ----------------------------
    h = _mxdot(h0_ref[0], emb_w_ref[...]) + emb_b_ref[...]      # (n, Hp)
    x = xc_ref[0]                                               # (n, 3)

    # ---------------- scalarization (once; f32 gathers, exact divides) --------
    xr = jnp.dot(roh_f, x, preferred_element_type=F32)
    xc_ = jnp.dot(coh_f, x, preferred_element_type=F32)
    d = xr - xc_
    radial = _rowsum(d * d)
    cr = _cross3(xr, xc_)
    d_n = d / (jnp.sqrt(radial) + 1.0)
    cr_n = cr / (jnp.sqrt(_rowsum(cr * cr)) + 1.0)
    v = _cross3(d_n, cr_n)
    coff_i = jnp.concatenate(
        [_rowsum(d_n * xr), _rowsum(cr_n * xr), _rowsum(v * xr)], axis=1)
    coff_j = jnp.concatenate(
        [_rowsum(d_n * xc_), _rowsum(cr_n * xc_), _rowsum(v * xc_)], axis=1)
    ni = jnp.sqrt(_rowsum(coff_i * coff_i)) + 1e-5
    nj = jnp.sqrt(_rowsum(coff_j * coff_j)) + 1e-5
    cosv = jnp.clip(_rowsum(coff_i * coff_j) / (ni * nj), -1.0, 1.0)
    sinv = jnp.sqrt(jnp.maximum(1.0 - cosv * cosv, 0.0))
    coff_feat = jnp.concatenate([sinv, cosv, coff_i, coff_j], axis=1)   # (e, 8)

    # fuse_edge MLP (tiny; kept f32 so edge features track the f32 reference)
    ef = _silu(jnp.dot(coff_feat, fw1_ref[...], preferred_element_type=F32)
               + fb1_ref[...])
    ef = _silu(jnp.dot(ef, fw2_ref[...], preferred_element_type=F32)
               + fb2_ref[...])

    inv_h = 1.0 / float(hidden_real)

    # -------------------------- Clof_GCL layer loop ---------------------------
    def layer_body(l, carry):
        h, x = carry
        # separate gathers: h via bf16 one-hot MXU, x via f32 (3-lane RHS)
        hs = _mxdot(roh_b, h)                               # (e, Hp)
        ht = _mxdot(coh_b, h)
        xr = jnp.dot(roh_f, x, preferred_element_type=F32)  # (e, 3)
        xc_ = jnp.dot(coh_f, x, preferred_element_type=F32)

        # local frame (norm_diff=True, eps=1e-8); divides -> EUP reciprocals
        d = xr - xc_
        radial = _rowsum(d * d)
        cr = _cross3(xr, xc_)
        d_n = d * pl.reciprocal(jnp.sqrt(radial + 1e-8) + 1.0, approx=True)
        cr_n = cr * pl.reciprocal(jnp.sqrt(_rowsum(cr * cr) + 1e-8) + 1.0,
                                  approx=True)
        v = _cross3(d_n, cr_n)

        # edge MLP
        edge_in = jnp.concatenate([hs, ht, radial, ef], axis=1)
        m = _silu(_mxdot(edge_in, ew1_ref[l]) + eb1_ref[l])
        m = _silu(_mxdot(m, ew2_ref[l]) + eb2_ref[l])
        m = m * emask_h

        # coord MLP
        cm = _silu(_mxdot(m, cw1_ref[l]) + cb1_ref[l])
        coff = _mxdot(cm, cw2_ref[l])                       # (e, 3)
        trans = d_n * coff[:, 0:1] + cr_n * coff[:, 1:2] + v * coff[:, 2:3]
        trans = jnp.clip(trans, -100.0, 100.0)

        # fused scatter: single roh_t MXU push for both h- and x-aggregation;
        # the split at lane offset Hp is 128-aligned.
        agg = _mxdot(rts_b, jnp.concatenate([m, trans], axis=1))   # (n, Hp+3)
        x = x + agg[:, Hp:] * invc3                                # coords_weight=1
        agg_h = agg[:, :Hp]

        # node MLP + residual (1/normalization_factor folded into nw1 on host)
        nin = jnp.concatenate([h, agg_h], axis=1)
        nh = _silu(_mxdot(nin, nw1_ref[l]) + nb1_ref[l])
        h = h + _mxdot(nh, nw2_ref[l]) + nb2_ref[l]

        # LayerNorm over the real hidden width (padded lanes are exactly zero)
        mu = _rowsum(h) * inv_h
        var = _rowsum(h * h) * inv_h - mu * mu
        h = (h - mu) * lax.rsqrt(var + 1e-5) * lnw_ref[l] + lnb_ref[l]
        h = h * nmask_h
        return h, x

    h, x = lax.fori_loop(0, L, layer_body, (h, x))

    # output projection + final node mask; packed [h_out | x_out] slab
    hout = (_mxdot(h, ow_ref[...]) + ob_ref[...]) * nmask
    out_ref[0] = jnp.concatenate([hout, x], axis=1)


# ------------------------------ host-side weight prep ---------------------------
def _pad_cols(w, to):
    return jnp.zeros((w.shape[0], to), F32).at[:, : w.shape[1]].set(w)


def _pad_rows(w, to):
    return jnp.zeros((to, w.shape[1]), F32).at[: w.shape[0], :].set(w)


def _pad_vec(b, to):
    return jnp.zeros((1, to), F32).at[0, : b.shape[0]].set(b)


def _prepare_weights(params, normalization_factor):
    """Pad hidden to a multiple of 128 lanes (zero pads keep padded lanes of h
    exactly zero through every layer), stack per-layer weights to [L, ...],
    and cast matmul weights to bf16."""
    H = params["emb_w"].shape[1]
    half = params["fw1"].shape[1]
    Hp = ((H + 127) // 128) * 128

    emb_w = _pad_cols(params["emb_w"], Hp).astype(BF16)
    emb_b = _pad_vec(params["emb_b"], Hp)
    ow = _pad_rows(params["emb_out_w"], Hp).astype(BF16)
    ob = params["emb_out_b"].reshape(1, -1)

    fw1, fb1 = params["fw1"], params["fb1"].reshape(1, -1)
    fw2, fb2 = params["fw2"], params["fb2"].reshape(1, -1)

    ew1s, eb1s, ew2s, eb2s = [], [], [], []
    cw1s, cb1s, cw2s = [], [], []
    nw1s, nb1s, nw2s, nb2s, lnws, lnbs = [], [], [], [], [], []
    for lp in params["layers"]:
        ew1 = jnp.zeros((2 * Hp + 1 + half, Hp), F32)
        ew1 = ew1.at[0:H, 0:H].set(lp["ew1"][0:H])
        ew1 = ew1.at[Hp:Hp + H, 0:H].set(lp["ew1"][H:2 * H])
        ew1 = ew1.at[2 * Hp:2 * Hp + 1 + half, 0:H].set(lp["ew1"][2 * H:])
        ew1s.append(ew1.astype(BF16))
        eb1s.append(_pad_vec(lp["eb1"], Hp))

        ew2s.append(jnp.zeros((Hp, Hp), F32).at[0:H, 0:H].set(lp["ew2"]).astype(BF16))
        eb2s.append(_pad_vec(lp["eb2"], Hp))

        cw1s.append(jnp.zeros((Hp, Hp), F32).at[0:H, 0:H].set(lp["cw1"]).astype(BF16))
        cb1s.append(_pad_vec(lp["cb1"], Hp))
        cw2s.append(_pad_rows(lp["cw2"], Hp).astype(BF16))

        nw1 = jnp.zeros((2 * Hp, Hp), F32)
        nw1 = nw1.at[0:H, 0:H].set(lp["nw1"][0:H])
        nw1 = nw1.at[Hp:Hp + H, 0:H].set(
            lp["nw1"][H:2 * H] * (1.0 / normalization_factor))
        nw1s.append(nw1.astype(BF16))
        nb1s.append(_pad_vec(lp["nb1"], Hp))

        nw2s.append(jnp.zeros((Hp, Hp), F32).at[0:H, 0:H].set(lp["nw2"]).astype(BF16))
        nb2s.append(_pad_vec(lp["nb2"], Hp))

        lnws.append(_pad_vec(lp["ln_w"], Hp))
        lnbs.append(_pad_vec(lp["ln_b"], Hp))

    stk = lambda xs: jnp.stack(xs, axis=0)
    weights = (emb_w, emb_b, fw1, fb1, fw2, fb2,
               stk(ew1s), stk(eb1s), stk(ew2s), stk(eb2s),
               stk(cw1s), stk(cb1s), stk(cw2s),
               stk(nw1s), stk(nb1s), stk(nw2s), stk(nb2s),
               stk(lnws), stk(lnbs), ow, ob)
    return weights, H, Hp


# ------------------------------ forward wrapper --------------------------------
def clofnet_forward(h, x, row, col, node_mask, edge_mask, params, n_nodes,
                    normalization_factor=1.0):
    N, in_nf = h.shape
    B = N // n_nodes
    E = row.shape[0]
    e = E // B   # edges assumed grouped per graph (standard block-diagonal batching)

    out_nf = params["emb_out_w"].shape[1]
    weights, H, Hp = _prepare_weights(params, normalization_factor)

    # coordinate centering (trivial glue left to XLA)
    x3 = x.reshape(B, n_nodes, 3)
    centroid = jnp.mean(x3, axis=1, keepdims=True)
    xc = x3 - centroid

    # per-graph local edge indices
    row_l = (row - (row // n_nodes) * n_nodes).astype(jnp.int32).reshape(B, e)
    col_l = (col - (col // n_nodes) * n_nodes).astype(jnp.int32).reshape(B, e)
    rowc = row_l.reshape(B, e, 1)
    colc = col_l.reshape(B, e, 1)
    roww = row_l.reshape(B, 1, e)

    h3 = h.reshape(B, n_nodes, in_nf)
    nmask = node_mask.reshape(B, n_nodes, 1)
    emask = edge_mask.reshape(B, e, 1)

    data_specs = [
        pl.BlockSpec((1, n_nodes, in_nf), lambda b: (b, 0, 0)),
        pl.BlockSpec((1, n_nodes, 3), lambda b: (b, 0, 0)),
        pl.BlockSpec((1, e, 1), lambda b: (b, 0, 0)),
        pl.BlockSpec((1, e, 1), lambda b: (b, 0, 0)),
        pl.BlockSpec((1, 1, e), lambda b: (b, 0, 0)),
        pl.BlockSpec((1, n_nodes, 1), lambda b: (b, 0, 0)),
        pl.BlockSpec((1, e, 1), lambda b: (b, 0, 0)),
    ]

    def _const_spec(a):
        zeros = (0,) * a.ndim
        return pl.BlockSpec(a.shape, lambda b, _z=zeros: _z)

    weight_specs = [_const_spec(w) for w in weights]

    out = pl.pallas_call(
        functools.partial(_clofnet_kernel, hidden_real=H),
        out_shape=jax.ShapeDtypeStruct((B, n_nodes, out_nf + 3), F32),
        grid=(B,),
        in_specs=data_specs + weight_specs,
        out_specs=pl.BlockSpec((1, n_nodes, out_nf + 3), lambda b: (b, 0, 0)),
        compiler_params=pltpu.CompilerParams(
            dimension_semantics=("parallel",),
            vmem_limit_bytes=48 * 1024 * 1024),
    )(h3, xc, rowc, colc, roww, nmask, emask, *weights)

    h_out = out[..., :out_nf].reshape(N, out_nf)
    x_out = (out[..., out_nf:] + centroid).reshape(N, 3)
    return h_out, x_out


# ------------------------------ pure-JAX reference ------------------------------
def clofnet_ref(h, x, row, col, node_mask, edge_mask, params, n_nodes,
                normalization_factor=1.0, coords_weight=1.0):
    def silu(t):
        return t * jax.nn.sigmoid(t)

    N = h.shape[0]
    B = N // n_nodes
    h = h @ params["emb_w"] + params["emb_b"]
    x3 = x.reshape(B, n_nodes, 3)
    centroid = jnp.mean(x3, axis=1, keepdims=True)
    coord = (x3 - centroid).reshape(-1, 3)

    # scalarization
    xr, xc = coord[row], coord[col]
    d = xr - xc
    radial = jnp.sum(d ** 2, axis=1, keepdims=True)
    cr = jnp.cross(xr, xc)
    d_n = d / (jnp.sqrt(radial) + 1.0)
    cr_n = cr / (jnp.sqrt(jnp.sum(cr ** 2, axis=1, keepdims=True)) + 1.0)
    v = jnp.cross(d_n, cr_n)
    basis = jnp.stack([d_n, cr_n, v], axis=1)
    coff_i = jnp.einsum("eij,ej->ei", basis, xr)
    coff_j = jnp.einsum("eij,ej->ei", basis, xc)
    ni = jnp.linalg.norm(coff_i, axis=-1, keepdims=True) + 1e-5
    nj = jnp.linalg.norm(coff_j, axis=-1, keepdims=True) + 1e-5
    # clamp is insurance against FP rounding pushing |cos| past 1 (same in kernel)
    cosv = jnp.clip(jnp.sum(coff_i * coff_j, axis=-1, keepdims=True) / ni / nj,
                    -1.0, 1.0)
    sinv = jnp.sqrt(jnp.maximum(1.0 - cosv ** 2, 0.0))
    coff_feat = jnp.concatenate([sinv, cosv, coff_i, coff_j], axis=-1)
    ef = silu(coff_feat @ params["fw1"] + params["fb1"])
    ef = silu(ef @ params["fw2"] + params["fb2"])

    for lp in params["layers"]:
        xr, xc = coord[row], coord[col]
        d = xr - xc
        radial = jnp.sum(d ** 2, axis=1, keepdims=True)
        cr = jnp.cross(xr, xc)
        d_n = d / (jnp.sqrt(radial + 1e-8) + 1.0)
        cr_n = cr / (jnp.sqrt(jnp.sum(cr ** 2, axis=1, keepdims=True) + 1e-8) + 1.0)
        v = jnp.cross(d_n, cr_n)

        ein = jnp.concatenate([h[row], h[col], radial, ef], axis=1)
        m = silu(ein @ lp["ew1"] + lp["eb1"])
        m = silu(m @ lp["ew2"] + lp["eb2"])
        m = m * edge_mask

        coff = silu(m @ lp["cw1"] + lp["cb1"]) @ lp["cw2"]
        trans = d_n * coff[:, 0:1] + cr_n * coff[:, 1:2] + v * coff[:, 2:3]
        trans = jnp.clip(trans, -100.0, 100.0)
        agg = jnp.zeros((N, 3), F32).at[row].add(trans)
        cnt = jnp.zeros((N, 3), F32).at[row].add(jnp.ones_like(trans))
        coord = coord + (agg / jnp.clip(cnt, 1.0, None)) * coords_weight

        aggh = jnp.zeros((N, m.shape[1]), F32).at[row].add(m) / normalization_factor
        nin = jnp.concatenate([h, aggh], axis=1)
        out = silu(nin @ lp["nw1"] + lp["nb1"]) @ lp["nw2"] + lp["nb2"]
        h = h + out
        mu = jnp.mean(h, axis=1, keepdims=True)
        var = jnp.mean((h - mu) ** 2, axis=1, keepdims=True)
        h = (h - mu) / jnp.sqrt(var + 1e-5) * lp["ln_w"] + lp["ln_b"]
        h = h * node_mask

    x_out = (coord.reshape(B, n_nodes, 3) + centroid).reshape(-1, 3)
    h = (h @ params["emb_out_w"] + params["emb_out_b"]) * node_mask
    return h, x_out


# ------------------------------ parameter init ----------------------------------
def _init_linear(key, fan_in, fan_out):
    k1, k2 = jax.random.split(key)
    bound = 1.0 / math.sqrt(fan_in)
    w = jax.random.uniform(k1, (fan_in, fan_out), F32, -bound, bound)
    b = jax.random.uniform(k2, (fan_out,), F32, -bound, bound)
    return w, b


def _init_xavier(key, fan_in, fan_out, gain):
    bound = gain * math.sqrt(6.0 / (fan_in + fan_out))
    return jax.random.uniform(key, (fan_in, fan_out), F32, -bound, bound)


def init_params(key, in_node_nf, hidden_nf, out_node_nf, n_layers):
    keys = jax.random.split(key, 4 + 6 * n_layers)
    half = hidden_nf // 2
    p = {}
    p["emb_w"], p["emb_b"] = _init_linear(keys[0], in_node_nf, hidden_nf)
    p["emb_out_w"], p["emb_out_b"] = _init_linear(keys[1], hidden_nf, out_node_nf)
    p["fw1"], p["fb1"] = _init_linear(keys[2], 8, half)
    p["fw2"], p["fb2"] = _init_linear(keys[3], half, half)
    layers = []
    for i in range(n_layers):
        k = keys[4 + 6 * i: 4 + 6 * (i + 1)]
        lp = {}
        edge_in = 2 * hidden_nf + 1 + half        # source|target|radial|edge_attr
        lp["ew1"], lp["eb1"] = _init_linear(k[0], edge_in, hidden_nf)
        lp["ew2"], lp["eb2"] = _init_linear(k[1], hidden_nf, hidden_nf)
        lp["cw1"], lp["cb1"] = _init_linear(k[2], hidden_nf, hidden_nf)
        lp["cw2"] = _init_xavier(k[3], hidden_nf, 3, gain=0.001)   # no bias
        lp["nw1"], lp["nb1"] = _init_linear(k[4], 2 * hidden_nf, hidden_nf)
        lp["nw2"], lp["nb2"] = _init_linear(k[5], hidden_nf, hidden_nf)
        lp["ln_w"] = jnp.ones((hidden_nf,), F32)
        lp["ln_b"] = jnp.zeros((hidden_nf,), F32)
        layers.append(lp)
    p["layers"] = layers
    return p


# ------------------------------------ main ---------------------------------------
if __name__ == "__main__":
    # ClofNet defaults: attention=False, tanh=False, recurrent=False, norm_diff=True
    B, N_NODES, IN_NF, HIDDEN, NLAYERS = 2, 5, 4, 32, 4
    OUT_NF = IN_NF          # out_node_nf defaults to in_node_nf
    N = B * N_NODES
    NORM = 1.0              # normalization_factor=1, aggregation_method='sum'

    key = jax.random.PRNGKey(0)
    kh, kx, kp = jax.random.split(key, 3)

    # per-graph fully connected edge index without self-loops (grouped by graph)
    rows, cols = [], []
    for b in range(B):
        off = b * N_NODES
        for i in range(N_NODES):
            for j in range(N_NODES):
                if i != j:
                    rows.append(off + i)
                    cols.append(off + j)
    row = jnp.array(rows, dtype=jnp.int32)
    col = jnp.array(cols, dtype=jnp.int32)

    h0 = jax.random.normal(kh, (N, IN_NF), F32)
    x0 = jax.random.normal(kx, (N, 3), F32)
    node_mask = jnp.ones((N, 1), F32)
    node_mask = node_mask.at[N_NODES - 1, 0].set(0.0).at[N - 1, 0].set(0.0)
    edge_mask = node_mask[row] * node_mask[col]

    params = init_params(kp, IN_NF, HIDDEN, OUT_NF, NLAYERS)

    h_out, x_out = clofnet_forward(h0, x0, row, col, node_mask, edge_mask,
                                   params, N_NODES, NORM)
    h_out = jax.block_until_ready(h_out)
    x_out = jax.block_until_ready(x_out)

    h_ref, x_ref = clofnet_ref(h0, x0, row, col, node_mask, edge_mask,
                               params, N_NODES, NORM)
    # bf16 MXU operands (per perf review) => tolerance loosened vs the f32 ref;
    # coordinates are barely perturbed so they keep a tight tolerance.
    np.testing.assert_allclose(np.asarray(h_out), np.asarray(h_ref),
                               rtol=2e-2, atol=2e-2)
    np.testing.assert_allclose(np.asarray(x_out), np.asarray(x_ref),
                               rtol=1e-3, atol=1e-3)
    print("KERNEL_OK")
</pallas_src>

<mosaic_0001>
module attributes {stable_mosaic.version = 11 : i64} {
  func.func @_clofnet_kernel(%arg0: i32, %arg1: memref<1x5x4xf32, #tpu.memory_space<vmem>>, %arg2: memref<1x5x3xf32, #tpu.memory_space<vmem>>, %arg3: memref<1x20x1xi32, #tpu.memory_space<vmem>>, %arg4: memref<1x20x1xi32, #tpu.memory_space<vmem>>, %arg5: memref<1x1x20xi32, #tpu.memory_space<vmem>>, %arg6: memref<1x5x1xf32, #tpu.memory_space<vmem>>, %arg7: memref<1x20x1xf32, #tpu.memory_space<vmem>>, %arg8: memref<4x128xbf16, #tpu.memory_space<vmem>>, %arg9: memref<1x128xf32, #tpu.memory_space<vmem>>, %arg10: memref<8x16xf32, #tpu.memory_space<vmem>>, %arg11: memref<1x16xf32, #tpu.memory_space<vmem>>, %arg12: memref<16x16xf32, #tpu.memory_space<vmem>>, %arg13: memref<1x16xf32, #tpu.memory_space<vmem>>, %arg14: memref<4x273x128xbf16, #tpu.memory_space<vmem>>, %arg15: memref<4x1x128xf32, #tpu.memory_space<vmem>>, %arg16: memref<4x128x128xbf16, #tpu.memory_space<vmem>>, %arg17: memref<4x1x128xf32, #tpu.memory_space<vmem>>, %arg18: memref<4x128x128xbf16, #tpu.memory_space<vmem>>, %arg19: memref<4x1x128xf32, #tpu.memory_space<vmem>>, %arg20: memref<4x128x3xbf16, #tpu.memory_space<vmem>>, %arg21: memref<4x256x128xbf16, #tpu.memory_space<vmem>>, %arg22: memref<4x1x128xf32, #tpu.memory_space<vmem>>, %arg23: memref<4x128x128xbf16, #tpu.memory_space<vmem>>, %arg24: memref<4x1x128xf32, #tpu.memory_space<vmem>>, %arg25: memref<4x1x128xf32, #tpu.memory_space<vmem>>, %arg26: memref<4x1x128xf32, #tpu.memory_space<vmem>>, %arg27: memref<128x4xbf16, #tpu.memory_space<vmem>>, %arg28: memref<1x4xf32, #tpu.memory_space<vmem>>, %arg29: memref<1x5x7xf32, #tpu.memory_space<vmem>>) attributes {dimension_semantics = [#tpu.dimension_semantics<parallel>], iteration_bounds = array<i64: 2>, scalar_prefetch = 0 : i64, scratch_operands = 0 : i64, tpu.core_type = #tpu.core_type<tc>, window_params = [{transform_indices = @transform_0, window_bounds = array<i64: 1, 5, 4>}, {transform_indices = @transform_1, window_bounds = array<i64: 1, 5, 3>}, {transform_indices = @transform_2, window_bounds = array<i64: 1, 20, 1>}, {transform_indices = @transform_3, window_bounds = array<i64: 1, 20, 1>}, {transform_indices = @transform_4, window_bounds = array<i64: 1, 1, 20>}, {transform_indices = @transform_5, window_bounds = array<i64: 1, 5, 1>}, {transform_indices = @transform_6, window_bounds = array<i64: 1, 20, 1>}, {pipeline_mode = #tpu.pipeline_mode<synchronous>, transform_indices = @transform_7, window_bounds = array<i64: 4, 128>}, {pipeline_mode = #tpu.pipeline_mode<synchronous>, transform_indices = @transform_8, window_bounds = array<i64: 1, 128>}, {pipeline_mode = #tpu.pipeline_mode<synchronous>, transform_indices = @transform_9, window_bounds = array<i64: 8, 16>}, {pipeline_mode = #tpu.pipeline_mode<synchronous>, transform_indices = @transform_10, window_bounds = array<i64: 1, 16>}, {pipeline_mode = #tpu.pipeline_mode<synchronous>, transform_indices = @transform_11, window_bounds = array<i64: 16, 16>}, {pipeline_mode = #tpu.pipeline_mode<synchronous>, transform_indices = @transform_12, window_bounds = array<i64: 1, 16>}, {pipeline_mode = #tpu.pipeline_mode<synchronous>, transform_indices = @transform_13, window_bounds = array<i64: 4, 273, 128>}, {pipeline_mode = #tpu.pipeline_mode<synchronous>, transform_indices = @transform_14, window_bounds = array<i64: 4, 1, 128>}, {pipeline_mode = #tpu.pipeline_mode<synchronous>, transform_indices = @transform_15, window_bounds = array<i64: 4, 128, 128>}, {pipeline_mode = #tpu.pipeline_mode<synchronous>, transform_indices = @transform_16, window_bounds = array<i64: 4, 1, 128>}, {pipeline_mode = #tpu.pipeline_mode<synchronous>, transform_indices = @transform_17, window_bounds = array<i64: 4, 128, 128>}, {pipeline_mode = #tpu.pipeline_mode<synchronous>, transform_indices = @transform_18, window_bounds = array<i64: 4, 1, 128>}, {pipeline_mode = #tpu.pipeline_mode<synchronous>, transform_indices = @transform_19, window_bounds = array<i64: 4, 128, 3>}, {pipeline_mode = #tpu.pipeline_mode<synchronous>, transform_indices = @transform_20, window_bounds = array<i64: 4, 256, 128>}, {pipeline_mode = #tpu.pipeline_mode<synchronous>, transform_indices = @transform_21, window_bounds = array<i64: 4, 1, 128>}, {pipeline_mode = #tpu.pipeline_mode<synchronous>, transform_indices = @transform_22, window_bounds = array<i64: 4, 128, 128>}, {pipeline_mode = #tpu.pipeline_mode<synchronous>, transform_indices = @transform_23, window_bounds = array<i64: 4, 1, 128>}, {pipeline_mode = #tpu.pipeline_mode<synchronous>, transform_indices = @transform_24, window_bounds = array<i64: 4, 1, 128>}, {pipeline_mode = #tpu.pipeline_mode<synchronous>, transform_indices = @transform_25, window_bounds = array<i64: 4, 1, 128>}, {pipeline_mode = #tpu.pipeline_mode<synchronous>, transform_indices = @transform_26, window_bounds = array<i64: 128, 4>}, {pipeline_mode = #tpu.pipeline_mode<synchronous>, transform_indices = @transform_27, window_bounds = array<i64: 1, 4>}, {transform_indices = @transform_28, window_bounds = array<i64: 1, 5, 7>}]} {
    %c0 = arith.constant 0 : index
    %c0_0 = arith.constant 0 : index
    %c0_1 = arith.constant 0 : index
    %0 = vector.load %arg3[%c0, %c0_0, %c0_1] : memref<1x20x1xi32, #tpu.memory_space<vmem>>, vector<1x20x1xi32>
    %1 = vector.shape_cast %0 : vector<1x20x1xi32> to vector<20x1xi32>
    %c0_2 = arith.constant 0 : index
    %c0_3 = arith.constant 0 : index
    %c0_4 = arith.constant 0 : index
    %2 = vector.load %arg4[%c0_2, %c0_3, %c0_4] : memref<1x20x1xi32, #tpu.memory_space<vmem>>, vector<1x20x1xi32>
    %3 = vector.shape_cast %2 : vector<1x20x1xi32> to vector<20x1xi32>
    %c0_5 = arith.constant 0 : index
    %c0_6 = arith.constant 0 : index
    %c0_7 = arith.constant 0 : index
    %4 = vector.load %arg5[%c0_5, %c0_6, %c0_7] : memref<1x1x20xi32, #tpu.memory_space<vmem>>, vector<1x1x20xi32>
    %5 = vector.shape_cast %4 : vector<1x1x20xi32> to vector<1x20xi32>
    %6 = tpu.iota {dimensions = array<i32: 1>} : vector<20x5xi32>
    %7 = tpu.iota {dimensions = array<i32: 0>} : vector<5x20xi32>
    %8 = vector.broadcast %1 : vector<20x1xi32> to vector<20x5xi32>
    %9 = arith.cmpi eq, %6, %8 : vector<20x5xi32>
    %cst = arith.constant 1.000000e+00 : f32
    %cst_8 = arith.constant 0.000000e+00 : f32
    %10 = vector.broadcast %cst : f32 to vector<20x5xf32>
    %11 = vector.broadcast %cst_8 : f32 to vector<20x5xf32>
    %12 = arith.select %9, %10, %11 : vector<20x5xi1>, vector<20x5xf32>
    %13 = vector.broadcast %3 : vector<20x1xi32> to vector<20x5xi32>
    %14 = arith.cmpi eq, %6, %13 : vector<20x5xi32>
    %cst_9 = arith.constant 1.000000e+00 : f32
    %cst_10 = arith.constant 0.000000e+00 : f32
    %15 = vector.broadcast %cst_9 : f32 to vector<20x5xf32>
    %16 = vector.broadcast %cst_10 : f32 to vector<20x5xf32>
    %17 = arith.select %14, %15, %16 : vector<20x5xi1>, vector<20x5xf32>
    %18 = vector.broadcast %5 : vector<1x20xi32> to vector<5x20xi32>
    %19 = arith.cmpi eq, %7, %18 : vector<5x20xi32>
    %cst_11 = arith.constant 1.000000e+00 : f32
    %cst_12 = arith.constant 0.000000e+00 : f32
    %20 = vector.broadcast %cst_11 : f32 to vector<5x20xf32>
    %21 = vector.broadcast %cst_12 : f32 to vector<5x20xf32>
    %22 = arith.select %19, %20, %21 : vector<5x20xi1>, vector<5x20xf32>
    %23 = arith.truncf %12 : vector<20x5xf32> to vector<20x5xbf16>
    %24 = arith.truncf %17 : vector<20x5xf32> to vector<20x5xbf16>
    %25 = arith.truncf %22 : vector<5x20xf32> to vector<5x20xbf16>
    %cst_13 = arith.constant dense<0.000000e+00> : vector<5xf32>
    %26 = vector.multi_reduction <add>, %22, %cst_13 [1] : vector<5x20xf32> to vector<5xf32>
    %27 = vector.shape_cast %26 : vector<5xf32> to vector<5x1xf32>
    %cst_14 = arith.constant 1.000000e+00 : f32
    %28 = vector.broadcast %cst_14 : f32 to vector<5x1xf32>
    %29 = arith.maximumf %27, %28 : vector<5x1xf32>
    %30 = tpu.reciprocal %29 {approx = true} : vector<5x1xf32> -> vector<5x1xf32>
    %31 = vector.shape_cast %30 : vector<5x1xf32> to vector<5x1xf32>
    %32 = vector.broadcast %31 : vector<5x1xf32> to vector<5x3xf32>
    %c0_15 = arith.constant 0 : index
    %c0_16 = arith.constant 0 : index
    %c0_17 = arith.constant 0 : index
    %33 = vector.load %arg6[%c0_15, %c0_16, %c0_17] : memref<1x5x1xf32, #tpu.memory_space<vmem>>, vector<1x5x1xf32>
    %34 = vector.shape_cast %33 : vector<1x5x1xf32> to vector<5x1xf32>
    %35 = vector.shape_cast %34 : vector<5x1xf32> to vector<5x1xf32>
    %36 = vector.broadcast %35 : vector<5x1xf32> to vector<5x128xf32>
    %c0_18 = arith.constant 0 : index
    %c0_19 = arith.constant 0 : index
    %c0_20 = arith.constant 0 : index
    %37 = vector.load %arg7[%c0_18, %c0_19, %c0_20] : memref<1x20x1xf32, #tpu.memory_space<vmem>>, vector<1x20x1xf32>
    %38 = vector.shape_cast %37 : vector<1x20x1xf32> to vector<20x1xf32>
    %39 = vector.shape_cast %38 : vector<20x1xf32> to vector<20x1xf32>
    %40 = vector.broadcast %39 : vector<20x1xf32> to vector<20x128xf32>
    %c0_21 = arith.constant 0 : index
    %c0_22 = arith.constant 0 : index
    %c0_23 = arith.constant 0 : index
    %41 = vector.load %arg1[%c0_21, %c0_22, %c0_23] : memref<1x5x4xf32, #tpu.memory_space<vmem>>, vector<1x5x4xf32>
    %42 = vector.shape_cast %41 : vector<1x5x4xf32> to vector<5x4xf32>
    %c0_24 = arith.constant 0 : index
    %c0_25 = arith.constant 0 : index
    %43 = vector.load %arg8[%c0_24, %c0_25] : memref<4x128xbf16, #tpu.memory_space<vmem>>, vector<4x128xbf16>
    %44 = arith.truncf %42 : vector<5x4xf32> to vector<5x4xbf16>
    %cst_26 = arith.constant dense<0.000000e+00> : vector<5x128xf32>
    %45 = tpu.matmul %44, %43, %cst_26 {dimension_numbers = #tpu.dot_dimension_numbers<[1], [0], [0], [1], [0, 0, 1, 1], [], []>} : vector<5x4xbf16>, vector<4x128xbf16>, vector<5x128xf32> -> vector<5x128xf32>
    %c0_27 = arith.constant 0 : index
    %c0_28 = arith.constant 0 : index
    %46 = vector.load %arg9[%c0_27, %c0_28] : memref<1x128xf32, #tpu.memory_space<vmem>>, vector<1x128xf32>
    %47 = vector.broadcast %46 : vector<1x128xf32> to vector<5x128xf32>
    %48 = arith.addf %45, %47 : vector<5x128xf32>
    %c0_29 = arith.constant 0 : index
    %c0_30 = arith.constant 0 : index
    %c0_31 = arith.constant 0 : index
    %49 = vector.load %arg2[%c0_29, %c0_30, %c0_31] : memref<1x5x3xf32, #tpu.memory_space<vmem>>, vector<1x5x3xf32>
    %50 = vector.shape_cast %49 : vector<1x5x3xf32> to vector<5x3xf32>
    %cst_32 = arith.constant dense<0.000000e+00> : vector<20x3xf32>
    %51 = tpu.matmul %12, %50, %cst_32 {dimension_numbers = #tpu.dot_dimension_numbers<[1], [0], [0], [1], [0, 0, 1, 1], [], []>} : vector<20x5xf32>, vector<5x3xf32>, vector<20x3xf32> -> vector<20x3xf32>
    %cst_33 = arith.constant dense<0.000000e+00> : vector<20x3xf32>
    %52 = tpu.matmul %17, %50, %cst_33 {dimension_numbers = #tpu.dot_dimension_numbers<[1], [0], [0], [1], [0, 0, 1, 1], [], []>} : vector<20x5xf32>, vector<5x3xf32>, vector<20x3xf32> -> vector<20x3xf32>
    %53 = arith.subf %51, %52 : vector<20x3xf32>
    %54 = arith.mulf %53, %53 : vector<20x3xf32>
    %cst_34 = arith.constant dense<0.000000e+00> : vector<20xf32>
    %55 = vector.multi_reduction <add>, %54, %cst_34 [1] : vector<20x3xf32> to vector<20xf32>
    %56 = vector.shape_cast %55 : vector<20xf32> to vector<20x1xf32>
    %57 = vector.extract_strided_slice %51 {offsets = [0, 0], sizes = [20, 1], strides = [1, 1]} : vector<20x3xf32> to vector<20x1xf32>
    %58 = vector.extract_strided_slice %51 {offsets = [0, 1], sizes = [20, 1], strides = [1, 1]} : vector<20x3xf32> to vector<20x1xf32>
    %59 = vector.extract_strided_slice %51 {offsets = [0, 2], sizes = [20, 1], strides = [1, 1]} : vector<20x3xf32> to vector<20x1xf32>
    %60 = vector.extract_strided_slice %52 {offsets = [0, 0], sizes = [20, 1], strides = [1, 1]} : vector<20x3xf32> to vector<20x1xf32>
    %61 = vector.extract_strided_slice %52 {offsets = [0, 1], sizes = [20, 1], strides = [1, 1]} : vector<20x3xf32> to vector<20x1xf32>
    %62 = vector.extract_strided_slice %52 {offsets = [0, 2], sizes = [20, 1], strides = [1, 1]} : vector<20x3xf32> to vector<20x1xf32>
    %63 = arith.mulf %58, %62 : vector<20x1xf32>
    %64 = arith.mulf %59, %61 : vector<20x1xf32>
    %65 = arith.subf %63, %64 : vector<20x1xf32>
    %66 = arith.mulf %59, %60 : vector<20x1xf32>
    %67 = arith.mulf %57, %62 : vector<20x1xf32>
    %68 = arith.subf %66, %67 : vector<20x1xf32>
    %69 = arith.mulf %57, %61 : vector<20x1xf32>
    %70 = arith.mulf %58, %60 : vector<20x1xf32>
    %71 = arith.subf %69, %70 : vector<20x1xf32>
    %72 = tpu.concatenate %65, %68, %71 in 1 : vector<20x1xf32>, vector<20x1xf32>, vector<20x1xf32> -> vector<20x3xf32>
    %73 = math.sqrt %56 : vector<20x1xf32>
    %cst_35 = arith.constant 1.000000e+00 : f32
    %74 = vector.broadcast %cst_35 : f32 to vector<20x1xf32>
    %75 = arith.addf %73, %74 : vector<20x1xf32>
    %76 = vector.broadcast %75 : vector<20x1xf32> to vector<20x3xf32>
    %77 = arith.divf %53, %76 : vector<20x3xf32>
    %78 = arith.mulf %72, %72 : vector<20x3xf32>
    %cst_36 = arith.constant dense<0.000000e+00> : vector<20xf32>
    %79 = vector.multi_reduction <add>, %78, %cst_36 [1] : vector<20x3xf32> to vector<20xf32>
    %80 = vector.shape_cast %79 : vector<20xf32> to vector<20x1xf32>
    %81 = math.sqrt %80 : vector<20x1xf32>
    %cst_37 = arith.constant 1.000000e+00 : f32
    %82 = vector.broadcast %cst_37 : f32 to vector<20x1xf32>
    %83 = arith.addf %81, %82 : vector<20x1xf32>
    %84 = vector.broadcast %83 : vector<20x1xf32> to vector<20x3xf32>
    %85 = arith.divf %72, %84 : vector<20x3xf32>
    %86 = vector.extract_strided_slice %77 {offsets = [0, 0], sizes = [20, 1], strides = [1, 1]} : vector<20x3xf32> to vector<20x1xf32>
    %87 = vector.extract_strided_slice %77 {offsets = [0, 1], sizes = [20, 1], strides = [1, 1]} : vector<20x3xf32> to vector<20x1xf32>
    %88 = vector.extract_strided_slice %77 {offsets = [0, 2], sizes = [20, 1], strides = [1, 1]} : vector<20x3xf32> to vector<20x1xf32>
    %89 = vector.extract_strided_slice %85 {offsets = [0, 0], sizes = [20, 1], strides = [1, 1]} : vector<20x3xf32> to vector<20x1xf32>
    %90 = vector.extract_strided_slice %85 {offsets = [0, 1], sizes = [20, 1], strides = [1, 1]} : vector<20x3xf32> to vector<20x1xf32>
    %91 = vector.extract_strided_slice %85 {offsets = [0, 2], sizes = [20, 1], strides = [1, 1]} : vector<20x3xf32> to vector<20x1xf32>
    %92 = arith.mulf %87, %91 : vector<20x1xf32>
    %93 = arith.mulf %88, %90 : vector<20x1xf32>
    %94 = arith.subf %92, %93 : vector<20x1xf32>
    %95 = arith.mulf %88, %89 : vector<20x1xf32>
    %96 = arith.mulf %86, %91 : vector<20x1xf32>
    %97 = arith.subf %95, %96 : vector<20x1xf32>
    %98 = arith.mulf %86, %90 : vector<20x1xf32>
    %99 = arith.mulf %87, %89 : vector<20x1xf32>
    %100 = arith.subf %98, %99 : vector<20x1xf32>
    %101 = tpu.concatenate %94, %97, %100 in 1 : vector<20x1xf32>, vector<20x1xf32>, vector<20x1xf32> -> vector<20x3xf32>
    %102 = arith.mulf %77, %51 : vector<20x3xf32>
    %cst_38 = arith.constant dense<0.000000e+00> : vector<20xf32>
    %103 = vector.multi_reduction <add>, %102, %cst_38 [1] : vector<20x3xf32> to vector<20xf32>
    %104 = vector.shape_cast %103 : vector<20xf32> to vector<20x1xf32>
    %105 = arith.mulf %85, %51 : vector<20x3xf32>
    %cst_39 = arith.constant dense<0.000000e+00> : vector<20xf32>
    %106 = vector.multi_reduction <add>, %105, %cst_39 [1] : vector<20x3xf32> to vector<20xf32>
    %107 = vector.shape_cast %106 : vector<20xf32> to vector<20x1xf32>
    %108 = arith.mulf %101, %51 : vector<20x3xf32>
    %cst_40 = arith.constant dense<0.000000e+00> : vector<20xf32>
    %109 = vector.multi_reduction <add>, %108, %cst_40 [1] : vector<20x3xf32> to vector<20xf32>
    %110 = vector.shape_cast %109 : vector<20xf32> to vector<20x1xf32>
    %111 = tpu.concatenate %104, %107, %110 in 1 : vector<20x1xf32>, vector<20x1xf32>, vector<20x1xf32> -> vector<20x3xf32>
    %112 = arith.mulf %77, %52 : vector<20x3xf32>
    %cst_41 = arith.constant dense<0.000000e+00> : vector<20xf32>
    %113 = vector.multi_reduction <add>, %112, %cst_41 [1] : vector<20x3xf32> to vector<20xf32>
    %114 = vector.shape_cast %113 : vector<20xf32> to vector<20x1xf32>
    %115 = arith.mulf %85, %52 : vector<20x3xf32>
    %cst_42 = arith.constant dense<0.000000e+00> : vector<20xf32>
    %116 = vector.multi_reduction <add>, %115, %cst_42 [1] : vector<20x3xf32> to vector<20xf32>
    %117 = vector.shape_cast %116 : vector<20xf32> to vector<20x1xf32>
    %118 = arith.mulf %101, %52 : vector<20x3xf32>
    %cst_43 = arith.constant dense<0.000000e+00> : vector<20xf32>
    %119 = vector.multi_reduction <add>, %118, %cst_43 [1] : vector<20x3xf32> to vector<20xf32>
    %120 = vector.shape_cast %119 : vector<20xf32> to vector<20x1xf32>
    %121 = tpu.concatenate %114, %117, %120 in 1 : vector<20x1xf32>, vector<20x1xf32>, vector<20x1xf32> -> vector<20x3xf32>
    %122 = arith.mulf %111, %111 : vector<20x3xf32>
    %cst_44 = arith.constant dense<0.000000e+00> : vector<20xf32>
    %123 = vector.multi_reduction <add>, %122, %cst_44 [1] : vector<20x3xf32> to vector<20xf32>
    %124 = vector.shape_cast %123 : vector<20xf32> to vector<20x1xf32>
    %125 = math.sqrt %124 : vector<20x1xf32>
    %cst_45 = arith.constant 9.99999974E-6 : f32
    %126 = vector.broadcast %cst_45 : f32 to vector<20x1xf32>
    %127 = arith.addf %125, %126 : vector<20x1xf32>
    %128 = arith.mulf %121, %121 : vector<20x3xf32>
    %cst_46 = arith.constant dense<0.000000e+00> : vector<20xf32>
    %129 = vector.multi_reduction <add>, %128, %cst_46 [1] : vector<20x3xf32> to vector<20xf32>
    %130 = vector.shape_cast %129 : vector<20xf32> to vector<20x1xf32>
    %131 = math.sqrt %130 : vector<20x1xf32>
    %cst_47 = arith.constant 9.99999974E-6 : f32
    %132 = vector.broadcast %cst_47 : f32 to vector<20x1xf32>
    %133 = arith.addf %131, %132 : vector<20x1xf32>
    %134 = arith.mulf %111, %121 : vector<20x3xf32>
    %cst_48 = arith.constant dense<0.000000e+00> : vector<20xf32>
    %135 = vector.multi_reduction <add>, %134, %cst_48 [1] : vector<20x3xf32> to vector<20xf32>
    %136 = vector.shape_cast %135 : vector<20xf32> to vector<20x1xf32>
    %137 = arith.mulf %127, %133 : vector<20x1xf32>
    %138 = arith.divf %136, %137 : vector<20x1xf32>
    %cst_49 = arith.constant -1.000000e+00 : f32
    %cst_50 = arith.constant 1.000000e+00 : f32
    %139 = vector.broadcast %cst_49 : f32 to vector<20x1xf32>
    %140 = arith.maximumf %139, %138 : vector<20x1xf32>
    %141 = vector.broadcast %cst_50 : f32 to vector<20x1xf32>
    %142 = arith.minimumf %141, %140 : vector<20x1xf32>
    %143 = arith.mulf %142, %142 : vector<20x1xf32>
    %cst_51 = arith.constant 1.000000e+00 : f32
    %144 = vector.broadcast %cst_51 : f32 to vector<20x1xf32>
    %145 = arith.subf %144, %143 : vector<20x1xf32>
    %cst_52 = arith.constant 0.000000e+00 : f32
    %146 = vector.broadcast %cst_52 : f32 to vector<20x1xf32>
    %147 = arith.maximumf %145, %146 : vector<20x1xf32>
    %148 = math.sqrt %147 : vector<20x1xf32>
    %149 = tpu.concatenate %148, %142, %111, %121 in 1 : vector<20x1xf32>, vector<20x1xf32>, vector<20x3xf32>, vector<20x3xf32> -> vector<20x8xf32>
    %c0_53 = arith.constant 0 : index
    %c0_54 = arith.constant 0 : index
    %150 = vector.load %arg10[%c0_53, %c0_54] : memref<8x16xf32, #tpu.memory_space<vmem>>, vector<8x16xf32>
    %cst_55 = arith.constant dense<0.000000e+00> : vector<20x16xf32>
    %151 = tpu.matmul %149, %150, %cst_55 {dimension_numbers = #tpu.dot_dimension_numbers<[1], [0], [0], [1], [0, 0, 1, 1], [], []>} : vector<20x8xf32>, vector<8x16xf32>, vector<20x16xf32> -> vector<20x16xf32>
    %c0_56 = arith.constant 0 : index
    %c0_57 = arith.constant 0 : index
    %152 = vector.load %arg11[%c0_56, %c0_57] : memref<1x16xf32, #tpu.memory_space<vmem>>, vector<1x16xf32>
    %153 = vector.broadcast %152 : vector<1x16xf32> to vector<20x16xf32>
    %154 = arith.addf %151, %153 : vector<20x16xf32>
    %155 = arith.negf %154 : vector<20x16xf32>
    %156 = math.exp %155 : vector<20x16xf32>
    %cst_58 = arith.constant 1.000000e+00 : f32
    %157 = vector.broadcast %cst_58 : f32 to vector<20x16xf32>
    %158 = arith.addf %157, %156 : vector<20x16xf32>
    %159 = arith.divf %157, %158 : vector<20x16xf32>
    %160 = arith.mulf %154, %159 : vector<20x16xf32>
    %c0_59 = arith.constant 0 : index
    %c0_60 = arith.constant 0 : index
    %161 = vector.load %arg12[%c0_59, %c0_60] : memref<16x16xf32, #tpu.memory_space<vmem>>, vector<16x16xf32>
    %cst_61 = arith.constant dense<0.000000e+00> : vector<20x16xf32>
    %162 = tpu.matmul %160, %161, %cst_61 {dimension_numbers = #tpu.dot_dimension_numbers<[1], [0], [0], [1], [0, 0, 1, 1], [], []>} : vector<20x16xf32>, vector<16x16xf32>, vector<20x16xf32> -> vector<20x16xf32>
    %c0_62 = arith.constant 0 : index
    %c0_63 = arith.constant 0 : index
    %163 = vector.load %arg13[%c0_62, %c0_63] : memref<1x16xf32, #tpu.memory_space<vmem>>, vector<1x16xf32>
    %164 = vector.broadcast %163 : vector<1x16xf32> to vector<20x16xf32>
    %165 = arith.addf %162, %164 : vector<20x16xf32>
    %166 = arith.negf %165 : vector<20x16xf32>
    %167 = math.exp %166 : vector<20x16xf32>
    %cst_64 = arith.constant 1.000000e+00 : f32
    %168 = vector.broadcast %cst_64 : f32 to vector<20x16xf32>
    %169 = arith.addf %168, %167 : vector<20x16xf32>
    %170 = arith.divf %168, %169 : vector<20x16xf32>
    %171 = arith.mulf %165, %170 : vector<20x16xf32>
    %c0_i32 = arith.constant 0 : i32
    %c4_i32 = arith.constant 4 : i32
    %172 = arith.addi %c0_i32, %c4_i32 : i32
    %c1_i32 = arith.constant 1 : i32
    %173:2 = scf.for %arg30 = %c0_i32 to %172 step %c1_i32 iter_args(%arg31 = %48, %arg32 = %50) -> (vector<5x128xf32>, vector<5x3xf32>)  : i32 {
      %186 = arith.truncf %arg31 : vector<5x128xf32> to vector<5x128xbf16>
      %cst_74 = arith.constant dense<0.000000e+00> : vector<20x128xf32>
      %187 = tpu.matmul %23, %186, %cst_74 {dimension_numbers = #tpu.dot_dimension_numbers<[1], [0], [0], [1], [0, 0, 1, 1], [], []>} : vector<20x5xbf16>, vector<5x128xbf16>, vector<20x128xf32> -> vector<20x128xf32>
      %188 = arith.truncf %arg31 : vector<5x128xf32> to vector<5x128xbf16>
      %cst_75 = arith.constant dense<0.000000e+00> : vector<20x128xf32>
      %189 = tpu.matmul %24, %188, %cst_75 {dimension_numbers = #tpu.dot_dimension_numbers<[1], [0], [0], [1], [0, 0, 1, 1], [], []>} : vector<20x5xbf16>, vector<5x128xbf16>, vector<20x128xf32> -> vector<20x128xf32>
      %cst_76 = arith.constant dense<0.000000e+00> : vector<20x3xf32>
      %190 = tpu.matmul %12, %arg32, %cst_76 {dimension_numbers = #tpu.dot_dimension_numbers<[1], [0], [0], [1], [0, 0, 1, 1], [], []>} : vector<20x5xf32>, vector<5x3xf32>, vector<20x3xf32> -> vector<20x3xf32>
      %cst_77 = arith.constant dense<0.000000e+00> : vector<20x3xf32>
      %191 = tpu.matmul %17, %arg32, %cst_77 {dimension_numbers = #tpu.dot_dimension_numbers<[1], [0], [0], [1], [0, 0, 1, 1], [], []>} : vector<20x5xf32>, vector<5x3xf32>, vector<20x3xf32> -> vector<20x3xf32>
      %192 = arith.subf %190, %191 : vector<20x3xf32>
      %193 = arith.mulf %192, %192 : vector<20x3xf32>
      %cst_78 = arith.constant dense<0.000000e+00> : vector<20xf32>
      %194 = vector.multi_reduction <add>, %193, %cst_78 [1] : vector<20x3xf32> to vector<20xf32>
      %195 = vector.shape_cast %194 : vector<20xf32> to vector<20x1xf32>
      %196 = vector.extract_strided_slice %190 {offsets = [0, 0], sizes = [20, 1], strides = [1, 1]} : vector<20x3xf32> to vector<20x1xf32>
      %197 = vector.extract_strided_slice %190 {offsets = [0, 1], sizes = [20, 1], strides = [1, 1]} : vector<20x3xf32> to vector<20x1xf32>
      %198 = vector.extract_strided_slice %190 {offsets = [0, 2], sizes = [20, 1], strides = [1, 1]} : vector<20x3xf32> to vector<20x1xf32>
      %199 = vector.extract_strided_slice %191 {offsets = [0, 0], sizes = [20, 1], strides = [1, 1]} : vector<20x3xf32> to vector<20x1xf32>
      %200 = vector.extract_strided_slice %191 {offsets = [0, 1], sizes = [20, 1], strides = [1, 1]} : vector<20x3xf32> to vector<20x1xf32>
      %201 = vector.extract_strided_slice %191 {offsets = [0, 2], sizes = [20, 1], strides = [1, 1]} : vector<20x3xf32> to vector<20x1xf32>
      %202 = arith.mulf %197, %201 : vector<20x1xf32>
      %203 = arith.mulf %198, %200 : vector<20x1xf32>
      %204 = arith.subf %202, %203 : vector<20x1xf32>
      %205 = arith.mulf %198, %199 : vector<20x1xf32>
      %206 = arith.mulf %196, %201 : vector<20x1xf32>
      %207 = arith.subf %205, %206 : vector<20x1xf32>
      %208 = arith.mulf %196, %200 : vector<20x1xf32>
      %209 = arith.mulf %197, %199 : vector<20x1xf32>
      %210 = arith.subf %208, %209 : vector<20x1xf32>
      %211 = tpu.concatenate %204, %207, %210 in 1 : vector<20x1xf32>, vector<20x1xf32>, vector<20x1xf32> -> vector<20x3xf32>
      %cst_79 = arith.constant 9.99999993E-9 : f32
      %212 = vector.broadcast %cst_79 : f32 to vector<20x1xf32>
      %213 = arith.addf %195, %212 : vector<20x1xf32>
      %214 = math.sqrt %213 : vector<20x1xf32>
      %cst_80 = arith.constant 1.000000e+00 : f32
      %215 = vector.broadcast %cst_80 : f32 to vector<20x1xf32>
      %216 = arith.addf %214, %215 : vector<20x1xf32>
      %217 = tpu.reciprocal %216 {approx = true} : vector<20x1xf32> -> vector<20x1xf32>
      %218 = vector.broadcast %217 : vector<20x1xf32> to vector<20x3xf32>
      %219 = arith.mulf %192, %218 : vector<20x3xf32>
      %220 = arith.mulf %211, %211 : vector<20x3xf32>
      %cst_81 = arith.constant dense<0.000000e+00> : vector<20xf32>
      %221 = vector.multi_reduction <add>, %220, %cst_81 [1] : vector<20x3xf32> to vector<20xf32>
      %222 = vector.shape_cast %221 : vector<20xf32> to vector<20x1xf32>
      %cst_82 = arith.constant 9.99999993E-9 : f32
      %223 = vector.broadcast %cst_82 : f32 to vector<20x1xf32>
      %224 = arith.addf %222, %223 : vector<20x1xf32>
      %225 = math.sqrt %224 : vector<20x1xf32>
      %cst_83 = arith.constant 1.000000e+00 : f32
      %226 = vector.broadcast %cst_83 : f32 to vector<20x1xf32>
      %227 = arith.addf %225, %226 : vector<20x1xf32>
      %228 = tpu.reciprocal %227 {approx = true} : vector<20x1xf32> -> vector<20x1xf32>
      %229 = vector.broadcast %228 : vector<20x1xf32> to vector<20x3xf32>
      %230 = arith.mulf %211, %229 : vector<20x3xf32>
      %231 = vector.extract_strided_slice %219 {offsets = [0, 0], sizes = [20, 1], strides = [1, 1]} : vector<20x3xf32> to vector<20x1xf32>
      %232 = vector.extract_strided_slice %219 {offsets = [0, 1], sizes = [20, 1], strides = [1, 1]} : vector<20x3xf32> to vector<20x1xf32>
      %233 = vector.extract_strided_slice %219 {offsets = [0, 2], sizes = [20, 1], strides = [1, 1]} : vector<20x3xf32> to vector<20x1xf32>
      %234 = vector.extract_strided_slice %230 {offsets = [0, 0], sizes = [20, 1], strides = [1, 1]} : vector<20x3xf32> to vector<20x1xf32>
      %235 = vector.extract_strided_slice %230 {offsets = [0, 1], sizes = [20, 1], strides = [1, 1]} : vector<20x3xf32> to vector<20x1xf32>
      %236 = vector.extract_strided_slice %230 {offsets = [0, 2], sizes = [20, 1], strides = [1, 1]} : vector<20x3xf32> to vector<20x1xf32>
      %237 = arith.mulf %232, %236 : vector<20x1xf32>
      %238 = arith.mulf %233, %235 : vector<20x1xf32>
      %239 = arith.subf %237, %238 : vector<20x1xf32>
      %240 = arith.mulf %233, %234 : vector<20x1xf32>
      %241 = arith.mulf %231, %236 : vector<20x1xf32>
      %242 = arith.subf %240, %241 : vector<20x1xf32>
      %243 = arith.mulf %231, %235 : vector<20x1xf32>
      %244 = arith.mulf %232, %234 : vector<20x1xf32>
      %245 = arith.subf %243, %244 : vector<20x1xf32>
      %246 = tpu.concatenate %239, %242, %245 in 1 : vector<20x1xf32>, vector<20x1xf32>, vector<20x1xf32> -> vector<20x3xf32>
      %247 = tpu.concatenate %187, %189, %195, %171 in 1 : vector<20x128xf32>, vector<20x128xf32>, vector<20x1xf32>, vector<20x16xf32> -> vector<20x273xf32>
      %248 = arith.index_cast %arg30 : i32 to index
      %c0_84 = arith.constant 0 : index
      %c0_85 = arith.constant 0 : index
      %249 = vector.load %arg14[%248, %c0_84, %c0_85] : memref<4x273x128xbf16, #tpu.memory_space<vmem>>, vector<1x273x128xbf16>
      %250 = vector.shape_cast %249 : vector<1x273x128xbf16> to vector<273x128xbf16>
      %251 = arith.truncf %247 : vector<20x273xf32> to vector<20x273xbf16>
      %cst_86 = arith.constant dense<0.000000e+00> : vector<20x128xf32>
      %252 = tpu.matmul %251, %250, %cst_86 {dimension_numbers = #tpu.dot_dimension_numbers<[1], [0], [0], [1], [0, 0, 1, 1], [], []>} : vector<20x273xbf16>, vector<273x128xbf16>, vector<20x128xf32> -> vector<20x128xf32>
      %253 = arith.index_cast %arg30 : i32 to index
      %c0_87 = arith.constant 0 : index
      %c0_88 = arith.constant 0 : index
      %254 = vector.load %arg15[%253, %c0_87, %c0_88] : memref<4x1x128xf32, #tpu.memory_space<vmem>>, vector<1x1x128xf32>
      %255 = vector.shape_cast %254 : vector<1x1x128xf32> to vector<1x128xf32>
      %256 = vector.broadcast %255 : vector<1x128xf32> to vector<20x128xf32>
      %257 = arith.addf %252, %256 : vector<20x128xf32>
      %258 = arith.negf %257 : vector<20x128xf32>
      %259 = math.exp %258 : vector<20x128xf32>
      %cst_89 = arith.constant 1.000000e+00 : f32
      %260 = vector.broadcast %cst_89 : f32 to vector<20x128xf32>
      %261 = arith.addf %260, %259 : vector<20x128xf32>
      %262 = arith.divf %260, %261 : vector<20x128xf32>
      %263 = arith.mulf %257, %262 : vector<20x128xf32>
      %264 = arith.index_cast %arg30 : i32 to index
      %c0_90 = arith.constant 0 : index
      %c0_91 = arith.constant 0 : index
      %265 = vector.load %arg16[%264, %c0_90, %c0_91] : memref<4x128x128xbf16, #tpu.memory_space<vmem>>, vector<1x128x128xbf16>
      %266 = vector.shape_cast %265 : vector<1x128x128xbf16> to vector<128x128xbf16>
      %267 = arith.truncf %263 : vector<20x128xf32> to vector<20x128xbf16>
      %cst_92 = arith.constant dense<0.000000e+00> : vector<20x128xf32>
      %268 = tpu.matmul %267, %266, %cst_92 {dimension_numbers = #tpu.dot_dimension_numbers<[1], [0], [0], [1], [0, 0, 1, 1], [], []>} : vector<20x128xbf16>, vector<128x128xbf16>, vector<20x128xf32> -> vector<20x128xf32>
      %269 = arith.index_cast %arg30 : i32 to index
      %c0_93 = arith.constant 0 : index
      %c0_94 = arith.constant 0 : index
      %270 = vector.load %arg17[%269, %c0_93, %c0_94] : memref<4x1x128xf32, #tpu.memory_space<vmem>>, vector<1x1x128xf32>
      %271 = vector.shape_cast %270 : vector<1x1x128xf32> to vector<1x128xf32>
      %272 = vector.broadcast %271 : vector<1x128xf32> to vector<20x128xf32>
      %273 = arith.addf %268, %272 : vector<20x128xf32>
      %274 = arith.negf %273 : vector<20x128xf32>
      %275 = math.exp %274 : vector<20x128xf32>
      %cst_95 = arith.constant 1.000000e+00 : f32
      %276 = vector.broadcast %cst_95 : f32 to vector<20x128xf32>
      %277 = arith.addf %276, %275 : vector<20x128xf32>
      %278 = arith.divf %276, %277 : vector<20x128xf32>
      %279 = arith.mulf %273, %278 : vector<20x128xf32>
      %280 = arith.mulf %279, %40 : vector<20x128xf32>
      %281 = arith.index_cast %arg30 : i32 to index
      %c0_96 = arith.constant 0 : index
      %c0_97 = arith.constant 0 : index
      %282 = vector.load %arg18[%281, %c0_96, %c0_97] : memref<4x128x128xbf16, #tpu.memory_space<vmem>>, vector<1x128x128xbf16>
      %283 = vector.shape_cast %282 : vector<1x128x128xbf16> to vector<128x128xbf16>
      %284 = arith.truncf %280 : vector<20x128xf32> to vector<20x128xbf16>
      %cst_98 = arith.constant dense<0.000000e+00> : vector<20x128xf32>
      %285 = tpu.matmul %284, %283, %cst_98 {dimension_numbers = #tpu.dot_dimension_numbers<[1], [0], [0], [1], [0, 0, 1, 1], [], []>} : vector<20x128xbf16>, vector<128x128xbf16>, vector<20x128xf32> -> vector<20x128xf32>
      %286 = arith.index_cast %arg30 : i32 to index
      %c0_99 = arith.constant 0 : index
      %c0_100 = arith.constant 0 : index
      %287 = vector.load %arg19[%286, %c0_99, %c0_100] : memref<4x1x128xf32, #tpu.memory_space<vmem>>, vector<1x1x128xf32>
      %288 = vector.shape_cast %287 : vector<1x1x128xf32> to vector<1x128xf32>
      %289 = vector.broadcast %288 : vector<1x128xf32> to vector<20x128xf32>
      %290 = arith.addf %285, %289 : vector<20x128xf32>
      %291 = arith.negf %290 : vector<20x128xf32>
      %292 = math.exp %291 : vector<20x128xf32>
      %cst_101 = arith.constant 1.000000e+00 : f32
      %293 = vector.broadcast %cst_101 : f32 to vector<20x128xf32>
      %294 = arith.addf %293, %292 : vector<20x128xf32>
      %295 = arith.divf %293, %294 : vector<20x128xf32>
      %296 = arith.mulf %290, %295 : vector<20x128xf32>
      %297 = arith.index_cast %arg30 : i32 to index
      %c0_102 = arith.constant 0 : index
      %c0_103 = arith.constant 0 : index
      %298 = vector.load %arg20[%297, %c0_102, %c0_103] : memref<4x128x3xbf16, #tpu.memory_space<vmem>>, vector<1x128x3xbf16>
      %299 = vector.shape_cast %298 : vector<1x128x3xbf16> to vector<128x3xbf16>
      %300 = arith.truncf %296 : vector<20x128xf32> to vector<20x128xbf16>
      %cst_104 = arith.constant dense<0.000000e+00> : vector<20x3xf32>
      %301 = tpu.matmul %300, %299, %cst_104 {dimension_numbers = #tpu.dot_dimension_numbers<[1], [0], [0], [1], [0, 0, 1, 1], [], []>} : vector<20x128xbf16>, vector<128x3xbf16>, vector<20x3xf32> -> vector<20x3xf32>
      %302 = vector.extract_strided_slice %301 {offsets = [0, 0], sizes = [20, 1], strides = [1, 1]} : vector<20x3xf32> to vector<20x1xf32>
      %303 = vector.broadcast %302 : vector<20x1xf32> to vector<20x3xf32>
      %304 = arith.mulf %219, %303 : vector<20x3xf32>
      %305 = vector.extract_strided_slice %301 {offsets = [0, 1], sizes = [20, 1], strides = [1, 1]} : vector<20x3xf32> to vector<20x1xf32>
      %306 = vector.broadcast %305 : vector<20x1xf32> to vector<20x3xf32>
      %307 = arith.mulf %230, %306 : vector<20x3xf32>
      %308 = arith.addf %304, %307 : vector<20x3xf32>
      %309 = vector.extract_strided_slice %301 {offsets = [0, 2], sizes = [20, 1], strides = [1, 1]} : vector<20x3xf32> to vector<20x1xf32>
      %310 = vector.broadcast %309 : vector<20x1xf32> to vector<20x3xf32>
      %311 = arith.mulf %246, %310 : vector<20x3xf32>
      %312 = arith.addf %308, %311 : vector<20x3xf32>
      %cst_105 = arith.constant -1.000000e+02 : f32
      %cst_106 = arith.constant 1.000000e+02 : f32
      %313 = vector.broadcast %cst_105 : f32 to vector<20x3xf32>
      %314 = arith.maximumf %313, %312 : vector<20x3xf32>
      %315 = vector.broadcast %cst_106 : f32 to vector<20x3xf32>
      %316 = arith.minimumf %315, %314 : vector<20x3xf32>
      %317 = tpu.concatenate %280, %316 in 1 : vector<20x128xf32>, vector<20x3xf32> -> vector<20x131xf32>
      %318 = arith.truncf %317 : vector<20x131xf32> to vector<20x131xbf16>
      %cst_107 = arith.constant dense<0.000000e+00> : vector<5x131xf32>
      %319 = tpu.matmul %25, %318, %cst_107 {dimension_numbers = #tpu.dot_dimension_numbers<[1], [0], [0], [1], [0, 0, 1, 1], [], []>} : vector<5x20xbf16>, vector<20x131xbf16>, vector<5x131xf32> -> vector<5x131xf32>
      %320 = vector.extract_strided_slice %319 {offsets = [0, 128], sizes = [5, 3], strides = [1, 1]} : vector<5x131xf32> to vector<5x3xf32>
      %321 = arith.mulf %320, %32 : vector<5x3xf32>
      %322 = arith.addf %arg32, %321 : vector<5x3xf32>
      %323 = vector.extract_strided_slice %319 {offsets = [0, 0], sizes = [5, 128], strides = [1, 1]} : vector<5x131xf32> to vector<5x128xf32>
      %324 = tpu.concatenate %arg31, %323 in 1 : vector<5x128xf32>, vector<5x128xf32> -> vector<5x256xf32>
      %325 = arith.index_cast %arg30 : i32 to index
      %c0_108 = arith.constant 0 : index
      %c0_109 = arith.constant 0 : index
      %326 = vector.load %arg21[%325, %c0_108, %c0_109] : memref<4x256x128xbf16, #tpu.memory_space<vmem>>, vector<1x256x128xbf16>
      %327 = vector.shape_cast %326 : vector<1x256x128xbf16> to vector<256x128xbf16>
      %328 = arith.truncf %324 : vector<5x256xf32> to vector<5x256xbf16>
      %cst_110 = arith.constant dense<0.000000e+00> : vector<5x128xf32>
      %329 = tpu.matmul %328, %327, %cst_110 {dimension_numbers = #tpu.dot_dimension_numbers<[1], [0], [0], [1], [0, 0, 1, 1], [], []>} : vector<5x256xbf16>, vector<256x128xbf16>, vector<5x128xf32> -> vector<5x128xf32>
      %330 = arith.index_cast %arg30 : i32 to index
      %c0_111 = arith.constant 0 : index
      %c0_112 = arith.constant 0 : index
      %331 = vector.load %arg22[%330, %c0_111, %c0_112] : memref<4x1x128xf32, #tpu.memory_space<vmem>>, vector<1x1x128xf32>
      %332 = vector.shape_cast %331 : vector<1x1x128xf32> to vector<1x128xf32>
      %333 = vector.broadcast %332 : vector<1x128xf32> to vector<5x128xf32>
      %334 = arith.addf %329, %333 : vector<5x128xf32>
      %335 = arith.negf %334 : vector<5x128xf32>
      %336 = math.exp %335 : vector<5x128xf32>
      %cst_113 = arith.constant 1.000000e+00 : f32
      %337 = vector.broadcast %cst_113 : f32 to vector<5x128xf32>
      %338 = arith.addf %337, %336 : vector<5x128xf32>
      %339 = arith.divf %337, %338 : vector<5x128xf32>
      %340 = arith.mulf %334, %339 : vector<5x128xf32>
      %341 = arith.index_cast %arg30 : i32 to index
      %c0_114 = arith.constant 0 : index
      %c0_115 = arith.constant 0 : index
      %342 = vector.load %arg23[%341, %c0_114, %c0_115] : memref<4x128x128xbf16, #tpu.memory_space<vmem>>, vector<1x128x128xbf16>
      %343 = vector.shape_cast %342 : vector<1x128x128xbf16> to vector<128x128xbf16>
      %344 = arith.truncf %340 : vector<5x128xf32> to vector<5x128xbf16>
      %cst_116 = arith.constant dense<0.000000e+00> : vector<5x128xf32>
      %345 = tpu.matmul %344, %343, %cst_116 {dimension_numbers = #tpu.dot_dimension_numbers<[1], [0], [0], [1], [0, 0, 1, 1], [], []>} : vector<5x128xbf16>, vector<128x128xbf16>, vector<5x128xf32> -> vector<5x128xf32>
      %346 = arith.addf %arg31, %345 : vector<5x128xf32>
      %347 = arith.index_cast %arg30 : i32 to index
      %c0_117 = arith.constant 0 : index
      %c0_118 = arith.constant 0 : index
      %348 = vector.load %arg24[%347, %c0_117, %c0_118] : memref<4x1x128xf32, #tpu.memory_space<vmem>>, vector<1x1x128xf32>
      %349 = vector.shape_cast %348 : vector<1x1x128xf32> to vector<1x128xf32>
      %350 = vector.broadcast %349 : vector<1x128xf32> to vector<5x128xf32>
      %351 = arith.addf %346, %350 : vector<5x128xf32>
      %cst_119 = arith.constant dense<0.000000e+00> : vector<5xf32>
      %352 = vector.multi_reduction <add>, %351, %cst_119 [1] : vector<5x128xf32> to vector<5xf32>
      %353 = vector.shape_cast %352 : vector<5xf32> to vector<5x1xf32>
      %cst_120 = arith.constant 3.125000e-02 : f32
      %354 = vector.broadcast %cst_120 : f32 to vector<5x1xf32>
      %355 = arith.mulf %353, %354 : vector<5x1xf32>
      %356 = arith.mulf %351, %351 : vector<5x128xf32>
      %cst_121 = arith.constant dense<0.000000e+00> : vector<5xf32>
      %357 = vector.multi_reduction <add>, %356, %cst_121 [1] : vector<5x128xf32> to vector<5xf32>
      %358 = vector.shape_cast %357 : vector<5xf32> to vector<5x1xf32>
      %cst_122 = arith.constant 3.125000e-02 : f32
      %359 = vector.broadcast %cst_122 : f32 to vector<5x1xf32>
      %360 = arith.mulf %358, %359 : vector<5x1xf32>
      %361 = arith.mulf %355, %355 : vector<5x1xf32>
      %362 = arith.subf %360, %361 : vector<5x1xf32>
      %363 = vector.broadcast %355 : vector<5x1xf32> to vector<5x128xf32>
      %364 = arith.subf %351, %363 : vector<5x128xf32>
      %cst_123 = arith.constant 9.99999974E-6 : f32
      %365 = vector.broadcast %cst_123 : f32 to vector<5x1xf32>
      %366 = arith.addf %362, %365 : vector<5x1xf32>
      %367 = math.rsqrt %366 : vector<5x1xf32>
      %368 = vector.broadcast %367 : vector<5x1xf32> to vector<5x128xf32>
      %369 = arith.mulf %364, %368 : vector<5x128xf32>
      %370 = arith.index_cast %arg30 : i32 to index
      %c0_124 = arith.constant 0 : index
      %c0_125 = arith.constant 0 : index
      %371 = vector.load %arg25[%370, %c0_124, %c0_125] : memref<4x1x128xf32, #tpu.memory_space<vmem>>, vector<1x1x128xf32>
      %372 = vector.shape_cast %371 : vector<1x1x128xf32> to vector<1x128xf32>
      %373 = vector.broadcast %372 : vector<1x128xf32> to vector<5x128xf32>
      %374 = arith.mulf %369, %373 : vector<5x128xf32>
      %375 = arith.index_cast %arg30 : i32 to index
      %c0_126 = arith.constant 0 : index
      %c0_127 = arith.constant 0 : index
      %376 = vector.load %arg26[%375, %c0_126, %c0_127] : memref<4x1x128xf32, #tpu.memory_space<vmem>>, vector<1x1x128xf32>
      %377 = vector.shape_cast %376 : vector<1x1x128xf32> to vector<1x128xf32>
      %378 = vector.broadcast %377 : vector<1x128xf32> to vector<5x128xf32>
      %379 = arith.addf %374, %378 : vector<5x128xf32>
      %380 = arith.mulf %379, %36 : vector<5x128xf32>
      scf.yield %380, %322 : vector<5x128xf32>, vector<5x3xf32>
    }
    %c4_i32_65 = arith.constant 4 : i32
    %c0_66 = arith.constant 0 : index
    %c0_67 = arith.constant 0 : index
    %174 = vector.load %arg27[%c0_66, %c0_67] : memref<128x4xbf16, #tpu.memory_space<vmem>>, vector<128x4xbf16>
    %175 = arith.truncf %173#0 : vector<5x128xf32> to vector<5x128xbf16>
    %cst_68 = arith.constant dense<0.000000e+00> : vector<5x4xf32>
    %176 = tpu.matmul %175, %174, %cst_68 {dimension_numbers = #tpu.dot_dimension_numbers<[1], [0], [0], [1], [0, 0, 1, 1], [], []>} : vector<5x128xbf16>, vector<128x4xbf16>, vector<5x4xf32> -> vector<5x4xf32>
    %c0_69 = arith.constant 0 : index
    %c0_70 = arith.constant 0 : index
    %177 = vector.load %arg28[%c0_69, %c0_70] : memref<1x4xf32, #tpu.memory_space<vmem>>, vector<1x4xf32>
    %178 = vector.broadcast %177 : vector<1x4xf32> to vector<5x4xf32>
    %179 = arith.addf %176, %178 : vector<5x4xf32>
    %180 = vector.broadcast %34 : vector<5x1xf32> to vector<5x4xf32>
    %181 = arith.mulf %179, %180 : vector<5x4xf32>
    %182 = tpu.concatenate %181, %173#1 in 1 : vector<5x4xf32>, vector<5x3xf32> -> vector<5x7xf32>
    %c0_71 = arith.constant 0 : index
    %c0_72 = arith.constant 0 : index
    %c0_73 = arith.constant 0 : index
    %183 = vector.load %arg29[%c0_71, %c0_72, %c0_73] : memref<1x5x7xf32, #tpu.memory_space<vmem>>, vector<1x5x7xf32>
    %184 = vector.shape_cast %183 : vector<1x5x7xf32> to vector<5x7xf32>
    %185 = vector.shape_cast %182 : vector<5x7xf32> to vector<1x5x7xf32>
    tpu.vector_store %arg29[%c0_71, %c0_72, %c0_73], %185 {strides = array<i32>} : memref<1x5x7xf32, #tpu.memory_space<vmem>>, vector<1x5x7xf32>,
    return
  }
  func.func @transform_0(%arg0: i32) -> (i32, i32, i32) {
    %c0_i32 = arith.constant 0 : i32
    %c0_i32_0 = arith.constant 0 : i32
    %c0_i32_1 = arith.constant 0 : i32
    return %arg0, %c0_i32, %c0_i32_0 : i32, i32, i32
  }
  func.func @transform_1(%arg0: i32) -> (i32, i32, i32) {
    %c0_i32 = arith.constant 0 : i32
    %c0_i32_0 = arith.constant 0 : i32
    %c0_i32_1 = arith.constant 0 : i32
    return %arg0, %c0_i32, %c0_i32_0 : i32, i32, i32
  }
  func.func @transform_2(%arg0: i32) -> (i32, i32, i32) {
    %c0_i32 = arith.constant 0 : i32
    %c0_i32_0 = arith.constant 0 : i32
    %c0_i32_1 = arith.constant 0 : i32
    return %arg0, %c0_i32, %c0_i32_0 : i32, i32, i32
  }
  func.func @transform_3(%arg0: i32) -> (i32, i32, i32) {
    %c0_i32 = arith.constant 0 : i32
    %c0_i32_0 = arith.constant 0 : i32
    %c0_i32_1 = arith.constant 0 : i32
    return %arg0, %c0_i32, %c0_i32_0 : i32, i32, i32
  }
  func.func @transform_4(%arg0: i32) -> (i32, i32, i32) {
    %c0_i32 = arith.constant 0 : i32
    %c0_i32_0 = arith.constant 0 : i32
    %c0_i32_1 = arith.constant 0 : i32
    return %arg0, %c0_i32, %c0_i32_0 : i32, i32, i32
  }
  func.func @transform_5(%arg0: i32) -> (i32, i32, i32) {
    %c0_i32 = arith.constant 0 : i32
    %c0_i32_0 = arith.constant 0 : i32
    %c0_i32_1 = arith.constant 0 : i32
    return %arg0, %c0_i32, %c0_i32_0 : i32, i32, i32
  }
  func.func @transform_6(%arg0: i32) -> (i32, i32, i32) {
    %c0_i32 = arith.constant 0 : i32
    %c0_i32_0 = arith.constant 0 : i32
    %c0_i32_1 = arith.constant 0 : i32
    return %arg0, %c0_i32, %c0_i32_0 : i32, i32, i32
  }
  func.func @transform_7(%arg0: i32) -> (i32, i32) {
    %c0_i32 = arith.constant 0 : i32
    %c0_i32_0 = arith.constant 0 : i32
    %c0_i32_1 = arith.constant 0 : i32
    return %c0_i32, %c0_i32_0 : i32, i32
  }
  func.func @transform_8(%arg0: i32) -> (i32, i32) {
    %c0_i32 = arith.constant 0 : i32
    %c0_i32_0 = arith.constant 0 : i32
    %c0_i32_1 = arith.constant 0 : i32
    return %c0_i32, %c0_i32_0 : i32, i32
  }
  func.func @transform_9(%arg0: i32) -> (i32, i32) {
    %c0_i32 = arith.constant 0 : i32
    %c0_i32_0 = arith.constant 0 : i32
    %c0_i32_1 = arith.constant 0 : i32
    return %c0_i32, %c0_i32_0 : i32, i32
  }
  func.func @transform_10(%arg0: i32) -> (i32, i32) {
    %c0_i32 = arith.constant 0 : i32
    %c0_i32_0 = arith.constant 0 : i32
    %c0_i32_1 = arith.constant 0 : i32
    return %c0_i32, %c0_i32_0 : i32, i32
  }
  func.func @transform_11(%arg0: i32) -> (i32, i32) {
    %c0_i32 = arith.constant 0 : i32
    %c0_i32_0 = arith.constant 0 : i32
    %c0_i32_1 = arith.constant 0 : i32
    return %c0_i32, %c0_i32_0 : i32, i32
  }
  func.func @transform_12(%arg0: i32) -> (i32, i32) {
    %c0_i32 = arith.constant 0 : i32
    %c0_i32_0 = arith.constant 0 : i32
    %c0_i32_1 = arith.constant 0 : i32
    return %c0_i32, %c0_i32_0 : i32, i32
  }
  func.func @transform_13(%arg0: i32) -> (i32, i32, i32) {
    %c0_i32 = arith.constant 0 : i32
    %c0_i32_0 = arith.constant 0 : i32
    %c0_i32_1 = arith.constant 0 : i32
    %c0_i32_2 = arith.constant 0 : i32
    return %c0_i32, %c0_i32_0, %c0_i32_1 : i32, i32, i32
  }
  func.func @transform_14(%arg0: i32) -> (i32, i32, i32) {
    %c0_i32 = arith.constant 0 : i32
    %c0_i32_0 = arith.constant 0 : i32
    %c0_i32_1 = arith.constant 0 : i32
    %c0_i32_2 = arith.constant 0 : i32
    return %c0_i32, %c0_i32_0, %c0_i32_1 : i32, i32, i32
  }
  func.func @transform_15(%arg0: i32) -> (i32, i32, i32) {
    %c0_i32 = arith.constant 0 : i32
    %c0_i32_0 = arith.constant 0 : i32
    %c0_i32_1 = arith.constant 0 : i32
    %c0_i32_2 = arith.constant 0 : i32
    return %c0_i32, %c0_i32_0, %c0_i32_1 : i32, i32, i32
  }
  func.func @transform_16(%arg0: i32) -> (i32, i32, i32) {
    %c0_i32 = arith.constant 0 : i32
    %c0_i32_0 = arith.constant 0 : i32
    %c0_i32_1 = arith.constant 0 : i32
    %c0_i32_2 = arith.constant 0 : i32
    return %c0_i32, %c0_i32_0, %c0_i32_1 : i32, i32, i32
  }
  func.func @transform_17(%arg0: i32) -> (i32, i32, i32) {
    %c0_i32 = arith.constant 0 : i32
    %c0_i32_0 = arith.constant 0 : i32
    %c0_i32_1 = arith.constant 0 : i32
    %c0_i32_2 = arith.constant 0 : i32
    return %c0_i32, %c0_i32_0, %c0_i32_1 : i32, i32, i32
  }
  func.func @transform_18(%arg0: i32) -> (i32, i32, i32) {
    %c0_i32 = arith.constant 0 : i32
    %c0_i32_0 = arith.constant 0 : i32
    %c0_i32_1 = arith.constant 0 : i32
    %c0_i32_2 = arith.constant 0 : i32
    return %c0_i32, %c0_i32_0, %c0_i32_1 : i32, i32, i32
  }
  func.func @transform_19(%arg0: i32) -> (i32, i32, i32) {
    %c0_i32 = arith.constant 0 : i32
    %c0_i32_0 = arith.constant 0 : i32
    %c0_i32_1 = arith.constant 0 : i32
    %c0_i32_2 = arith.constant 0 : i32
    return %c0_i32, %c0_i32_0, %c0_i32_1 : i32, i32, i32
  }
  func.func @transform_20(%arg0: i32) -> (i32, i32, i32) {
    %c0_i32 = arith.constant 0 : i32
    %c0_i32_0 = arith.constant 0 : i32
    %c0_i32_1 = arith.constant 0 : i32
    %c0_i32_2 = arith.constant 0 : i32
    return %c0_i32, %c0_i32_0, %c0_i32_1 : i32, i32, i32
  }
  func.func @transform_21(%arg0: i32) -> (i32, i32, i32) {
    %c0_i32 = arith.constant 0 : i32
    %c0_i32_0 = arith.constant 0 : i32
    %c0_i32_1 = arith.constant 0 : i32
    %c0_i32_2 = arith.constant 0 : i32
    return %c0_i32, %c0_i32_0, %c0_i32_1 : i32, i32, i32
  }
  func.func @transform_22(%arg0: i32) -> (i32, i32, i32) {
    %c0_i32 = arith.constant 0 : i32
    %c0_i32_0 = arith.constant 0 : i32
    %c0_i32_1 = arith.constant 0 : i32
    %c0_i32_2 = arith.constant 0 : i32
    return %c0_i32, %c0_i32_0, %c0_i32_1 : i32, i32, i32
  }
  func.func @transform_23(%arg0: i32) -> (i32, i32, i32) {
    %c0_i32 = arith.constant 0 : i32
    %c0_i32_0 = arith.constant 0 : i32
    %c0_i32_1 = arith.constant 0 : i32
    %c0_i32_2 = arith.constant 0 : i32
    return %c0_i32, %c0_i32_0, %c0_i32_1 : i32, i32, i32
  }
  func.func @transform_24(%arg0: i32) -> (i32, i32, i32) {
    %c0_i32 = arith.constant 0 : i32
    %c0_i32_0 = arith.constant 0 : i32
    %c0_i32_1 = arith.constant 0 : i32
    %c0_i32_2 = arith.constant 0 : i32
    return %c0_i32, %c0_i32_0, %c0_i32_1 : i32, i32, i32
  }
  func.func @transform_25(%arg0: i32) -> (i32, i32, i32) {
    %c0_i32 = arith.constant 0 : i32
    %c0_i32_0 = arith.constant 0 : i32
    %c0_i32_1 = arith.constant 0 : i32
    %c0_i32_2 = arith.constant 0 : i32
    return %c0_i32, %c0_i32_0, %c0_i32_1 : i32, i32, i32
  }
  func.func @transform_26(%arg0: i32) -> (i32, i32) {
    %c0_i32 = arith.constant 0 : i32
    %c0_i32_0 = arith.constant 0 : i32
    %c0_i32_1 = arith.constant 0 : i32
    return %c0_i32, %c0_i32_0 : i32, i32
  }
  func.func @transform_27(%arg0: i32) -> (i32, i32) {
    %c0_i32 = arith.constant 0 : i32
    %c0_i32_0 = arith.constant 0 : i32
    %c0_i32_1 = arith.constant 0 : i32
    return %c0_i32, %c0_i32_0 : i32, i32
  }
  func.func @transform_28(%arg0: i32) -> (i32, i32, i32) {
    %c0_i32 = arith.constant 0 : i32
    %c0_i32_0 = arith.constant 0 : i32
    %c0_i32_1 = arith.constant 0 : i32
    return %arg0, %c0_i32, %c0_i32_0 : i32, i32, i32
  }
}

</mosaic_0001>

<llo_original>
// kernel: tpu_custom_call.1
$region0: #{tpu_custom_call.1}
  #allocation0 [shape = 'u32[]', space=smem, size = 0x4, offset = 0x4, fixed_abs, tag = 'smem constant byte address 0x4 - core index']
  #allocation1 [shape = 'u32[72,128]{1,0:T(1,128)}', space=vmem, size = 0x9000, scoped, tag = 'internal scratch']
  %s0 = inlined_call_operand.vmem [shape: f32[2,5,4], index: 0, kind: input, shape index: {}]
  %s1 = inlined_call_operand.vmem [shape: f32[2,5,3], index: 1, kind: input, shape index: {}]
  %s2 = inlined_call_operand.vmem [shape: s32[2,20,1], index: 2, kind: input, shape index: {}]
  %s3 = inlined_call_operand.vmem [shape: s32[2,20,1], index: 3, kind: input, shape index: {}]
  %s4 = inlined_call_operand.vmem [shape: s32[2,1,20], index: 4, kind: input, shape index: {}]
  %s5 = inlined_call_operand.vmem [shape: f32[2,5,1], index: 5, kind: input, shape index: {}]
  %s6 = inlined_call_operand.vmem [shape: f32[2,20,1], index: 6, kind: input, shape index: {}]
  %s7 = inlined_call_operand.vmem [shape: bf16[4,128], index: 7, kind: input, shape index: {}]
  %s8 = inlined_call_operand.vmem [shape: f32[1,128], index: 8, kind: input, shape index: {}]
  %s9 = inlined_call_operand.vmem [shape: f32[8,16], index: 9, kind: input, shape index: {}]
  %s10 = inlined_call_operand.vmem [shape: f32[1,16], index: 10, kind: input, shape index: {}]
  %s11 = inlined_call_operand.vmem [shape: f32[16,16], index: 11, kind: input, shape index: {}]
  %s12 = inlined_call_operand.vmem [shape: f32[1,16], index: 12, kind: input, shape index: {}]
  %s13 = inlined_call_operand.vmem [shape: bf16[4,273,128], index: 13, kind: input, shape index: {}]
  %s14 = inlined_call_operand.vmem [shape: f32[4,1,128], index: 14, kind: input, shape index: {}]
  %s15 = inlined_call_operand.vmem [shape: bf16[4,128,128], index: 15, kind: input, shape index: {}]
  %s16 = inlined_call_operand.vmem [shape: f32[4,1,128], index: 16, kind: input, shape index: {}]
  %s17 = inlined_call_operand.vmem [shape: bf16[4,128,128], index: 17, kind: input, shape index: {}]
  %s18 = inlined_call_operand.vmem [shape: f32[4,1,128], index: 18, kind: input, shape index: {}]
  %s19 = inlined_call_operand.vmem [shape: bf16[4,128,3], index: 19, kind: input, shape index: {}]
  %s20 = inlined_call_operand.vmem [shape: bf16[4,256,128], index: 20, kind: input, shape index: {}]
  %s21 = inlined_call_operand.vmem [shape: f32[4,1,128], index: 21, kind: input, shape index: {}]
  %s22 = inlined_call_operand.hbm [shape: bf16[4,128,128], index: 22, kind: input, shape index: {}]
  %s23 = inlined_call_operand.vmem [shape: f32[4,1,128], index: 23, kind: input, shape index: {}]
  %s24 = inlined_call_operand.vmem [shape: f32[4,1,128], index: 24, kind: input, shape index: {}]
  %s25 = inlined_call_operand.vmem [shape: f32[4,1,128], index: 25, kind: input, shape index: {}]
  %s26 = inlined_call_operand.vmem [shape: bf16[128,4], index: 26, kind: input, shape index: {}]
  %s27 = inlined_call_operand.vmem [shape: f32[1,4], index: 27, kind: input, shape index: {}]
  %s28 = inlined_call_operand.vmem [shape: f32[2,5,7], index: 28, kind: output, shape index: {}]
  %s29 = sld [smem:[#allocation0]]
  $region156: #{tpu_custom_call.1} parent=0
    _
  %s31 = ssub.s32 1, %s29
  %s32 = scalar_select 0, %s31, %s29
  $region1: #{tpu_custom_call.1} parent=0
    #allocation2 [shape = 'u8[131072]{0}', space=vmem, size = 0x20000, scoped, tag = 'input window, operand 22, single buffered']
    #allocation3 [shape = 's32[2]{0}', space=sflag, size = 0x8, scoped, tag = 'scoped memory for tpu_custom_call.1']
    %33 = vsyncpa [#allocation3], 0
    loop: start=0, step=1, limit=4
    $region2: #{tpu_custom_call.1} parent=1 // loop_pre_header
      _
    $region3: #{tpu_custom_call.1} parent=1 // loop_header
      %s35 = sphi 0, %s39
      %p36 = scmp.ge.s32.totalorder %s35, 4
      %s45 = sphi 0, %s47
      %s48 = sphi 0, %s45
      %s49 = sphi 0, %s48
      %s65 = sphi 0, %s49
      %s71 = sphi 0, %s73
      %s74 = sphi 0, %s71
      %s75 = sphi 0, %s74
      %s91 = sphi 0, %s75
      %s97 = sphi 0, %s99
      %s100 = sphi 0, %s97
      %s101 = sphi 0, %s100
      %s117 = sphi 0, %s101
      %s123 = sphi 0, %s125
      %s126 = sphi 0, %s123
      %s127 = sphi 0, %s126
      %s143 = sphi 0, %s127
      %s149 = sphi 0, %s151
      %s152 = sphi 0, %s149
      %s153 = sphi 0, %s152
      %s169 = sphi 0, %s153
      %s175 = sphi 0, %s177
      %s178 = sphi 0, %s175
      %s179 = sphi 0, %s178
      %s195 = sphi 0, %s179
      %s201 = sphi 0, %s203
      %s204 = sphi 0, %s201
      %s205 = sphi 0, %s204
      %s221 = sphi 0, %s205
      %s225 = sphi 0, %s225
      %s227 = sphi 0, %s225
      %s228 = sphi 0, %s227
      %s242 = sphi 0, %s228
      %s246 = sphi 0, %s246
      %s248 = sphi 0, %s246
      %s249 = sphi 0, %s248
      %s263 = sphi 0, %s249
      %s267 = sphi 0, %s267
      %s269 = sphi 0, %s267
      %s270 = sphi 0, %s269
      %s284 = sphi 0, %s270
      %s288 = sphi 0, %s288
      %s290 = sphi 0, %s288
      %s291 = sphi 0, %s290
      %s305 = sphi 0, %s291
      %s309 = sphi 0, %s309
      %s311 = sphi 0, %s309
      %s312 = sphi 0, %s311
      %s326 = sphi 0, %s312
      %s330 = sphi 0, %s330
      %s332 = sphi 0, %s330
      %s333 = sphi 0, %s332
      %s347 = sphi 0, %s333
      %s351 = sphi 0, %s351
      %s353 = sphi 0, %s351
      %s354 = sphi 0, %s353
      %s368 = sphi 0, %s354
      %s372 = sphi 0, %s372
      %s374 = sphi 0, %s372
      %s375 = sphi 0, %s374
      %s389 = sphi 0, %s375
      %s393 = sphi 0, %s393
      %s395 = sphi 0, %s393
      %s396 = sphi 0, %s395
      %s410 = sphi 0, %s396
      %s414 = sphi 0, %s414
      %s416 = sphi 0, %s414
      %s417 = sphi 0, %s416
      %s431 = sphi 0, %s417
      %s435 = sphi 0, %s435
      %s437 = sphi 0, %s435
      %s438 = sphi 0, %s437
      %s452 = sphi 0, %s438
      %s456 = sphi 0, %s456
      %s458 = sphi 0, %s456
      %s459 = sphi 0, %s458
      %s473 = sphi 0, %s459
      %s477 = sphi 0, %s477
      %s479 = sphi 0, %s477
      %s480 = sphi 0, %s479
      %s494 = sphi 0, %s480
      %s498 = sphi 0, %s498
      %s500 = sphi 0, %s498
      %s501 = sphi 0, %s500
      %s515 = sphi 0, %s501
      %s519 = sphi 0, %s519
      %s521 = sphi 0, %s519
      %s522 = sphi 0, %s521
      %s536 = sphi 0, %s522
      %s540 = sphi 0, %s540
      %s542 = sphi 0, %s540
      %s543 = sphi 0, %s542
      %s557 = sphi 0, %s543
      %s561 = sphi 0, %s561
      %s563 = sphi 0, %s561
      %s564 = sphi 0, %s563
      %s578 = sphi 0, %s564
      %s582 = sphi 0, %s582
      %s584 = sphi 0, %s582
      %s585 = sphi 0, %s584
      %s599 = sphi 0, %s585
      %s603 = sphi 0, %s603
      %s605 = sphi 0, %s603
      %s606 = sphi 0, %s605
      %s620 = sphi 0, %s606
      %s624 = sphi 0, %s624
      %s626 = sphi 0, %s624
      %s627 = sphi 0, %s626
      %s641 = sphi 0, %s627
      %s645 = sphi 0, %s645
      %s647 = sphi 0, %s645
      %s648 = sphi 0, %s647
      %s662 = sphi 0, %s648
      %s668 = sphi 0, %s670
      %s671 = sphi 0, %s668
      %s672 = sphi 0, %s671
      %s688 = sphi 0, %s672
    $region4: #{tpu_custom_call.1} parent=1 // loop_header_branch
      %38 = sbr.rel (%p36) target = $region8
    $region5: #{tpu_custom_call.1} parent=1 // loop_body
      %s40 = ssub.s32 %s35, 1
      %s41 = ssub.s32 %s35, 2
      %s42 = sadd.s32 %s35, 1
      %s43 = ssub.s32 %s35, %s42
      %p44 = scmp.eq.s32.totalorder %s43, 0
      %s46 = sadd.s32 %s45, 1
      %s47 = scalar_select %p44, %s45, %s46
      %p50 = pneg %p44
      %p51 = scmp.eq.s32.totalorder %s35, 1
      %p52 = por %p50, %p51
      %p53 = scmp.ne.s32.totalorder %s45, %s48
      %p54 = scmp.eq.s32.totalorder %s35, 0
      %p55 = por %p53, %p54
      %p56 = scmp.ne.s32.totalorder %s45, %s48
      %p57 = scmp.eq.s32.totalorder %s40, 1
      %p58 = por %p56, %p57
      %p59 = scmp.ne.s32.totalorder %s48, %s49
      %p60 = scmp.eq.s32.totalorder %s40, 0
      %p61 = por %p59, %p60
      %p62 = scmp.ne.s32.totalorder %s48, %s49
      %p63 = scmp.eq.s32.totalorder %s41, 1
      %p64 = por %p62, %p63
      %p66 = scmp.ne.s32.totalorder %s49, %s65
      %p67 = scmp.eq.s32.totalorder %s41, 0
      %p68 = por %p66, %p67
      %s69 = ssub.s32 %s35, %s42
      %p70 = scmp.eq.s32.totalorder %s69, 0
      %s72 = sadd.s32 %s71, 1
      %s73 = scalar_select %p70, %s71, %s72
      %p76 = pneg %p70
      %p77 = scmp.eq.s32.totalorder %s35, 1
      %p78 = por %p76, %p77
      %p79 = scmp.ne.s32.totalorder %s71, %s74
      %p80 = scmp.eq.s32.totalorder %s35, 0
      %p81 = por %p79, %p80
      %p82 = scmp.ne.s32.totalorder %s71, %s74
      %p83 = scmp.eq.s32.totalorder %s40, 1
      %p84 = por %p82, %p83
      %p85 = scmp.ne.s32.totalorder %s74, %s75
      %p86 = scmp.eq.s32.totalorder %s40, 0
      %p87 = por %p85, %p86
      %p88 = scmp.ne.s32.totalorder %s74, %s75
      %p89 = scmp.eq.s32.totalorder %s41, 1
      %p90 = por %p88, %p89
      %p92 = scmp.ne.s32.totalorder %s75, %s91
      %p93 = scmp.eq.s32.totalorder %s41, 0
      %p94 = por %p92, %p93
      %s95 = ssub.s32 %s35, %s42
      %p96 = scmp.eq.s32.totalorder %s95, 0
      %s98 = sadd.s32 %s97, 1
      %s99 = scalar_select %p96, %s97, %s98
      %p102 = pneg %p96
      %p103 = scmp.eq.s32.totalorder %s35, 1
      %p104 = por %p102, %p103
      %p105 = scmp.ne.s32.totalorder %s97, %s100
      %p106 = scmp.eq.s32.totalorder %s35, 0
      %p107 = por %p105, %p106
      %p108 = scmp.ne.s32.totalorder %s97, %s100
      %p109 = scmp.eq.s32.totalorder %s40, 1
      %p110 = por %p108, %p109
      %p111 = scmp.ne.s32.totalorder %s100, %s101
      %p112 = scmp.eq.s32.totalorder %s40, 0
      %p113 = por %p111, %p112
      %p114 = scmp.ne.s32.totalorder %s100, %s101
      %p115 = scmp.eq.s32.totalorder %s41, 1
      %p116 = por %p114, %p115
      %p118 = scmp.ne.s32.totalorder %s101, %s117
      %p119 = scmp.eq.s32.totalorder %s41, 0
      %p120 = por %p118, %p119
      %s121 = ssub.s32 %s35, %s42
      %p122 = scmp.eq.s32.totalorder %s121, 0
      %s124 = sadd.s32 %s123, 1
      %s125 = scalar_select %p122, %s123, %s124
      %p128 = pneg %p122
      %p129 = scmp.eq.s32.totalorder %s35, 1
      %p130 = por %p128, %p129
      %p131 = scmp.ne.s32.totalorder %s123, %s126
      %p132 = scmp.eq.s32.totalorder %s35, 0
      %p133 = por %p131, %p132
      %p134 = scmp.ne.s32.totalorder %s123, %s126
      %p135 = scmp.eq.s32.totalorder %s40, 1
      %p136 = por %p134, %p135
      %p137 = scmp.ne.s32.totalorder %s126, %s127
      %p138 = scmp.eq.s32.totalorder %s40, 0
      %p139 = por %p137, %p138
      %p140 = scmp.ne.s32.totalorder %s126, %s127
      %p141 = scmp.eq.s32.totalorder %s41, 1
      %p142 = por %p140, %p141
      %p144 = scmp.ne.s32.totalorder %s127, %s143
      %p145 = scmp.eq.s32.totalorder %s41, 0
      %p146 = por %p144, %p145
      %s147 = ssub.s32 %s35, %s42
      %p148 = scmp.eq.s32.totalorder %s147, 0
      %s150 = sadd.s32 %s149, 1
      %s151 = scalar_select %p148, %s149, %s150
      %p154 = pneg %p148
      %p155 = scmp.eq.s32.totalorder %s35, 1
      %p156 = por %p154, %p155
      %p157 = scmp.ne.s32.totalorder %s149, %s152
      %p158 = scmp.eq.s32.totalorder %s35, 0
      %p159 = por %p157, %p158
      %p160 = scmp.ne.s32.totalorder %s149, %s152
      %p161 = scmp.eq.s32.totalorder %s40, 1
      %p162 = por %p160, %p161
      %p163 = scmp.ne.s32.totalorder %s152, %s153
      %p164 = scmp.eq.s32.totalorder %s40, 0
      %p165 = por %p163, %p164
      %p166 = scmp.ne.s32.totalorder %s152, %s153
      %p167 = scmp.eq.s32.totalorder %s41, 1
      %p168 = por %p166, %p167
      %p170 = scmp.ne.s32.totalorder %s153, %s169
      %p171 = scmp.eq.s32.totalorder %s41, 0
      %p172 = por %p170, %p171
      %s173 = ssub.s32 %s35, %s42
      %p174 = scmp.eq.s32.totalorder %s173, 0
      %s176 = sadd.s32 %s175, 1
      %s177 = scalar_select %p174, %s175, %s176
      %p180 = pneg %p174
      %p181 = scmp.eq.s32.totalorder %s35, 1
      %p182 = por %p180, %p181
      %p183 = scmp.ne.s32.totalorder %s175, %s178
      %p184 = scmp.eq.s32.totalorder %s35, 0
      %p185 = por %p183, %p184
      %p186 = scmp.ne.s32.totalorder %s175, %s178
      %p187 = scmp.eq.s32.totalorder %s40, 1
      %p188 = por %p186, %p187
      %p189 = scmp.ne.s32.totalorder %s178, %s179
      %p190 = scmp.eq.s32.totalorder %s40, 0
      %p191 = por %p189, %p190
      %p192 = scmp.ne.s32.totalorder %s178, %s179
      %p193 = scmp.eq.s32.totalorder %s41, 1
      %p194 = por %p192, %p193
      %p196 = scmp.ne.s32.totalorder %s179, %s195
      %p197 = scmp.eq.s32.totalorder %s41, 0
      %p198 = por %p196, %p197
      %s199 = ssub.s32 %s35, %s42
      %p200 = scmp.eq.s32.totalorder %s199, 0
      %s202 = sadd.s32 %s201, 1
      %s203 = scalar_select %p200, %s201, %s202
      %p206 = pneg %p200
      %p207 = scmp.eq.s32.totalorder %s35, 1
      %p208 = por %p206, %p207
      %p209 = scmp.ne.s32.totalorder %s201, %s204
      %p210 = scmp.eq.s32.totalorder %s35, 0
      %p211 = por %p209, %p210
      %p212 = scmp.ne.s32.totalorder %s201, %s204
      %p213 = scmp.eq.s32.totalorder %s40, 1
      %p214 = por %p212, %p213
      %p215 = scmp.ne.s32.totalorder %s204, %s205
      %p216 = scmp.eq.s32.totalorder %s40, 0
      %p217 = por %p215, %p216
      %p218 = scmp.ne.s32.totalorder %s204, %s205
      %p219 = scmp.eq.s32.totalorder %s41, 1
      %p220 = por %p218, %p219
      %p222 = scmp.ne.s32.totalorder %s205, %s221
      %p223 = scmp.eq.s32.totalorder %s41, 0
      %p224 = por %p222, %p223
      %s226 = sadd.s32 %s225, 1
      %p229 = scmp.eq.s32.totalorder %s35, 1
      %p230 = scmp.ne.s32.totalorder %s225, %s227
      %p231 = scmp.eq.s32.totalorder %s35, 0
      %p232 = por %p230, %p231
      %p233 = scmp.ne.s32.totalorder %s225, %s227
      %p234 = scmp.eq.s32.totalorder %s40, 1
      %p235 = por %p233, %p234
      %p236 = scmp.ne.s32.totalorder %s227, %s228
      %p237 = scmp.eq.s32.totalorder %s40, 0
      %p238 = por %p236, %p237
      %p239 = scmp.ne.s32.totalorder %s227, %s228
      %p240 = scmp.eq.s32.totalorder %s41, 1
      %p241 = por %p239, %p240
      %p243 = scmp.ne.s32.totalorder %s228, %s242
      %p244 = scmp.eq.s32.totalorder %s41, 0
      %p245 = por %p243, %p244
      %s247 = sadd.s32 %s246, 1
      %p250 = scmp.eq.s32.totalorder %s35, 1
      %p251 = scmp.ne.s32.totalorder %s246, %s248
      %p252 = scmp.eq.s32.totalorder %s35, 0
      %p253 = por %p251, %p252
      %p254 = scmp.ne.s32.totalorder %s246, %s248
      %p255 = scmp.eq.s32.totalorder %s40, 1
      %p256 = por %p254, %p255
      %p257 = scmp.ne.s32.totalorder %s248, %s249
      %p258 = scmp.eq.s32.totalorder %s40, 0
      %p259 = por %p257, %p258
      %p260 = scmp.ne.s32.totalorder %s248, %s249
      %p261 = scmp.eq.s32.totalorder %s41, 1
      %p262 = por %p260, %p261
      %p264 = scmp.ne.s32.totalorder %s249, %s263
      %p265 = scmp.eq.s32.totalorder %s41, 0
      %p266 = por %p264, %p265
      %s268 = sadd.s32 %s267, 1
      %p271 = scmp.eq.s32.totalorder %s35, 1
      %p272 = scmp.ne.s32.totalorder %s267, %s269
      %p273 = scmp.eq.s32.totalorder %s35, 0
      %p274 = por %p272, %p273
      %p275 = scmp.ne.s32.totalorder %s267, %s269
      %p276 = scmp.eq.s32.totalorder %s40, 1
      %p277 = por %p275, %p276
      %p278 = scmp.ne.s32.totalorder %s269, %s270
      %p279 = scmp.eq.s32.totalorder %s40, 0
      %p280 = por %p278, %p279
      %p281 = scmp.ne.s32.totalorder %s269, %s270
      %p282 = scmp.eq.s32.totalorder %s41, 1
      %p283 = por %p281, %p282
      %p285 = scmp.ne.s32.totalorder %s270, %s284
      %p286 = scmp.eq.s32.totalorder %s41, 0
      %p287 = por %p285, %p286
      %s289 = sadd.s32 %s288, 1
      %p292 = scmp.eq.s32.totalorder %s35, 1
      %p293 = scmp.ne.s32.totalorder %s288, %s290
      %p294 = scmp.eq.s32.totalorder %s35, 0
      %p295 = por %p293, %p294
      %p296 = scmp.ne.s32.totalorder %s288, %s290
      %p297 = scmp.eq.s32.totalorder %s40, 1
      %p298 = por %p296, %p297
      %p299 = scmp.ne.s32.totalorder %s290, %s291
      %p300 = scmp.eq.s32.totalorder %s40, 0
      %p301 = por %p299, %p300
      %p302 = scmp.ne.s32.totalorder %s290, %s291
      %p303 = scmp.eq.s32.totalorder %s41, 1
      %p304 = por %p302, %p303
      %p306 = scmp.ne.s32.totalorder %s291, %s305
      %p307 = scmp.eq.s32.totalorder %s41, 0
      %p308 = por %p306, %p307
      %s310 = sadd.s32 %s309, 1
      %p313 = scmp.eq.s32.totalorder %s35, 1
      %p314 = scmp.ne.s32.totalorder %s309, %s311
      %p315 = scmp.eq.s32.totalorder %s35, 0
      %p316 = por %p314, %p315
      %p317 = scmp.ne.s32.totalorder %s309, %s311
      %p318 = scmp.eq.s32.totalorder %s40, 1
      %p319 = por %p317, %p318
      %p320 = scmp.ne.s32.totalorder %s311, %s312
      %p321 = scmp.eq.s32.totalorder %s40, 0
      %p322 = por %p320, %p321
      %p323 = scmp.ne.s32.totalorder %s311, %s312
      %p324 = scmp.eq.s32.totalorder %s41, 1
      %p325 = por %p323, %p324
      %p327 = scmp.ne.s32.totalorder %s312, %s326
      %p328 = scmp.eq.s32.totalorder %s41, 0
      %p329 = por %p327, %p328
      %s331 = sadd.s32 %s330, 1
      %p334 = scmp.eq.s32.totalorder %s35, 1
      %p335 = scmp.ne.s32.totalorder %s330, %s332
      %p336 = scmp.eq.s32.totalorder %s35, 0
      %p337 = por %p335, %p336
      %p338 = scmp.ne.s32.totalorder %s330, %s332
      %p339 = scmp.eq.s32.totalorder %s40, 1
      %p340 = por %p338, %p339
      %p341 = scmp.ne.s32.totalorder %s332, %s333
      %p342 = scmp.eq.s32.totalorder %s40, 0
      %p343 = por %p341, %p342
      %p344 = scmp.ne.s32.totalorder %s332, %s333
      %p345 = scmp.eq.s32.totalorder %s41, 1
      %p346 = por %p344, %p345
      %p348 = scmp.ne.s32.totalorder %s333, %s347
      %p349 = scmp.eq.s32.totalorder %s41, 0
      %p350 = por %p348, %p349
      %s352 = sadd.s32 %s351, 1
      %p355 = scmp.eq.s32.totalorder %s35, 1
      %p356 = scmp.ne.s32.totalorder %s351, %s353
      %p357 = scmp.eq.s32.totalorder %s35, 0
      %p358 = por %p356, %p357
      %p359 = scmp.ne.s32.totalorder %s351, %s353
      %p360 = scmp.eq.s32.totalorder %s40, 1
      %p361 = por %p359, %p360
      %p362 = scmp.ne.s32.totalorder %s353, %s354
      %p363 = scmp.eq.s32.totalorder %s40, 0
      %p364 = por %p362, %p363
      %p365 = scmp.ne.s32.totalorder %s353, %s354
      %p366 = scmp.eq.s32.totalorder %s41, 1
      %p367 = por %p365, %p366
      %p369 = scmp.ne.s32.totalorder %s354, %s368
      %p370 = scmp.eq.s32.totalorder %s41, 0
      %p371 = por %p369, %p370
      %s373 = sadd.s32 %s372, 1
      %p376 = scmp.eq.s32.totalorder %s35, 1
      %p377 = scmp.ne.s32.totalorder %s372, %s374
      %p378 = scmp.eq.s32.totalorder %s35, 0
      %p379 = por %p377, %p378
      %p380 = scmp.ne.s32.totalorder %s372, %s374
      %p381 = scmp.eq.s32.totalorder %s40, 1
      %p382 = por %p380, %p381
      %p383 = scmp.ne.s32.totalorder %s374, %s375
      %p384 = scmp.eq.s32.totalorder %s40, 0
      %p385 = por %p383, %p384
      %p386 = scmp.ne.s32.totalorder %s374, %s375
      %p387 = scmp.eq.s32.totalorder %s41, 1
      %p388 = por %p386, %p387
      %p390 = scmp.ne.s32.totalorder %s375, %s389
      %p391 = scmp.eq.s32.totalorder %s41, 0
      %p392 = por %p390, %p391
      %s394 = sadd.s32 %s393, 1
      %p397 = scmp.eq.s32.totalorder %s35, 1
      %p398 = scmp.ne.s32.totalorder %s393, %s395
      %p399 = scmp.eq.s32.totalorder %s35, 0
      %p400 = por %p398, %p399
      %p401 = scmp.ne.s32.totalorder %s393, %s395
      %p402 = scmp.eq.s32.totalorder %s40, 1
      %p403 = por %p401, %p402
      %p404 = scmp.ne.s32.totalorder %s395, %s396
      %p405 = scmp.eq.s32.totalorder %s40, 0
      %p406 = por %p404, %p405
      %p407 = scmp.ne.s32.totalorder %s395, %s396
      %p408 = scmp.eq.s32.totalorder %s41, 1
      %p409 = por %p407, %p408
      %p411 = scmp.ne.s32.totalorder %s396, %s410
      %p412 = scmp.eq.s32.totalorder %s41, 0
      %p413 = por %p411, %p412
      %s415 = sadd.s32 %s414, 1
      %p418 = scmp.eq.s32.totalorder %s35, 1
      %p419 = scmp.ne.s32.totalorder %s414, %s416
      %p420 = scmp.eq.s32.totalorder %s35, 0
      %p421 = por %p419, %p420
      %p422 = scmp.ne.s32.totalorder %s414, %s416
      %p423 = scmp.eq.s32.totalorder %s40, 1
      %p424 = por %p422, %p423
      %p425 = scmp.ne.s32.totalorder %s416, %s417
      %p426 = scmp.eq.s32.totalorder %s40, 0
      %p427 = por %p425, %p426
      %p428 = scmp.ne.s32.totalorder %s416, %s417
      %p429 = scmp.eq.s32.totalorder %s41, 1
      %p430 = por %p428, %p429
      %p432 = scmp.ne.s32.totalorder %s417, %s431
      %p433 = scmp.eq.s32.totalorder %s41, 0
      %p434 = por %p432, %p433
      %s436 = sadd.s32 %s435, 1
      %p439 = scmp.eq.s32.totalorder %s35, 1
      %p440 = scmp.ne.s32.totalorder %s435, %s437
      %p441 = scmp.eq.s32.totalorder %s35, 0
      %p442 = por %p440, %p441
      %p443 = scmp.ne.s32.totalorder %s435, %s437
      %p444 = scmp.eq.s32.totalorder %s40, 1
      %p445 = por %p443, %p444
      %p446 = scmp.ne.s32.totalorder %s437, %s438
      %p447 = scmp.eq.s32.totalorder %s40, 0
      %p448 = por %p446, %p447
      %p449 = scmp.ne.s32.totalorder %s437, %s438
      %p450 = scmp.eq.s32.totalorder %s41, 1
      %p451 = por %p449, %p450
      %p453 = scmp.ne.s32.totalorder %s438, %s452
      %p454 = scmp.eq.s32.totalorder %s41, 0
      %p455 = por %p453, %p454
      %s457 = sadd.s32 %s456, 1
      %p460 = scmp.eq.s32.totalorder %s35, 1
      %p461 = scmp.ne.s32.totalorder %s456, %s458
      %p462 = scmp.eq.s32.totalorder %s35, 0
      %p463 = por %p461, %p462
      %p464 = scmp.ne.s32.totalorder %s456, %s458
      %p465 = scmp.eq.s32.totalorder %s40, 1
      %p466 = por %p464, %p465
      %p467 = scmp.ne.s32.totalorder %s458, %s459
      %p468 = scmp.eq.s32.totalorder %s40, 0
      %p469 = por %p467, %p468
      %p470 = scmp.ne.s32.totalorder %s458, %s459
      %p471 = scmp.eq.s32.totalorder %s41, 1
      %p472 = por %p470, %p471
      %p474 = scmp.ne.s32.totalorder %s459, %s473
      %p475 = scmp.eq.s32.totalorder %s41, 0
      %p476 = por %p474, %p475
      %s478 = sadd.s32 %s477, 1
      %p481 = scmp.eq.s32.totalorder %s35, 1
      %p482 = scmp.ne.s32.totalorder %s477, %s479
      %p483 = scmp.eq.s32.totalorder %s35, 0
      %p484 = por %p482, %p483
      %p485 = scmp.ne.s32.totalorder %s477, %s479
      %p486 = scmp.eq.s32.totalorder %s40, 1
      %p487 = por %p485, %p486
      %p488 = scmp.ne.s32.totalorder %s479, %s480
      %p489 = scmp.eq.s32.totalorder %s40, 0
      %p490 = por %p488, %p489
      %p491 = scmp.ne.s32.totalorder %s479, %s480
      %p492 = scmp.eq.s32.totalorder %s41, 1
      %p493 = por %p491, %p492
      %p495 = scmp.ne.s32.totalorder %s480, %s494
      %p496 = scmp.eq.s32.totalorder %s41, 0
      %p497 = por %p495, %p496
      %s499 = sadd.s32 %s498, 1
      %p502 = scmp.eq.s32.totalorder %s35, 1
      %p503 = scmp.ne.s32.totalorder %s498, %s500
      %p504 = scmp.eq.s32.totalorder %s35, 0
      %p505 = por %p503, %p504
      %p506 = scmp.ne.s32.totalorder %s498, %s500
      %p507 = scmp.eq.s32.totalorder %s40, 1
      %p508 = por %p506, %p507
      %p509 = scmp.ne.s32.totalorder %s500, %s501
      %p510 = scmp.eq.s32.totalorder %s40, 0
      %p511 = por %p509, %p510
      %p512 = scmp.ne.s32.totalorder %s500, %s501
      %p513 = scmp.eq.s32.totalorder %s41, 1
      %p514 = por %p512, %p513
      %p516 = scmp.ne.s32.totalorder %s501, %s515
      %p517 = scmp.eq.s32.totalorder %s41, 0
      %p518 = por %p516, %p517
      %s520 = sadd.s32 %s519, 1
      %p523 = scmp.eq.s32.totalorder %s35, 1
      %p524 = scmp.ne.s32.totalorder %s519, %s521
      %p525 = scmp.eq.s32.totalorder %s35, 0
      %p526 = por %p524, %p525
      %p527 = scmp.ne.s32.totalorder %s519, %s521
      %p528 = scmp.eq.s32.totalorder %s40, 1
      %p529 = por %p527, %p528
      %p530 = scmp.ne.s32.totalorder %s521, %s522
      %p531 = scmp.eq.s32.totalorder %s40, 0
      %p532 = por %p530, %p531
      %p533 = scmp.ne.s32.totalorder %s521, %s522
      %p534 = scmp.eq.s32.totalorder %s41, 1
      %p535 = por %p533, %p534
      %p537 = scmp.ne.s32.totalorder %s522, %s536
      %p538 = scmp.eq.s32.totalorder %s41, 0
      %p539 = por %p537, %p538
      %s541 = sadd.s32 %s540, 1
      %p544 = scmp.eq.s32.totalorder %s35, 1
      %p545 = scmp.ne.s32.totalorder %s540, %s542
      %p546 = scmp.eq.s32.totalorder %s35, 0
      %p547 = por %p545, %p546
      %p548 = scmp.ne.s32.totalorder %s540, %s542
      %p549 = scmp.eq.s32.totalorder %s40, 1
      %p550 = por %p548, %p549
      %p551 = scmp.ne.s32.totalorder %s542, %s543
      %p552 = scmp.eq.s32.totalorder %s40, 0
      %p553 = por %p551, %p552
      %p554 = scmp.ne.s32.totalorder %s542, %s543
      %p555 = scmp.eq.s32.totalorder %s41, 1
      %p556 = por %p554, %p555
      %p558 = scmp.ne.s32.totalorder %s543, %s557
      %p559 = scmp.eq.s32.totalorder %s41, 0
      %p560 = por %p558, %p559
      %s562 = sadd.s32 %s561, 1
      %p565 = scmp.eq.s32.totalorder %s35, 1
      %p566 = scmp.ne.s32.totalorder %s561, %s563
      %p567 = scmp.eq.s32.totalorder %s35, 0
      %p568 = por %p566, %p567
      %p569 = scmp.ne.s32.totalorder %s561, %s563
      %p570 = scmp.eq.s32.totalorder %s40, 1
      %p571 = por %p569, %p570
      %p572 = scmp.ne.s32.totalorder %s563, %s564
      %p573 = scmp.eq.s32.totalorder %s40, 0
      %p574 = por %p572, %p573
      %p575 = scmp.ne.s32.totalorder %s563, %s564
      %p576 = scmp.eq.s32.totalorder %s41, 1
      %p577 = por %p575, %p576
      %p579 = scmp.ne.s32.totalorder %s564, %s578
      %p580 = scmp.eq.s32.totalorder %s41, 0
      %p581 = por %p579, %p580
      %s583 = sadd.s32 %s582, 1
      %p586 = scmp.eq.s32.totalorder %s35, 1
      %p587 = scmp.ne.s32.totalorder %s582, %s584
      %p588 = scmp.eq.s32.totalorder %s35, 0
      %p589 = por %p587, %p588
      %p590 = scmp.ne.s32.totalorder %s582, %s584
      %p591 = scmp.eq.s32.totalorder %s40, 1
      %p592 = por %p590, %p591
      %p593 = scmp.ne.s32.totalorder %s584, %s585
      %p594 = scmp.eq.s32.totalorder %s40, 0
      %p595 = por %p593, %p594
      %p596 = scmp.ne.s32.totalorder %s584, %s585
      %p597 = scmp.eq.s32.totalorder %s41, 1
      %p598 = por %p596, %p597
      %p600 = scmp.ne.s32.totalorder %s585, %s599
      %p601 = scmp.eq.s32.totalorder %s41, 0
      %p602 = por %p600, %p601
      %s604 = sadd.s32 %s603, 1
      %p607 = scmp.eq.s32.totalorder %s35, 1
      %p608 = scmp.ne.s32.totalorder %s603, %s605
      %p609 = scmp.eq.s32.totalorder %s35, 0
      %p610 = por %p608, %p609
      %p611 = scmp.ne.s32.totalorder %s603, %s605
      %p612 = scmp.eq.s32.totalorder %s40, 1
      %p613 = por %p611, %p612
      %p614 = scmp.ne.s32.totalorder %s605, %s606
      %p615 = scmp.eq.s32.totalorder %s40, 0
      %p616 = por %p614, %p615
      %p617 = scmp.ne.s32.totalorder %s605, %s606
      %p618 = scmp.eq.s32.totalorder %s41, 1
      %p619 = por %p617, %p618
      %p621 = scmp.ne.s32.totalorder %s606, %s620
      %p622 = scmp.eq.s32.totalorder %s41, 0
      %p623 = por %p621, %p622
      %s625 = sadd.s32 %s624, 1
      %p628 = scmp.eq.s32.totalorder %s35, 1
      %p629 = scmp.ne.s32.totalorder %s624, %s626
      %p630 = scmp.eq.s32.totalorder %s35, 0
      %p631 = por %p629, %p630
      %p632 = scmp.ne.s32.totalorder %s624, %s626
      %p633 = scmp.eq.s32.totalorder %s40, 1
      %p634 = por %p632, %p633
      %p635 = scmp.ne.s32.totalorder %s626, %s627
      %p636 = scmp.eq.s32.totalorder %s40, 0
      %p637 = por %p635, %p636
      %p638 = scmp.ne.s32.totalorder %s626, %s627
      %p639 = scmp.eq.s32.totalorder %s41, 1
      %p640 = por %p638, %p639
      %p642 = scmp.ne.s32.totalorder %s627, %s641
      %p643 = scmp.eq.s32.totalorder %s41, 0
      %p644 = por %p642, %p643
      %s646 = sadd.s32 %s645, 1
      %p649 = scmp.eq.s32.totalorder %s35, 1
      %p650 = scmp.ne.s32.totalorder %s645, %s647
      %p651 = scmp.eq.s32.totalorder %s35, 0
      %p652 = por %p650, %p651
      %p653 = scmp.ne.s32.totalorder %s645, %s647
      %p654 = scmp.eq.s32.totalorder %s40, 1
      %p655 = por %p653, %p654
      %p656 = scmp.ne.s32.totalorder %s647, %s648
      %p657 = scmp.eq.s32.totalorder %s40, 0
      %p658 = por %p656, %p657
      %p659 = scmp.ne.s32.totalorder %s647, %s648
      %p660 = scmp.eq.s32.totalorder %s41, 1
      %p661 = por %p659, %p660
      %p663 = scmp.ne.s32.totalorder %s648, %s662
      %p664 = scmp.eq.s32.totalorder %s41, 0
      %p665 = por %p663, %p664
      %s666 = ssub.s32 %s35, %s42
      %p667 = scmp.eq.s32.totalorder %s666, 0
      %s669 = sadd.s32 %s668, 1
      %s670 = scalar_select %p667, %s668, %s669
      %p673 = pneg %p667
      %p674 = scmp.eq.s32.totalorder %s35, 1
      %p675 = por %p673, %p674
      %p676 = scmp.ne.s32.totalorder %s668, %s671
      %p677 = scmp.eq.s32.totalorder %s35, 0
      %p678 = por %p676, %p677
      %p679 = scmp.ne.s32.totalorder %s668, %s671
      %p680 = scmp.eq.s32.totalorder %s40, 1
      %p681 = por %p679, %p680
      %p682 = scmp.ne.s32.totalorder %s671, %s672
      %p683 = scmp.eq.s32.totalorder %s40, 0
      %p684 = por %p682, %p683
      %p685 = scmp.ne.s32.totalorder %s671, %s672
      %p686 = scmp.eq.s32.totalorder %s41, 1
      %p687 = por %p685, %p686
      %p689 = scmp.ne.s32.totalorder %s672, %s688
      %p690 = scmp.eq.s32.totalorder %s41, 0
      %p691 = por %p689, %p690
      %p692 = scmp.le.s32.totalorder 1, %s35
      %p693 = scmp.lt.s32.totalorder %s35, 3
      %p694 = pnand %p692, %p693
      %p695 = pneg %p694
      // Predicated region
      $region9: #{tpu_custom_call.1} parent=5 // pred_check
        _
      $region10: #{tpu_custom_call.1} parent=5 // pred_check_branch
        %697 = sbr.rel (%p694) target = $region12
      $region11: #{tpu_custom_call.1} parent=5 // pred_region
        %s698 = ssub.s32 %s35, 1
        // Predicated region
        $region13: #{tpu_custom_call.1} parent=11 // pred_check
          %p699 = pneg %p238
        $region14: #{tpu_custom_call.1} parent=11 // pred_check_branch
          %701 = sbr.rel (%p699) target = $region16
        $region15: #{tpu_custom_call.1} parent=11 // pred_region
          _
        $region16: #{tpu_custom_call.1} parent=11 // pred_fallthru
          _
        // Predicated region
        $region17: #{tpu_custom_call.1} parent=11 // pred_check
          %p702 = pneg %p259
        $region18: #{tpu_custom_call.1} parent=11 // pred_check_branch
          %704 = sbr.rel (%p702) target = $region20
        $region19: #{tpu_custom_call.1} parent=11 // pred_region
          _
        $region20: #{tpu_custom_call.1} parent=11 // pred_fallthru
          _
        // Predicated region
        $region21: #{tpu_custom_call.1} parent=11 // pred_check
          %p705 = pneg %p280
        $region22: #{tpu_custom_call.1} parent=11 // pred_check_branch
          %707 = sbr.rel (%p705) target = $region24
        $region23: #{tpu_custom_call.1} parent=11 // pred_region
          _
        $region24: #{tpu_custom_call.1} parent=11 // pred_fallthru
          _
        // Predicated region
        $region25: #{tpu_custom_call.1} parent=11 // pred_check
          %p708 = pneg %p301
        $region26: #{tpu_custom_call.1} parent=11 // pred_check_branch
          %710 = sbr.rel (%p708) target = $region28
        $region27: #{tpu_custom_call.1} parent=11 // pred_region
          _
        $region28: #{tpu_custom_call.1} parent=11 // pred_fallthru
          _
        // Predicated region
        $region29: #{tpu_custom_call.1} parent=11 // pred_check
          %p711 = pneg %p322
        $region30: #{tpu_custom_call.1} parent=11 // pred_check_branch
          %713 = sbr.rel (%p711) target = $region32
        $region31: #{tpu_custom_call.1} parent=11 // pred_region
          _
        $region32: #{tpu_custom_call.1} parent=11 // pred_fallthru
          _
        // Predicated region
        $region33: #{tpu_custom_call.1} parent=11 // pred_check
          %p714 = pneg %p343
        $region34: #{tpu_custom_call.1} parent=11 // pred_check_branch
          %716 = sbr.rel (%p714) target = $region36
        $region35: #{tpu_custom_call.1} parent=11 // pred_region
          _
        $region36: #{tpu_custom_call.1} parent=11 // pred_fallthru
          _
        // Predicated region
        $region37: #{tpu_custom_call.1} parent=11 // pred_check
          %p717 = pneg %p364
        $region38: #{tpu_custom_call.1} parent=11 // pred_check_branch
          %719 = sbr.rel (%p717) target = $region40
        $region39: #{tpu_custom_call.1} parent=11 // pred_region
          _
        $region40: #{tpu_custom_call.1} parent=11 // pred_fallthru
          _
        // Predicated region
        $region41: #{tpu_custom_call.1} parent=11 // pred_check
          %p720 = pneg %p385
        $region42: #{tpu_custom_call.1} parent=11 // pred_check_branch
          %722 = sbr.rel (%p720) target = $region44
        $region43: #{tpu_custom_call.1} parent=11 // pred_region
          _
        $region44: #{tpu_custom_call.1} parent=11 // pred_fallthru
          _
        // Predicated region
        $region45: #{tpu_custom_call.1} parent=11 // pred_check
          %p723 = pneg %p406
        $region46: #{tpu_custom_call.1} parent=11 // pred_check_branch
          %725 = sbr.rel (%p723) target = $region48
        $region47: #{tpu_custom_call.1} parent=11 // pred_region
          _
        $region48: #{tpu_custom_call.1} parent=11 // pred_fallthru
          _
        // Predicated region
        $region49: #{tpu_custom_call.1} parent=11 // pred_check
          %p726 = pneg %p427
        $region50: #{tpu_custom_call.1} parent=11 // pred_check_branch
          %728 = sbr.rel (%p726) target = $region52
        $region51: #{tpu_custom_call.1} parent=11 // pred_region
          _
        $region52: #{tpu_custom_call.1} parent=11 // pred_fallthru
          _
        // Predicated region
        $region53: #{tpu_custom_call.1} parent=11 // pred_check
          %p729 = pneg %p448
        $region54: #{tpu_custom_call.1} parent=11 // pred_check_branch
          %731 = sbr.rel (%p729) target = $region56
        $region55: #{tpu_custom_call.1} parent=11 // pred_region
          _
        $region56: #{tpu_custom_call.1} parent=11 // pred_fallthru
          _
        // Predicated region
        $region57: #{tpu_custom_call.1} parent=11 // pred_check
          %p732 = pneg %p469
        $region58: #{tpu_custom_call.1} parent=11 // pred_check_branch
          %734 = sbr.rel (%p732) target = $region60
        $region59: #{tpu_custom_call.1} parent=11 // pred_region
          _
        $region60: #{tpu_custom_call.1} parent=11 // pred_fallthru
          _
        // Predicated region
        $region61: #{tpu_custom_call.1} parent=11 // pred_check
          %p735 = pneg %p490
        $region62: #{tpu_custom_call.1} parent=11 // pred_check_branch
          %737 = sbr.rel (%p735) target = $region64
        $region63: #{tpu_custom_call.1} parent=11 // pred_region
          _
        $region64: #{tpu_custom_call.1} parent=11 // pred_fallthru
          _
        // Predicated region
        $region65: #{tpu_custom_call.1} parent=11 // pred_check
          %p738 = pneg %p511
        $region66: #{tpu_custom_call.1} parent=11 // pred_check_branch
          %740 = sbr.rel (%p738) target = $region68
        $region67: #{tpu_custom_call.1} parent=11 // pred_region
          _
        $region68: #{tpu_custom_call.1} parent=11 // pred_fallthru
          _
        // Predicated region
        $region69: #{tpu_custom_call.1} parent=11 // pred_check
          %p741 = pneg %p532
        $region70: #{tpu_custom_call.1} parent=11 // pred_check_branch
          %743 = sbr.rel (%p741) target = $region72
        $region71: #{tpu_custom_call.1} parent=11 // pred_region
          _
        $region72: #{tpu_custom_call.1} parent=11 // pred_fallthru
          _
        // Predicated region
        $region73: #{tpu_custom_call.1} parent=11 // pred_check
          %p744 = pneg %p553
        $region74: #{tpu_custom_call.1} parent=11 // pred_check_branch
          %746 = sbr.rel (%p744) target = $region76
        $region75: #{tpu_custom_call.1} parent=11 // pred_region
          %748 = vsyncadd [#allocation3], 0
          %s749 = sshll.u32 %s22, 4
          %s750 = int_to_ptr.hbm [resolvable:$true] %s749
          %s751 = sshll.u32 [#allocation2], 4
          %s752 = int_to_ptr.vmem [resolvable:$true] %s751
          %757 = dma.hbm_to_vmem [thread:$0]  %s750, 4096, %s752, [#allocation3], 64, 64, 4
        $region76: #{tpu_custom_call.1} parent=11 // pred_fallthru
          _
        // Predicated region
        $region77: #{tpu_custom_call.1} parent=11 // pred_check
          %p758 = pneg %p574
        $region78: #{tpu_custom_call.1} parent=11 // pred_check_branch
          %760 = sbr.rel (%p758) target = $region80
        $region79: #{tpu_custom_call.1} parent=11 // pred_region
          _
        $region80: #{tpu_custom_call.1} parent=11 // pred_fallthru
          _
        // Predicated region
        $region81: #{tpu_custom_call.1} parent=11 // pred_check
          %p761 = pneg %p595
        $region82: #{tpu_custom_call.1} parent=11 // pred_check_branch
          %763 = sbr.rel (%p761) target = $region84
        $region83: #{tpu_custom_call.1} parent=11 // pred_region
          _
        $region84: #{tpu_custom_call.1} parent=11 // pred_fallthru
          _
        // Predicated region
        $region85: #{tpu_custom_call.1} parent=11 // pred_check
          %p764 = pneg %p616
        $region86: #{tpu_custom_call.1} parent=11 // pred_check_branch
          %766 = sbr.rel (%p764) target = $region88
        $region87: #{tpu_custom_call.1} parent=11 // pred_region
          _
        $region88: #{tpu_custom_call.1} parent=11 // pred_fallthru
          _
        // Predicated region
        $region89: #{tpu_custom_call.1} parent=11 // pred_check
          %p767 = pneg %p637
        $region90: #{tpu_custom_call.1} parent=11 // pred_check_branch
          %769 = sbr.rel (%p767) target = $region92
        $region91: #{tpu_custom_call.1} parent=11 // pred_region
          _
        $region92: #{tpu_custom_call.1} parent=11 // pred_fallthru
          _
        // Predicated region
        $region93: #{tpu_custom_call.1} parent=11 // pred_check
          %p770 = pneg %p658
        $region94: #{tpu_custom_call.1} parent=11 // pred_check_branch
          %772 = sbr.rel (%p770) target = $region96
        $region95: #{tpu_custom_call.1} parent=11 // pred_region
          _
        $region96: #{tpu_custom_call.1} parent=11 // pred_fallthru
          _
      $region12: #{tpu_custom_call.1} parent=5 // pred_fallthru
        _
      %p773 = scmp.lt.s32.totalorder %s35, 2
      // Predicated region
      $region97: #{tpu_custom_call.1} parent=5 // pred_check
        %p774 = pneg %p773
      $region98: #{tpu_custom_call.1} parent=5 // pred_check_branch
        %776 = sbr.rel (%p774) target = $region100
      $region99: #{tpu_custom_call.1} parent=5 // pred_region
        // Predicated region
        $region101: #{tpu_custom_call.1} parent=99 // pred_check
          %p777 = pneg %p55
        $region102: #{tpu_custom_call.1} parent=99 // pred_check_branch
          %779 = sbr.rel (%p777) target = $region104
        $region103: #{tpu_custom_call.1} parent=99 // pred_region
          %p780 = scmp.lt.s32.totalorder %s35, 1
          %s781 = scalar_select %p780, %s35, 1
          %s782 = smul.addr %s781, 8
          %s783 = scalar_lea.vmem %s0, %s782
        $region104: #{tpu_custom_call.1} parent=99 // pred_fallthru
          _
        // Predicated region
        $region105: #{tpu_custom_call.1} parent=99 // pred_check
          %p784 = pneg %p81
        $region106: #{tpu_custom_call.1} parent=99 // pred_check_branch
          %786 = sbr.rel (%p784) target = $region108
        $region107: #{tpu_custom_call.1} parent=99 // pred_region
          %p787 = scmp.lt.s32.totalorder %s35, 1
          %s788 = scalar_select %p787, %s35, 1
          %s789 = smul.addr %s788, 8
          %s790 = scalar_lea.vmem %s1, %s789
        $region108: #{tpu_custom_call.1} parent=99 // pred_fallthru
          _
        // Predicated region
        $region109: #{tpu_custom_call.1} parent=99 // pred_check
          %p791 = pneg %p107
        $region110: #{tpu_custom_call.1} parent=99 // pred_check_branch
          %793 = sbr.rel (%p791) target = $region112
        $region111: #{tpu_custom_call.1} parent=99 // pred_region
          %p794 = scmp.lt.s32.totalorder %s35, 1
          %s795 = scalar_select %p794, %s35, 1
          %s796 = smul.addr %s795, 3
          %s797 = smul.addr %s796, 8
          %s798 = scalar_lea.vmem %s2, %s797
        $region112: #{tpu_custom_call.1} parent=99 // pred_fallthru
          _
        // Predicated region
        $region113: #{tpu_custom_call.1} parent=99 // pred_check
          %p799 = pneg %p133
        $region114: #{tpu_custom_call.1} parent=99 // pred_check_branch
          %801 = sbr.rel (%p799) target = $region116
        $region115: #{tpu_custom_call.1} parent=99 // pred_region
          %p802 = scmp.lt.s32.totalorder %s35, 1
          %s803 = scalar_select %p802, %s35, 1
          %s804 = smul.addr %s803, 3
          %s805 = smul.addr %s804, 8
          %s806 = scalar_lea.vmem %s3, %s805
        $region116: #{tpu_custom_call.1} parent=99 // pred_fallthru
          _
        // Predicated region
        $region117: #{tpu_custom_call.1} parent=99 // pred_check
          %p807 = pneg %p159
        $region118: #{tpu_custom_call.1} parent=99 // pred_check_branch
          %809 = sbr.rel (%p807) target = $region120
        $region119: #{tpu_custom_call.1} parent=99 // pred_region
          %p810 = scmp.lt.s32.totalorder %s35, 1
          %s811 = scalar_select %p810, %s35, 1
          %s812 = scalar_lea.vmem %s4, %s811
        $region120: #{tpu_custom_call.1} parent=99 // pred_fallthru
          _
        // Predicated region
        $region121: #{tpu_custom_call.1} parent=99 // pred_check
          %p813 = pneg %p185
        $region122: #{tpu_custom_call.1} parent=99 // pred_check_branch
          %815 = sbr.rel (%p813) target = $region124
        $region123: #{tpu_custom_call.1} parent=99 // pred_region
          %p816 = scmp.lt.s32.totalorder %s35, 1
          %s817 = scalar_select %p816, %s35, 1
          %s818 = smul.addr %s817, 8
          %s819 = scalar_lea.vmem %s5, %s818
        $region124: #{tpu_custom_call.1} parent=99 // pred_fallthru
          _
        // Predicated region
        $region125: #{tpu_custom_call.1} parent=99 // pred_check
          %p820 = pneg %p211
        $region126: #{tpu_custom_call.1} parent=99 // pred_check_branch
          %822 = sbr.rel (%p820) target = $region128
        $region127: #{tpu_custom_call.1} parent=99 // pred_region
          %p823 = scmp.lt.s32.totalorder %s35, 1
          %s824 = scalar_select %p823, %s35, 1
          %s825 = smul.addr %s824, 3
          %s826 = smul.addr %s825, 8
          %s827 = scalar_lea.vmem %s6, %s826
        $region128: #{tpu_custom_call.1} parent=99 // pred_fallthru
          _
      $region100: #{tpu_custom_call.1} parent=5 // pred_fallthru
        _
      %p828 = scmp.le.s32.totalorder 1, %s35
      %p829 = scmp.lt.s32.totalorder %s35, 3
      %p830 = pnand %p828, %p829
      %p831 = pneg %p830
      // Predicated region
      $region129: #{tpu_custom_call.1} parent=5 // pred_check
        _
      $region130: #{tpu_custom_call.1} parent=5 // pred_check_branch
        %833 = sbr.rel (%p830) target = $region132
      $region131: #{tpu_custom_call.1} parent=5 // pred_region
        %s834 = ssub.s32 %s35, 1
        // Predicated region
        $region133: #{tpu_custom_call.1} parent=131 // pred_check
          %p835 = pneg %p553
        $region134: #{tpu_custom_call.1} parent=131 // pred_check_branch
          %837 = sbr.rel (%p835) target = $region136
        $region135: #{tpu_custom_call.1} parent=131 // pred_region
          %839 = dma.done [#allocation3], 4096
        $region136: #{tpu_custom_call.1} parent=131 // pred_fallthru
          _
        %p840 = scmp.lt.s32.totalorder %s40, 1
        %s841 = scalar_select %p840, %s40, 1
        %s842 = smul.addr %s841, 8
        %s843 = scalar_lea.vmem %s0, %s842
        %p844 = pneg %p61
        %p845 = pneg %p58
        %p846 = scmp.lt.s32.totalorder %s40, 1
        %s847 = scalar_select %p846, %s40, 1
        %s848 = smul.addr %s847, 8
        %s849 = scalar_lea.vmem %s1, %s848
        %p850 = pneg %p87
        %p851 = pneg %p84
        %p852 = scmp.lt.s32.totalorder %s40, 1
        %s853 = scalar_select %p852, %s40, 1
        %s854 = smul.addr %s853, 3
        %s855 = smul.addr %s854, 8
        %s856 = scalar_lea.vmem %s2, %s855
        %p857 = pneg %p113
        %p858 = pneg %p110
        %p859 = scmp.lt.s32.totalorder %s40, 1
        %s860 = scalar_select %p859, %s40, 1
        %s861 = smul.addr %s860, 3
        %s862 = smul.addr %s861, 8
        %s863 = scalar_lea.vmem %s3, %s862
        %p864 = pneg %p139
        %p865 = pneg %p136
        %p866 = scmp.lt.s32.totalorder %s40, 1
        %s867 = scalar_select %p866, %s40, 1
        %s868 = scalar_lea.vmem %s4, %s867
        %p869 = pneg %p165
        %p870 = pneg %p162
        %p871 = scmp.lt.s32.totalorder %s40, 1
        %s872 = scalar_select %p871, %s40, 1
        %s873 = smul.addr %s872, 8
        %s874 = scalar_lea.vmem %s5, %s873
        %p875 = pneg %p191
        %p876 = pneg %p188
        %p877 = scmp.lt.s32.totalorder %s40, 1
        %s878 = scalar_select %p877, %s40, 1
        %s879 = smul.addr %s878, 3
        %s880 = smul.addr %s879, 8
        %s881 = scalar_lea.vmem %s6, %s880
        %p882 = pneg %p217
        %p883 = pneg %p214
        %p884 = pneg %p238
        %p885 = pneg %p235
        %p886 = pneg %p259
        %p887 = pneg %p256
        %p888 = pneg %p280
        %p889 = pneg %p277
        %p890 = pneg %p301
        %p891 = pneg %p298
        %p892 = pneg %p322
        %p893 = pneg %p319
        %p894 = pneg %p343
        %p895 = pneg %p340
        %p896 = pneg %p364
        %p897 = pneg %p361
        %p898 = pneg %p385
        %p899 = pneg %p382
        %p900 = pneg %p406
        %p901 = pneg %p403
        %p902 = pneg %p427
        %p903 = pneg %p424
        %p904 = pneg %p448
        %p905 = pneg %p445
        %p906 = pneg %p469
        %p907 = pneg %p466
        %p908 = pneg %p490
        %p909 = pneg %p487
        %p910 = pneg %p511
        %p911 = pneg %p508
        %p912 = pneg %p532
        %p913 = pneg %p529
        %p914 = pneg %p553
        %p915 = pneg %p550
        %p916 = pneg %p574
        %p917 = pneg %p571
        %p918 = pneg %p595
        %p919 = pneg %p592
        %p920 = pneg %p616
        %p921 = pneg %p613
        %p922 = pneg %p637
        %p923 = pneg %p634
        %p924 = pneg %p658
        %p925 = pneg %p655
        %p926 = pneg %p684
        %p927 = pneg %p681
        %p928 = scmp.lt.s32.totalorder %s40, 1
        %s929 = scalar_select %p928, %s40, 1
        %s930 = smul.addr %s929, 8
        %s931 = scalar_lea.vmem %s28, %s930
        %p932 = scmp.lt.s32.totalorder %s40, 1
        %s933 = scalar_select %p932, %s40, 1
        %s934 = smul.addr %s933, 8
        %s935 = scalar_lea.vmem %s0, %s934
        %p936 = scmp.lt.s32.totalorder %s40, 1
        %s937 = scalar_select %p936, %s40, 1
        %s938 = smul.addr %s937, 8
        %s939 = scalar_lea.vmem %s1, %s938
        %p940 = scmp.lt.s32.totalorder %s40, 1
        %s941 = scalar_select %p940, %s40, 1
        %s942 = smul.addr %s941, 3
        %s943 = smul.addr %s942, 8
        %s944 = scalar_lea.vmem %s2, %s943
        %p945 = scmp.lt.s32.totalorder %s40, 1
        %s946 = scalar_select %p945, %s40, 1
        %s947 = smul.addr %s946, 3
        %s948 = smul.addr %s947, 8
        %s949 = scalar_lea.vmem %s3, %s948
        %p950 = scmp.lt.s32.totalorder %s40, 1
        %s951 = scalar_select %p950, %s40, 1
        %s952 = scalar_lea.vmem %s4, %s951
        %p953 = scmp.lt.s32.totalorder %s40, 1
        %s954 = scalar_select %p953, %s40, 1
        %s955 = smul.addr %s954, 8
        %s956 = scalar_lea.vmem %s5, %s955
        %p957 = scmp.lt.s32.totalorder %s40, 1
        %s958 = scalar_select %p957, %s40, 1
        %s959 = smul.addr %s958, 3
        %s960 = smul.addr %s959, 8
        %s961 = scalar_lea.vmem %s6, %s960
        %p962 = scmp.lt.s32.totalorder %s40, 1
        %s963 = scalar_select %p962, %s40, 1
        %s964 = smul.addr %s963, 8
        %s965 = scalar_lea.vmem %s28, %s964
        %v967 = vld [vmem:[%s944] sm:$0xff]
        %v968 = vld [vmem:[%s944 + $0x8] sm:$0xff]
        %v969 = vld [vmem:[%s944 + $0x10] sm:$0xf]
        %v970 = vld [vmem:[%s949] sm:$0xff]
        %v971 = vld [vmem:[%s949 + $0x8] sm:$0xff]
        %v972 = vld [vmem:[%s949 + $0x10] sm:$0xf]
        %v973 = vld [vmem:[%s952] sm:$0x1]
        %v974 = vlaneseq
        %v975 = vand.u32 %v974, 127
        %v976 = vlaneseq
        %v977 = vshrl.u32 %v976, 7
        %978 = vset.pattern.permute.xlu0 0
        %979 = vperm.xlu0 %978, %v967
        %v980 = vpop.permute.xlu0 %979
        %981 = vset.pattern.permute.xlu0 0
        %982 = vperm.xlu0 %981, %v968
        %v983 = vpop.permute.xlu0 %982
        %984 = vset.pattern.permute.xlu0 0
        %985 = vperm.xlu0 %984, %v969
        %v986 = vpop.permute.xlu0 %985
        %vm987 = vcmp.eq.s32.totalorder %v975, %v980
        %vm988 = vcmp.eq.s32.totalorder %v975, %v983
        %vm989 = vcmp.eq.s32.totalorder %v975, %v986
        %v990 = vsel %vm987, 1.0, 0.0
        %v991 = vsel %vm988, 1.0, 0.0
        %v992 = vsel %vm989, 1.0, 0.0
        %993 = vset.pattern.permute.xlu0 0
        %994 = vperm.xlu0 %993, %v970
        %v995 = vpop.permute.xlu0 %994
        %996 = vset.pattern.permute.xlu0 0
        %997 = vperm.xlu0 %996, %v971
        %v998 = vpop.permute.xlu0 %997
        %999 = vset.pattern.permute.xlu0 0
        %1000 = vperm.xlu0 %999, %v972
        %v1001 = vpop.permute.xlu0 %1000
        %vm1002 = vcmp.eq.s32.totalorder %v975, %v995
        %vm1003 = vcmp.eq.s32.totalorder %v975, %v998
        %vm1004 = vcmp.eq.s32.totalorder %v975, %v1001
        %v1005 = vsel %vm1002, 1.0, 0.0
        %v1006 = vsel %vm1003, 1.0, 0.0
        %v1007 = vsel %vm1004, 1.0, 0.0
        %v1008 = vperm.slane %v973, 0
        %vm1009 = vcmp.eq.s32.totalorder %v977, %v1008
        %v1010 = vsel %vm1009, 1.0, 0.0
        %v1011 = vpack.c.bf16 %v991, %v990
        %v1012 = vpack.c.bf16 %v992, %v992
        %v1013 = vpack.c.bf16 %v1006, %v1005
        %v1014 = vpack.c.bf16 %v1007, %v1007
        %v1015 = vpack.c.bf16 %v1010, %v1010
        %vm1016 = vcmask 159744
        %v1017 = vsel %vm1016, %v1010, 0.0
        %1018 = vadd.xlane.f32.xlu0 %v1017
        %v1019 = vpop.xlane.xlu0 %1018
        %v1020 = vmax.f32 %v1019, 1.0
        %v1021 = vrcp.pop %v1020
        %v1022 = vld [vmem:[%s956] sm:$0x1f]
        %1024 = vset.pattern.permute.xlu0 0
        %1025 = vperm.xlu0 %1024, %v1022
        %v1026 = vpop.permute.xlu0 %1025
        %v1028 = vld [vmem:[%s961] sm:$0xff]
        %v1029 = vld [vmem:[%s961 + $0x8] sm:$0xff]
        %v1030 = vld [vmem:[%s961 + $0x10] sm:$0xf]
        %1032 = vset.pattern.permute.xlu0 0
        %1033 = vperm.xlu0 %1032, %v1028
        %v1034 = vpop.permute.xlu0 %1033
        %1037 = vset.pattern.permute.xlu0 0
        %1038 = vperm.xlu0 %1037, %v1029
        %v1039 = vpop.permute.xlu0 %1038
        %1042 = vset.pattern.permute.xlu0 0
        %1043 = vperm.xlu0 %1042, %v1030
        %v1044 = vpop.permute.xlu0 %1043
        %v1046 = vld [vmem:[%s935] sm:$0x1f]
        %v1047 = vld [vmem:[%s7] sm:$0x3]
        %v1048 = vpack.c.bf16 %v1046, %v1046
        %v1049 = vld [vmem:[%s8] sm:$0x1]
        %v1051 = vperm.slane %v1049, 0
        %vm1053 = vcmask 31744
        %v1055 = vsel %vm1053, %v1048, 0
        %vm1057 = vcmask 1041408
        %v1059 = vsel %vm1057, %v1047, 0
        %1061 = vmatpush.bf16.msra.mxu0 0
        %1062 = vmatpush.bf16.msra.mxu0 0
        %1063 = vmatpush.bf16.msra.mxu0 0
        %1064 = vmatpush.bf16.msra.mxu0 0
        %1065 = vmatpush.bf16.msra.mxu0 0
        %1066 = vmatpush.bf16.msra.mxu0 0
        %1067 = vmatpush.bf16.msra.mxu0 0
        %1068 = vmatpush.bf16.msra.mxu0 %v1059
        %1069 = vmatmul.bf16.gmra.mxu0 %v1055
        %v1070 = vpop.f32.mrf.mxu0
        %v1071 = vadd.f32 %v1051, %v1070
        %v1072 = vpop.f32.mrf.mxu0
        %1073 = vdwg.mxu0
        %v1074 = vld [vmem:[%s939] sm:$0x1f]
        %vm1075 = vcmask 39936
        %v1077 = vsel %vm1075, %v990, 0
        %v1080 = vsel %vm1075, %v991, 0
        %v1083 = vsel %vm1075, %v992, 0
        %vm1085 = vcmask 1044480
        %v1087 = vsel %vm1085, %v1074, 0
        %1089 = vmatpush.msra.mxu0 0.0
        %1090 = vmatpush.msra.mxu0 0.0
        %1091 = vmatpush.msra.mxu0 0.0
        %1092 = vmatpush.msra.mxu0 0.0
        %1093 = vmatpush.msra.mxu0 0.0
        %1094 = vmatpush.msra.mxu0 0.0
        %1095 = vmatpush.msra.mxu0 0.0
        %1096 = vmatpush.msra.mxu0 0.0
        %1097 = vmatpush.msra.mxu0 0.0
        %1098 = vmatpush.msra.mxu0 0.0
        %1099 = vmatpush.msra.mxu0 0.0
        %1100 = vmatpush.msra.mxu0 0.0
        %1101 = vmatpush.msra.mxu0 0.0
        %1102 = vmatpush.msra.mxu0 0.0
        %1103 = vmatpush.msra.mxu0 0.0
        %1104 = vmatpush.msra.mxu0 %v1087
        %1105 = vmatmul.f32.gmra.mxu0 %v1077
        %v1106 = vpop.f32.mrf.mxu0
        %v1107 = vadd.f32 0.0, %v1106
        %1108 = vmatmul.f32.gmra.mxu0 %v1080
        %v1109 = vpop.f32.mrf.mxu0
        %v1110 = vadd.f32 0.0, %v1109
        %1111 = vmatmul.f32.gmra.mxu0 %v1083
        %v1112 = vpop.f32.mrf.mxu0
        %v1113 = vadd.f32 0.0, %v1112
        %1114 = vdwg.mxu0
        %v1116 = vsel %vm1075, %v1005, 0
        %v1119 = vsel %vm1075, %v1006, 0
        %v1122 = vsel %vm1075, %v1007, 0
        %1124 = vmatpush.msra.mxu0 0.0
        %1125 = vmatpush.msra.mxu0 0.0
        %1126 = vmatpush.msra.mxu0 0.0
        %1127 = vmatpush.msra.mxu0 0.0
        %1128 = vmatpush.msra.mxu0 0.0
        %1129 = vmatpush.msra.mxu0 0.0
        %1130 = vmatpush.msra.mxu0 0.0
        %1131 = vmatpush.msra.mxu0 0.0
        %1132 = vmatpush.msra.mxu0 0.0
        %1133 = vmatpush.msra.mxu0 0.0
        %1134 = vmatpush.msra.mxu0 0.0
        %1135 = vmatpush.msra.mxu0 0.0
        %1136 = vmatpush.msra.mxu0 0.0
        %1137 = vmatpush.msra.mxu0 0.0
        %1138 = vmatpush.msra.mxu0 0.0
        %1139 = vmatpush.msra.mxu0 %v1087
        %1140 = vmatmul.f32.gmra.mxu0 %v1116
        %v1141 = vpop.f32.mrf.mxu0
        %v1142 = vadd.f32 0.0, %v1141
        %1143 = vmatmul.f32.gmra.mxu0 %v1119
        %v1144 = vpop.f32.mrf.mxu0
        %v1145 = vadd.f32 0.0, %v1144
        %1146 = vmatmul.f32.gmra.mxu0 %v1122
        %v1147 = vpop.f32.mrf.mxu0
        %v1148 = vadd.f32 0.0, %v1147
        %1149 = vdwg.mxu0
        %v1150 = vsub.f32 %v1107, %v1142
        %v1151 = vsub.f32 %v1110, %v1145
        %v1152 = vsub.f32 %v1113, %v1148
        %v1153 = vmul.f32 %v1150, %v1150
        %v1154 = vmul.f32 %v1151, %v1151
        %v1155 = vmul.f32 %v1152, %v1152
        %vm1156 = vcmask 23552
        %v1157 = vsel %vm1156, %v1153, 0.0
        %1158 = vadd.xlane.f32.xlu0 %v1157
        %v1159 = vpop.xlane.xlu0 %1158
        %v1160 = vsel %vm1156, %v1154, 0.0
        %1161 = vadd.xlane.f32.xlu0 %v1160
        %v1162 = vpop.xlane.xlu0 %1161
        %vm1163 = vcmask 19456
        %v1164 = vsel %vm1163, %v1155, 0.0
        %1165 = vadd.xlane.f32.xlu0 %v1164
        %v1166 = vpop.xlane.xlu0 %1165
        %1170 = vrot.lane.b32.xlu0 %v1142, 127
        %v1171 = vpop.permute.xlu0 %1170
        %1172 = vrot.lane.b32.xlu0 %v1145, 127
        %v1173 = vpop.permute.xlu0 %1172
        %1174 = vrot.lane.b32.xlu0 %v1148, 127
        %v1175 = vpop.permute.xlu0 %1174
        %v1179 = vmul.f32 %v1107, %v1171
        %v1180 = vmul.f32 %v1110, %v1173
        %v1181 = vmul.f32 %v1113, %v1175
        %1182 = vrot.lane.b32.xlu0 %v1142, 1
        %v1183 = vpop.permute.xlu0 %1182
        %1184 = vrot.lane.b32.xlu0 %v1145, 1
        %v1185 = vpop.permute.xlu0 %1184
        %1186 = vrot.lane.b32.xlu0 %v1148, 1
        %v1187 = vpop.permute.xlu0 %1186
        %v1191 = vmul.f32 %v1107, %v1183
        %v1192 = vmul.f32 %v1110, %v1185
        %v1193 = vmul.f32 %v1113, %v1187
        %1197 = vrot.lane.b32.xlu0 %v1191, 127
        %v1198 = vpop.permute.xlu0 %1197
        %1199 = vrot.lane.b32.xlu0 %v1192, 127
        %v1200 = vpop.permute.xlu0 %1199
        %1201 = vrot.lane.b32.xlu0 %v1193, 127
        %v1202 = vpop.permute.xlu0 %1201
        %v1206 = vsub.f32 %v1179, %v1198
        %v1207 = vsub.f32 %v1180, %v1200
        %v1208 = vsub.f32 %v1181, %v1202
        %1209 = vrot.lane.b32.xlu0 %v1142, 2
        %v1210 = vpop.permute.xlu0 %1209
        %1211 = vrot.lane.b32.xlu0 %v1145, 2
        %v1212 = vpop.permute.xlu0 %1211
        %1213 = vrot.lane.b32.xlu0 %v1148, 2
        %v1214 = vpop.permute.xlu0 %1213
        %v1218 = vmul.f32 %v1107, %v1210
        %v1219 = vmul.f32 %v1110, %v1212
        %v1220 = vmul.f32 %v1113, %v1214
        %1221 = vrot.lane.b32.xlu0 %v1142, 126
        %v1222 = vpop.permute.xlu0 %1221
        %1223 = vrot.lane.b32.xlu0 %v1145, 126
        %v1224 = vpop.permute.xlu0 %1223
        %1225 = vrot.lane.b32.xlu0 %v1148, 126
        %v1226 = vpop.permute.xlu0 %1225
        %v1230 = vmul.f32 %v1107, %v1222
        %v1231 = vmul.f32 %v1110, %v1224
        %v1232 = vmul.f32 %v1113, %v1226
        %1236 = vrot.lane.b32.xlu0 %v1230, 2
        %v1237 = vpop.permute.xlu0 %1236
        %1238 = vrot.lane.b32.xlu0 %v1231, 2
        %v1239 = vpop.permute.xlu0 %1238
        %1240 = vrot.lane.b32.xlu0 %v1232, 2
        %v1241 = vpop.permute.xlu0 %1240
        %v1245 = vsub.f32 %v1218, %v1237
        %v1246 = vsub.f32 %v1219, %v1239
        %v1247 = vsub.f32 %v1220, %v1241
        %1251 = vrot.lane.b32.xlu0 %v1206, 127
        %v1252 = vpop.permute.xlu0 %1251
        %1253 = vrot.lane.b32.xlu0 %v1207, 127
        %v1254 = vpop.permute.xlu0 %1253
        %1255 = vrot.lane.b32.xlu0 %v1208, 127
        %v1256 = vpop.permute.xlu0 %1255
        %1263 = vrot.lane.b32.xlu0 %v1245, 127
        %v1264 = vpop.permute.xlu0 %1263
        %1265 = vrot.lane.b32.xlu0 %v1246, 127
        %v1266 = vpop.permute.xlu0 %1265
        %1267 = vrot.lane.b32.xlu0 %v1247, 127
        %v1268 = vpop.permute.xlu0 %1267
        %1272 = vrot.lane.b32.xlu0 %v1206, 2
        %v1273 = vpop.permute.xlu0 %1272
        %1274 = vrot.lane.b32.xlu0 %v1207, 2
        %v1275 = vpop.permute.xlu0 %1274
        %1276 = vrot.lane.b32.xlu0 %v1208, 2
        %v1277 = vpop.permute.xlu0 %1276
        %vm1281 = vcmask 7168
        %v1282 = vsel %vm1281, %v1252, %v1264
        %v1283 = vsel %vm1281, %v1254, %v1266
        %v1284 = vsel %vm1281, %v1256, %v1268
        %vm1285 = vcmask 15360
        %v1286 = vsel %vm1285, %v1282, %v1273
        %v1287 = vsel %vm1285, %v1283, %v1275
        %v1288 = vsel %vm1285, %v1284, %v1277
        %v1289 = vrsqrt.pop %v1159
        %v1290 = vmul.f32 %v1289, %v1159
        %v1291 = vmul.f32 %v1290, %v1289
        %v1292 = vmul.f32 0.5, %v1291
        %v1293 = vsub.f32 1.5, %v1292
        %v1294 = vmul.f32 %v1289, %v1293
        %v1295 = vmul.f32 %v1159, %v1294
        %vm1296 = vcmp.eq.f32.partialorder %v1159, inf
        %v1297 = vsel %vm1296, %v1159, %v1295
        %vm1298 = vcmp.eq.f32.partialorder %v1159, 0.0
        %v1299 = vand.u32 %v1159, 2147483648
        %v1300 = vsel %vm1298, %v1299, %v1297
        %v1301 = vrsqrt.pop %v1162
        %v1302 = vmul.f32 %v1301, %v1162
        %v1303 = vmul.f32 %v1302, %v1301
        %v1304 = vmul.f32 0.5, %v1303
        %v1305 = vsub.f32 1.5, %v1304
        %v1306 = vmul.f32 %v1301, %v1305
        %v1307 = vmul.f32 %v1162, %v1306
        %vm1308 = vcmp.eq.f32.partialorder %v1162, inf
        %v1309 = vsel %vm1308, %v1162, %v1307
        %vm1310 = vcmp.eq.f32.partialorder %v1162, 0.0
        %v1311 = vand.u32 %v1162, 2147483648
        %v1312 = vsel %vm1310, %v1311, %v1309
        %v1313 = vrsqrt.pop %v1166
        %v1314 = vmul.f32 %v1313, %v1166
        %v1315 = vmul.f32 %v1314, %v1313
        %v1316 = vmul.f32 0.5, %v1315
        %v1317 = vsub.f32 1.5, %v1316
        %v1318 = vmul.f32 %v1313, %v1317
        %v1319 = vmul.f32 %v1166, %v1318
        %vm1320 = vcmp.eq.f32.partialorder %v1166, inf
        %v1321 = vsel %vm1320, %v1166, %v1319
        %vm1322 = vcmp.eq.f32.partialorder %v1166, 0.0
        %v1323 = vand.u32 %v1166, 2147483648
        %v1324 = vsel %vm1322, %v1323, %v1321
        %v1325 = vadd.f32 %v1300, 1.0
        %v1326 = vadd.f32 %v1312, 1.0
        %v1327 = vadd.f32 %v1324, 1.0
        %v1328 = vrcp.pop %v1325
        %v1329 = vmul.f32 %v1325, %v1328
        %v1330 = vsub.f32 1.0, %v1329
        %v1331 = vmul.f32 %v1328, %v1330
        %v1332 = vadd.f32 %v1328, %v1331
        %vm1333 = vweird.f32 %v1325
        %vm1334 = vweird.f32 %v1328
        %vm1335 = vmor %vm1333, %vm1334
        %v1336 = vsel %vm1335, %v1328, %v1332
        %v1337 = vand.u32 2147483647, %v1325
        %vm1338 = vcmp.eq.f32.partialorder %v1337, 8.507059e+37
        %v1339 = vand.u32 %v1325, 2147483648
        %v1340 = vor.u32 1.1754944e-38, %v1339
        %v1341 = vsel %vm1338, %v1340, %v1336
        %v1342 = vmul.f32 %v1150, %v1341
        %v1343 = vrcp.pop %v1326
        %v1344 = vmul.f32 %v1326, %v1343
        %v1345 = vsub.f32 1.0, %v1344
        %v1346 = vmul.f32 %v1343, %v1345
        %v1347 = vadd.f32 %v1343, %v1346
        %vm1348 = vweird.f32 %v1326
        %vm1349 = vweird.f32 %v1343
        %vm1350 = vmor %vm1348, %vm1349
        %v1351 = vsel %vm1350, %v1343, %v1347
        %v1352 = vand.u32 2147483647, %v1326
        %vm1353 = vcmp.eq.f32.partialorder %v1352, 8.507059e+37
        %v1354 = vand.u32 %v1326, 2147483648
        %v1355 = vor.u32 1.1754944e-38, %v1354
        %v1356 = vsel %vm1353, %v1355, %v1351
        %v1357 = vmul.f32 %v1151, %v1356
        %v1358 = vrcp.pop %v1327
        %v1359 = vmul.f32 %v1327, %v1358
        %v1360 = vsub.f32 1.0, %v1359
        %v1361 = vmul.f32 %v1358, %v1360
        %v1362 = vadd.f32 %v1358, %v1361
        %vm1363 = vweird.f32 %v1327
        %vm1364 = vweird.f32 %v1358
        %vm1365 = vmor %vm1363, %vm1364
        %v1366 = vsel %vm1365, %v1358, %v1362
        %v1367 = vand.u32 2147483647, %v1327
        %vm1368 = vcmp.eq.f32.partialorder %v1367, 8.507059e+37
        %v1369 = vand.u32 %v1327, 2147483648
        %v1370 = vor.u32 1.1754944e-38, %v1369
        %v1371 = vsel %vm1368, %v1370, %v1366
        %v1372 = vmul.f32 %v1152, %v1371
        %v1373 = vmul.f32 %v1286, %v1286
        %v1374 = vmul.f32 %v1287, %v1287
        %v1375 = vmul.f32 %v1288, %v1288
        %v1376 = vsel %vm1156, %v1373, 0.0
        %1377 = vadd.xlane.f32.xlu0 %v1376
        %v1378 = vpop.xlane.xlu0 %1377
        %v1379 = vsel %vm1156, %v1374, 0.0
        %1380 = vadd.xlane.f32.xlu0 %v1379
        %v1381 = vpop.xlane.xlu0 %1380
        %v1382 = vsel %vm1163, %v1375, 0.0
        %1383 = vadd.xlane.f32.xlu0 %v1382
        %v1384 = vpop.xlane.xlu0 %1383
        %v1385 = vrsqrt.pop %v1378
        %v1386 = vmul.f32 %v1385, %v1378
        %v1387 = vmul.f32 %v1386, %v1385
        %v1388 = vmul.f32 0.5, %v1387
        %v1389 = vsub.f32 1.5, %v1388
        %v1390 = vmul.f32 %v1385, %v1389
        %v1391 = vmul.f32 %v1378, %v1390
        %vm1392 = vcmp.eq.f32.partialorder %v1378, inf
        %v1393 = vsel %vm1392, %v1378, %v1391
        %vm1394 = vcmp.eq.f32.partialorder %v1378, 0.0
        %v1395 = vand.u32 %v1378, 2147483648
        %v1396 = vsel %vm1394, %v1395, %v1393
        %v1397 = vrsqrt.pop %v1381
        %v1398 = vmul.f32 %v1397, %v1381
        %v1399 = vmul.f32 %v1398, %v1397
        %v1400 = vmul.f32 0.5, %v1399
        %v1401 = vsub.f32 1.5, %v1400
        %v1402 = vmul.f32 %v1397, %v1401
        %v1403 = vmul.f32 %v1381, %v1402
        %vm1404 = vcmp.eq.f32.partialorder %v1381, inf
        %v1405 = vsel %vm1404, %v1381, %v1403
        %vm1406 = vcmp.eq.f32.partialorder %v1381, 0.0
        %v1407 = vand.u32 %v1381, 2147483648
        %v1408 = vsel %vm1406, %v1407, %v1405
        %v1409 = vrsqrt.pop %v1384
        %v1410 = vmul.f32 %v1409, %v1384
        %v1411 = vmul.f32 %v1410, %v1409
        %v1412 = vmul.f32 0.5, %v1411
        %v1413 = vsub.f32 1.5, %v1412
        %v1414 = vmul.f32 %v1409, %v1413
        %v1415 = vmul.f32 %v1384, %v1414
        %vm1416 = vcmp.eq.f32.partialorder %v1384, inf
        %v1417 = vsel %vm1416, %v1384, %v1415
        %vm1418 = vcmp.eq.f32.partialorder %v1384, 0.0
        %v1419 = vand.u32 %v1384, 2147483648
        %v1420 = vsel %vm1418, %v1419, %v1417
        %v1421 = vadd.f32 %v1396, 1.0
        %v1422 = vadd.f32 %v1408, 1.0
        %v1423 = vadd.f32 %v1420, 1.0
        %v1424 = vrcp.pop %v1421
        %v1425 = vmul.f32 %v1421, %v1424
        %v1426 = vsub.f32 1.0, %v1425
        %v1427 = vmul.f32 %v1424, %v1426
        %v1428 = vadd.f32 %v1424, %v1427
        %vm1429 = vweird.f32 %v1421
        %vm1430 = vweird.f32 %v1424
        %vm1431 = vmor %vm1429, %vm1430
        %v1432 = vsel %vm1431, %v1424, %v1428
        %v1433 = vand.u32 2147483647, %v1421
        %vm1434 = vcmp.eq.f32.partialorder %v1433, 8.507059e+37
        %v1435 = vand.u32 %v1421, 2147483648
        %v1436 = vor.u32 1.1754944e-38, %v1435
        %v1437 = vsel %vm1434, %v1436, %v1432
        %v1438 = vmul.f32 %v1286, %v1437
        %v1439 = vrcp.pop %v1422
        %v1440 = vmul.f32 %v1422, %v1439
        %v1441 = vsub.f32 1.0, %v1440
        %v1442 = vmul.f32 %v1439, %v1441
        %v1443 = vadd.f32 %v1439, %v1442
        %vm1444 = vweird.f32 %v1422
        %vm1445 = vweird.f32 %v1439
        %vm1446 = vmor %vm1444, %vm1445
        %v1447 = vsel %vm1446, %v1439, %v1443
        %v1448 = vand.u32 2147483647, %v1422
        %vm1449 = vcmp.eq.f32.partialorder %v1448, 8.507059e+37
        %v1450 = vand.u32 %v1422, 2147483648
        %v1451 = vor.u32 1.1754944e-38, %v1450
        %v1452 = vsel %vm1449, %v1451, %v1447
        %v1453 = vmul.f32 %v1287, %v1452
        %v1454 = vrcp.pop %v1423
        %v1455 = vmul.f32 %v1423, %v1454
        %v1456 = vsub.f32 1.0, %v1455
        %v1457 = vmul.f32 %v1454, %v1456
        %v1458 = vadd.f32 %v1454, %v1457
        %vm1459 = vweird.f32 %v1423
        %vm1460 = vweird.f32 %v1454
        %vm1461 = vmor %vm1459, %vm1460
        %v1462 = vsel %vm1461, %v1454, %v1458
        %v1463 = vand.u32 2147483647, %v1423
        %vm1464 = vcmp.eq.f32.partialorder %v1463, 8.507059e+37
        %v1465 = vand.u32 %v1423, 2147483648
        %v1466 = vor.u32 1.1754944e-38, %v1465
        %v1467 = vsel %vm1464, %v1466, %v1462
        %v1468 = vmul.f32 %v1288, %v1467
        %1472 = vrot.lane.b32.xlu0 %v1438, 127
        %v1473 = vpop.permute.xlu0 %1472
        %1474 = vrot.lane.b32.xlu0 %v1453, 127
        %v1475 = vpop.permute.xlu0 %1474
        %1476 = vrot.lane.b32.xlu0 %v1468, 127
        %v1477 = vpop.permute.xlu0 %1476
        %v1481 = vmul.f32 %v1342, %v1473
        %v1482 = vmul.f32 %v1357, %v1475
        %v1483 = vmul.f32 %v1372, %v1477
        %1484 = vrot.lane.b32.xlu0 %v1438, 1
        %v1485 = vpop.permute.xlu0 %1484
        %1486 = vrot.lane.b32.xlu0 %v1453, 1
        %v1487 = vpop.permute.xlu0 %1486
        %1488 = vrot.lane.b32.xlu0 %v1468, 1
        %v1489 = vpop.permute.xlu0 %1488
        %v1493 = vmul.f32 %v1342, %v1485
        %v1494 = vmul.f32 %v1357, %v1487
        %v1495 = vmul.f32 %v1372, %v1489
        %1499 = vrot.lane.b32.xlu0 %v1493, 127
        %v1500 = vpop.permute.xlu0 %1499
        %1501 = vrot.lane.b32.xlu0 %v1494, 127
        %v1502 = vpop.permute.xlu0 %1501
        %1503 = vrot.lane.b32.xlu0 %v1495, 127
        %v1504 = vpop.permute.xlu0 %1503
        %v1508 = vsub.f32 %v1481, %v1500
        %v1509 = vsub.f32 %v1482, %v1502
        %v1510 = vsub.f32 %v1483, %v1504
        %1511 = vrot.lane.b32.xlu0 %v1438, 2
        %v1512 = vpop.permute.xlu0 %1511
        %1513 = vrot.lane.b32.xlu0 %v1453, 2
        %v1514 = vpop.permute.xlu0 %1513
        %1515 = vrot.lane.b32.xlu0 %v1468, 2
        %v1516 = vpop.permute.xlu0 %1515
        %v1520 = vmul.f32 %v1342, %v1512
        %v1521 = vmul.f32 %v1357, %v1514
        %v1522 = vmul.f32 %v1372, %v1516
        %1523 = vrot.lane.b32.xlu0 %v1438, 126
        %v1524 = vpop.permute.xlu0 %1523
        %1525 = vrot.lane.b32.xlu0 %v1453, 126
        %v1526 = vpop.permute.xlu0 %1525
        %1527 = vrot.lane.b32.xlu0 %v1468, 126
        %v1528 = vpop.permute.xlu0 %1527
        %v1532 = vmul.f32 %v1342, %v1524
        %v1533 = vmul.f32 %v1357, %v1526
        %v1534 = vmul.f32 %v1372, %v1528
        %1538 = vrot.lane.b32.xlu0 %v1532, 2
        %v1539 = vpop.permute.xlu0 %1538
        %1540 = vrot.lane.b32.xlu0 %v1533, 2
        %v1541 = vpop.permute.xlu0 %1540
        %1542 = vrot.lane.b32.xlu0 %v1534, 2
        %v1543 = vpop.permute.xlu0 %1542
        %v1547 = vsub.f32 %v1520, %v1539
        %v1548 = vsub.f32 %v1521, %v1541
        %v1549 = vsub.f32 %v1522, %v1543
        %1553 = vrot.lane.b32.xlu0 %v1508, 127
        %v1554 = vpop.permute.xlu0 %1553
        %1555 = vrot.lane.b32.xlu0 %v1509, 127
        %v1556 = vpop.permute.xlu0 %1555
        %1557 = vrot.lane.b32.xlu0 %v1510, 127
        %v1558 = vpop.permute.xlu0 %1557
        %1565 = vrot.lane.b32.xlu0 %v1547, 127
        %v1566 = vpop.permute.xlu0 %1565
        %1567 = vrot.lane.b32.xlu0 %v1548, 127
        %v1568 = vpop.permute.xlu0 %1567
        %1569 = vrot.lane.b32.xlu0 %v1549, 127
        %v1570 = vpop.permute.xlu0 %1569
        %1574 = vrot.lane.b32.xlu0 %v1508, 2
        %v1575 = vpop.permute.xlu0 %1574
        %1576 = vrot.lane.b32.xlu0 %v1509, 2
        %v1577 = vpop.permute.xlu0 %1576
        %1578 = vrot.lane.b32.xlu0 %v1510, 2
        %v1579 = vpop.permute.xlu0 %1578
        %v1583 = vsel %vm1281, %v1554, %v1566
        %v1584 = vsel %vm1281, %v1556, %v1568
        %v1585 = vsel %vm1281, %v1558, %v1570
        %v1586 = vsel %vm1285, %v1583, %v1575
        %v1587 = vsel %vm1285, %v1584, %v1577
        %v1588 = vsel %vm1285, %v1585, %v1579
        %v1589 = vmul.f32 %v1342, %v1107
        %v1590 = vmul.f32 %v1357, %v1110
        %v1591 = vmul.f32 %v1372, %v1113
        %v1592 = vsel %vm1156, %v1589, 0.0
        %1593 = vadd.xlane.f32.xlu0 %v1592
        %v1594 = vpop.xlane.xlu0 %1593
        %v1595 = vsel %vm1156, %v1590, 0.0
        %1596 = vadd.xlane.f32.xlu0 %v1595
        %v1597 = vpop.xlane.xlu0 %1596
        %v1598 = vsel %vm1163, %v1591, 0.0
        %1599 = vadd.xlane.f32.xlu0 %v1598
        %v1600 = vpop.xlane.xlu0 %1599
        %v1601 = vmul.f32 %v1438, %v1107
        %v1602 = vmul.f32 %v1453, %v1110
        %v1603 = vmul.f32 %v1468, %v1113
        %v1604 = vsel %vm1156, %v1601, 0.0
        %1605 = vadd.xlane.f32.xlu0 %v1604
        %v1606 = vpop.xlane.xlu0 %1605
        %v1607 = vsel %vm1156, %v1602, 0.0
        %1608 = vadd.xlane.f32.xlu0 %v1607
        %v1609 = vpop.xlane.xlu0 %1608
        %v1610 = vsel %vm1163, %v1603, 0.0
        %1611 = vadd.xlane.f32.xlu0 %v1610
        %v1612 = vpop.xlane.xlu0 %1611
        %v1613 = vmul.f32 %v1586, %v1107
        %v1614 = vmul.f32 %v1587, %v1110
        %v1615 = vmul.f32 %v1588, %v1113
        %v1616 = vsel %vm1156, %v1613, 0.0
        %1617 = vadd.xlane.f32.xlu0 %v1616
        %v1618 = vpop.xlane.xlu0 %1617
        %v1619 = vsel %vm1156, %v1614, 0.0
        %1620 = vadd.xlane.f32.xlu0 %v1619
        %v1621 = vpop.xlane.xlu0 %1620
        %v1622 = vsel %vm1163, %v1615, 0.0
        %1623 = vadd.xlane.f32.xlu0 %v1622
        %v1624 = vpop.xlane.xlu0 %1623
        %v1625 = vsel %vm1281, %v1594, %v1606
        %v1626 = vsel %vm1281, %v1597, %v1609
        %v1627 = vsel %vm1281, %v1600, %v1612
        %v1628 = vsel %vm1285, %v1625, %v1618
        %v1629 = vsel %vm1285, %v1626, %v1621
        %v1630 = vsel %vm1285, %v1627, %v1624
        %v1631 = vmul.f32 %v1342, %v1142
        %v1632 = vmul.f32 %v1357, %v1145
        %v1633 = vmul.f32 %v1372, %v1148
        %v1634 = vsel %vm1156, %v1631, 0.0
        %1635 = vadd.xlane.f32.xlu0 %v1634
        %v1636 = vpop.xlane.xlu0 %1635
        %v1637 = vsel %vm1156, %v1632, 0.0
        %1638 = vadd.xlane.f32.xlu0 %v1637
        %v1639 = vpop.xlane.xlu0 %1638
        %v1640 = vsel %vm1163, %v1633, 0.0
        %1641 = vadd.xlane.f32.xlu0 %v1640
        %v1642 = vpop.xlane.xlu0 %1641
        %v1643 = vmul.f32 %v1438, %v1142
        %v1644 = vmul.f32 %v1453, %v1145
        %v1645 = vmul.f32 %v1468, %v1148
        %v1646 = vsel %vm1156, %v1643, 0.0
        %1647 = vadd.xlane.f32.xlu0 %v1646
        %v1648 = vpop.xlane.xlu0 %1647
        %v1649 = vsel %vm1156, %v1644, 0.0
        %1650 = vadd.xlane.f32.xlu0 %v1649
        %v1651 = vpop.xlane.xlu0 %1650
        %v1652 = vsel %vm1163, %v1645, 0.0
        %1653 = vadd.xlane.f32.xlu0 %v1652
        %v1654 = vpop.xlane.xlu0 %1653
        %v1655 = vmul.f32 %v1586, %v1142
        %v1656 = vmul.f32 %v1587, %v1145
        %v1657 = vmul.f32 %v1588, %v1148
        %v1658 = vsel %vm1156, %v1655, 0.0
        %1659 = vadd.xlane.f32.xlu0 %v1658
        %v1660 = vpop.xlane.xlu0 %1659
        %v1661 = vsel %vm1156, %v1656, 0.0
        %1662 = vadd.xlane.f32.xlu0 %v1661
        %v1663 = vpop.xlane.xlu0 %1662
        %v1664 = vsel %vm1163, %v1657, 0.0
        %1665 = vadd.xlane.f32.xlu0 %v1664
        %v1666 = vpop.xlane.xlu0 %1665
        %v1667 = vsel %vm1281, %v1636, %v1648
        %v1668 = vsel %vm1281, %v1639, %v1651
        %v1669 = vsel %vm1281, %v1642, %v1654
        %v1670 = vsel %vm1285, %v1667, %v1660
        %v1671 = vsel %vm1285, %v1668, %v1663
        %v1672 = vsel %vm1285, %v1669, %v1666
        %v1673 = vmul.f32 %v1628, %v1628
        %v1674 = vmul.f32 %v1629, %v1629
        %v1675 = vmul.f32 %v1630, %v1630
        %v1676 = vsel %vm1156, %v1673, 0.0
        %1677 = vadd.xlane.f32.xlu0 %v1676
        %v1678 = vpop.xlane.xlu0 %1677
        %v1679 = vsel %vm1156, %v1674, 0.0
        %1680 = vadd.xlane.f32.xlu0 %v1679
        %v1681 = vpop.xlane.xlu0 %1680
        %v1682 = vsel %vm1163, %v1675, 0.0
        %1683 = vadd.xlane.f32.xlu0 %v1682
        %v1684 = vpop.xlane.xlu0 %1683
        %v1685 = vrsqrt.pop %v1678
        %v1686 = vmul.f32 %v1685, %v1678
        %v1687 = vmul.f32 %v1686, %v1685
        %v1688 = vmul.f32 0.5, %v1687
        %v1689 = vsub.f32 1.5, %v1688
        %v1690 = vmul.f32 %v1685, %v1689
        %v1691 = vmul.f32 %v1678, %v1690
        %vm1692 = vcmp.eq.f32.partialorder %v1678, inf
        %v1693 = vsel %vm1692, %v1678, %v1691
        %vm1694 = vcmp.eq.f32.partialorder %v1678, 0.0
        %v1695 = vand.u32 %v1678, 2147483648
        %v1696 = vsel %vm1694, %v1695, %v1693
        %v1697 = vrsqrt.pop %v1681
        %v1698 = vmul.f32 %v1697, %v1681
        %v1699 = vmul.f32 %v1698, %v1697
        %v1700 = vmul.f32 0.5, %v1699
        %v1701 = vsub.f32 1.5, %v1700
        %v1702 = vmul.f32 %v1697, %v1701
        %v1703 = vmul.f32 %v1681, %v1702
        %vm1704 = vcmp.eq.f32.partialorder %v1681, inf
        %v1705 = vsel %vm1704, %v1681, %v1703
        %vm1706 = vcmp.eq.f32.partialorder %v1681, 0.0
        %v1707 = vand.u32 %v1681, 2147483648
        %v1708 = vsel %vm1706, %v1707, %v1705
        %v1709 = vrsqrt.pop %v1684
        %v1710 = vmul.f32 %v1709, %v1684
        %v1711 = vmul.f32 %v1710, %v1709
        %v1712 = vmul.f32 0.5, %v1711
        %v1713 = vsub.f32 1.5, %v1712
        %v1714 = vmul.f32 %v1709, %v1713
        %v1715 = vmul.f32 %v1684, %v1714
        %vm1716 = vcmp.eq.f32.partialorder %v1684, inf
        %v1717 = vsel %vm1716, %v1684, %v1715
        %vm1718 = vcmp.eq.f32.partialorder %v1684, 0.0
        %v1719 = vand.u32 %v1684, 2147483648
        %v1720 = vsel %vm1718, %v1719, %v1717
        %v1721 = vadd.f32 %v1696, 1e-05
        %v1722 = vadd.f32 %v1708, 1e-05
        %v1723 = vadd.f32 %v1720, 1e-05
        %v1724 = vmul.f32 %v1670, %v1670
        %v1725 = vmul.f32 %v1671, %v1671
        %v1726 = vmul.f32 %v1672, %v1672
        %v1727 = vsel %vm1156, %v1724, 0.0
        %1728 = vadd.xlane.f32.xlu0 %v1727
        %v1729 = vpop.xlane.xlu0 %1728
        %v1730 = vsel %vm1156, %v1725, 0.0
        %1731 = vadd.xlane.f32.xlu0 %v1730
        %v1732 = vpop.xlane.xlu0 %1731
        %v1733 = vsel %vm1163, %v1726, 0.0
        %1734 = vadd.xlane.f32.xlu0 %v1733
        %v1735 = vpop.xlane.xlu0 %1734
        %v1736 = vrsqrt.pop %v1729
        %v1737 = vmul.f32 %v1736, %v1729
        %v1738 = vmul.f32 %v1737, %v1736
        %v1739 = vmul.f32 0.5, %v1738
        %v1740 = vsub.f32 1.5, %v1739
        %v1741 = vmul.f32 %v1736, %v1740
        %v1742 = vmul.f32 %v1729, %v1741
        %vm1743 = vcmp.eq.f32.partialorder %v1729, inf
        %v1744 = vsel %vm1743, %v1729, %v1742
        %vm1745 = vcmp.eq.f32.partialorder %v1729, 0.0
        %v1746 = vand.u32 %v1729, 2147483648
        %v1747 = vsel %vm1745, %v1746, %v1744
        %v1748 = vrsqrt.pop %v1732
        %v1749 = vmul.f32 %v1748, %v1732
        %v1750 = vmul.f32 %v1749, %v1748
        %v1751 = vmul.f32 0.5, %v1750
        %v1752 = vsub.f32 1.5, %v1751
        %v1753 = vmul.f32 %v1748, %v1752
        %v1754 = vmul.f32 %v1732, %v1753
        %vm1755 = vcmp.eq.f32.partialorder %v1732, inf
        %v1756 = vsel %vm1755, %v1732, %v1754
        %vm1757 = vcmp.eq.f32.partialorder %v1732, 0.0
        %v1758 = vand.u32 %v1732, 2147483648
        %v1759 = vsel %vm1757, %v1758, %v1756
        %v1760 = vrsqrt.pop %v1735
        %v1761 = vmul.f32 %v1760, %v1735
        %v1762 = vmul.f32 %v1761, %v1760
        %v1763 = vmul.f32 0.5, %v1762
        %v1764 = vsub.f32 1.5, %v1763
        %v1765 = vmul.f32 %v1760, %v1764
        %v1766 = vmul.f32 %v1735, %v1765
        %vm1767 = vcmp.eq.f32.partialorder %v1735, inf
        %v1768 = vsel %vm1767, %v1735, %v1766
        %vm1769 = vcmp.eq.f32.partialorder %v1735, 0.0
        %v1770 = vand.u32 %v1735, 2147483648
        %v1771 = vsel %vm1769, %v1770, %v1768
        %v1772 = vadd.f32 %v1747, 1e-05
        %v1773 = vadd.f32 %v1759, 1e-05
        %v1774 = vadd.f32 %v1771, 1e-05
        %v1775 = vmul.f32 %v1628, %v1670
        %v1776 = vmul.f32 %v1629, %v1671
        %v1777 = vmul.f32 %v1630, %v1672
        %v1778 = vsel %vm1156, %v1775, 0.0
        %1779 = vadd.xlane.f32.xlu0 %v1778
        %v1780 = vpop.xlane.xlu0 %1779
        %v1781 = vsel %vm1156, %v1776, 0.0
        %1782 = vadd.xlane.f32.xlu0 %v1781
        %v1783 = vpop.xlane.xlu0 %1782
        %v1784 = vsel %vm1163, %v1777, 0.0
        %1785 = vadd.xlane.f32.xlu0 %v1784
        %v1786 = vpop.xlane.xlu0 %1785
        %v1787 = vmul.f32 %v1721, %v1772
        %v1788 = vmul.f32 %v1722, %v1773
        %v1789 = vmul.f32 %v1723, %v1774
        %v1790 = vrcp.pop %v1787
        %v1791 = vmul.f32 %v1787, %v1790
        %v1792 = vsub.f32 1.0, %v1791
        %v1793 = vmul.f32 %v1790, %v1792
        %v1794 = vadd.f32 %v1790, %v1793
        %vm1795 = vweird.f32 %v1787
        %vm1796 = vweird.f32 %v1790
        %vm1797 = vmor %vm1795, %vm1796
        %v1798 = vsel %vm1797, %v1790, %v1794
        %v1799 = vand.u32 2147483647, %v1787
        %vm1800 = vcmp.eq.f32.partialorder %v1799, 8.507059e+37
        %v1801 = vand.u32 %v1787, 2147483648
        %v1802 = vor.u32 1.1754944e-38, %v1801
        %v1803 = vsel %vm1800, %v1802, %v1798
        %v1804 = vmul.f32 %v1780, %v1803
        %v1805 = vrcp.pop %v1788
        %v1806 = vmul.f32 %v1788, %v1805
        %v1807 = vsub.f32 1.0, %v1806
        %v1808 = vmul.f32 %v1805, %v1807
        %v1809 = vadd.f32 %v1805, %v1808
        %vm1810 = vweird.f32 %v1788
        %vm1811 = vweird.f32 %v1805
        %vm1812 = vmor %vm1810, %vm1811
        %v1813 = vsel %vm1812, %v1805, %v1809
        %v1814 = vand.u32 2147483647, %v1788
        %vm1815 = vcmp.eq.f32.partialorder %v1814, 8.507059e+37
        %v1816 = vand.u32 %v1788, 2147483648
        %v1817 = vor.u32 1.1754944e-38, %v1816
        %v1818 = vsel %vm1815, %v1817, %v1813
        %v1819 = vmul.f32 %v1783, %v1818
        %v1820 = vrcp.pop %v1789
        %v1821 = vmul.f32 %v1789, %v1820
        %v1822 = vsub.f32 1.0, %v1821
        %v1823 = vmul.f32 %v1820, %v1822
        %v1824 = vadd.f32 %v1820, %v1823
        %vm1825 = vweird.f32 %v1789
        %vm1826 = vweird.f32 %v1820
        %vm1827 = vmor %vm1825, %vm1826
        %v1828 = vsel %vm1827, %v1820, %v1824
        %v1829 = vand.u32 2147483647, %v1789
        %vm1830 = vcmp.eq.f32.partialorder %v1829, 8.507059e+37
        %v1831 = vand.u32 %v1789, 2147483648
        %v1832 = vor.u32 1.1754944e-38, %v1831
        %v1833 = vsel %vm1830, %v1832, %v1828
        %v1834 = vmul.f32 %v1786, %v1833
        %v1835 = vmax.f32 %v1804, -1.0
        %v1836 = vmax.f32 %v1819, -1.0
        %v1837 = vmax.f32 %v1834, -1.0
        %v1838 = vmin.f32 %v1835, 1.0
        %v1839 = vmin.f32 %v1836, 1.0
        %v1840 = vmin.f32 %v1837, 1.0
        %v1841 = vmul.f32 %v1838, %v1838
        %v1842 = vmul.f32 %v1839, %v1839
        %v1843 = vmul.f32 %v1840, %v1840
        %v1844 = vsub.f32 1.0, %v1841
        %v1845 = vsub.f32 1.0, %v1842
        %v1846 = vsub.f32 1.0, %v1843
        %v1847 = vmax.f32 %v1844, 0.0
        %v1848 = vmax.f32 %v1845, 0.0
        %v1849 = vmax.f32 %v1846, 0.0
        %v1850 = vrsqrt.pop %v1847
        %v1851 = vmul.f32 %v1850, %v1847
        %v1852 = vmul.f32 %v1851, %v1850
        %v1853 = vmul.f32 0.5, %v1852
        %v1854 = vsub.f32 1.5, %v1853
        %v1855 = vmul.f32 %v1850, %v1854
        %v1856 = vmul.f32 %v1847, %v1855
        %vm1857 = vcmp.eq.f32.partialorder %v1847, inf
        %v1858 = vsel %vm1857, %v1847, %v1856
        %vm1859 = vcmp.eq.f32.partialorder %v1847, 0.0
        %v1860 = vand.u32 %v1847, 2147483648
        %v1861 = vsel %vm1859, %v1860, %v1858
        %v1862 = vrsqrt.pop %v1848
        %v1863 = vmul.f32 %v1862, %v1848
        %v1864 = vmul.f32 %v1863, %v1862
        %v1865 = vmul.f32 0.5, %v1864
        %v1866 = vsub.f32 1.5, %v1865
        %v1867 = vmul.f32 %v1862, %v1866
        %v1868 = vmul.f32 %v1848, %v1867
        %vm1869 = vcmp.eq.f32.partialorder %v1848, inf
        %v1870 = vsel %vm1869, %v1848, %v1868
        %vm1871 = vcmp.eq.f32.partialorder %v1848, 0.0
        %v1872 = vand.u32 %v1848, 2147483648
        %v1873 = vsel %vm1871, %v1872, %v1870
        %v1874 = vrsqrt.pop %v1849
        %v1875 = vmul.f32 %v1874, %v1849
        %v1876 = vmul.f32 %v1875, %v1874
        %v1877 = vmul.f32 0.5, %v1876
        %v1878 = vsub.f32 1.5, %v1877
        %v1879 = vmul.f32 %v1874, %v1878
        %v1880 = vmul.f32 %v1849, %v1879
        %vm1881 = vcmp.eq.f32.partialorder %v1849, inf
        %v1882 = vsel %vm1881, %v1849, %v1880
        %vm1883 = vcmp.eq.f32.partialorder %v1849, 0.0
        %v1884 = vand.u32 %v1849, 2147483648
        %v1885 = vsel %vm1883, %v1884, %v1882
        %1889 = vrot.lane.b32.xlu0 %v1628, 2
        %v1890 = vpop.permute.xlu0 %1889
        %1891 = vrot.lane.b32.xlu0 %v1629, 2
        %v1892 = vpop.permute.xlu0 %1891
        %1893 = vrot.lane.b32.xlu0 %v1630, 2
        %v1894 = vpop.permute.xlu0 %1893
        %1901 = vrot.lane.b32.xlu0 %v1670, 5
        %v1902 = vpop.permute.xlu0 %1901
        %1903 = vrot.lane.b32.xlu0 %v1671, 5
        %v1904 = vpop.permute.xlu0 %1903
        %1905 = vrot.lane.b32.xlu0 %v1672, 5
        %v1906 = vpop.permute.xlu0 %1905
        %v1910 = vsel %vm1281, %v1861, %v1838
        %v1911 = vsel %vm1281, %v1873, %v1839
        %v1912 = vsel %vm1281, %v1885, %v1840
        %v1913 = vsel %vm1285, %v1910, %v1890
        %v1914 = vsel %vm1285, %v1911, %v1892
        %v1915 = vsel %vm1285, %v1912, %v1894
        %v1916 = vsel %vm1075, %v1913, %v1902
        %v1917 = vsel %vm1075, %v1914, %v1904
        %v1918 = vsel %vm1075, %v1915, %v1906
        %v1919 = vld [vmem:[%s9] sm:$0xff]
        %v1920 = vld [vmem:[%s10] sm:$0x1]
        %v1922 = vperm.slane %v1920, 0
        %vm1924 = vcmask 64512
        %v1926 = vsel %vm1924, %v1916, 0
        %v1929 = vsel %vm1924, %v1917, 0
        %v1932 = vsel %vm1924, %v1918, 0
        %1934 = vmatpush.msra.mxu0 0.0
        %1935 = vmatpush.msra.mxu0 0.0
        %1936 = vmatpush.msra.mxu0 0.0
        %1937 = vmatpush.msra.mxu0 0.0
        %1938 = vmatpush.msra.mxu0 0.0
        %1939 = vmatpush.msra.mxu0 0.0
        %1940 = vmatpush.msra.mxu0 0.0
        %1941 = vmatpush.msra.mxu0 0.0
        %1942 = vmatpush.msra.mxu0 0.0
        %1943 = vmatpush.msra.mxu0 0.0
        %1944 = vmatpush.msra.mxu0 0.0
        %1945 = vmatpush.msra.mxu0 0.0
        %1946 = vmatpush.msra.mxu0 0.0
        %1947 = vmatpush.msra.mxu0 0.0
        %1948 = vmatpush.msra.mxu0 0.0
        %1949 = vmatpush.msra.mxu0 %v1919
        %1950 = vmatmul.f32.gmra.mxu0 %v1926
        %v1951 = vpop.f32.mrf.mxu0
        %v1952 = vadd.f32 %v1922, %v1951
        %1953 = vmatmul.f32.gmra.mxu0 %v1929
        %v1954 = vpop.f32.mrf.mxu0
        %v1955 = vadd.f32 %v1922, %v1954
        %1956 = vmatmul.f32.gmra.mxu0 %v1932
        %v1957 = vpop.f32.mrf.mxu0
        %v1958 = vadd.f32 %v1922, %v1957
        %1959 = vdwg.mxu0
        %v1960 = vxor.u32 %v1952, 2147483648
        %v1961 = vxor.u32 %v1955, 2147483648
        %v1962 = vxor.u32 %v1958, 2147483648
        %v1963 = vmul.f32 %v1960, 1.442695
        %v1964 = vpow.pop %v1963
        %v1965 = vmul.f32 %v1961, 1.442695
        %v1966 = vpow.pop %v1965
        %v1967 = vmul.f32 %v1962, 1.442695
        %v1968 = vpow.pop %v1967
        %v1969 = vadd.f32 %v1964, 1.0
        %v1970 = vadd.f32 %v1966, 1.0
        %v1971 = vadd.f32 %v1968, 1.0
        %v1972 = vrcp.pop %v1969
        %v1973 = vmul.f32 %v1969, %v1972
        %v1974 = vsub.f32 1.0, %v1973
        %v1975 = vmul.f32 %v1972, %v1974
        %v1976 = vadd.f32 %v1972, %v1975
        %vm1977 = vweird.f32 %v1969
        %vm1978 = vweird.f32 %v1972
        %vm1979 = vmor %vm1977, %vm1978
        %v1980 = vsel %vm1979, %v1972, %v1976
        %v1981 = vand.u32 2147483647, %v1969
        %vm1982 = vcmp.eq.f32.partialorder %v1981, 8.507059e+37
        %v1983 = vand.u32 %v1969, 2147483648
        %v1984 = vor.u32 1.1754944e-38, %v1983
        %v1985 = vsel %vm1982, %v1984, %v1980
        %v1986 = vmul.f32 1.0, %v1985
        %v1987 = vrcp.pop %v1970
        %v1988 = vmul.f32 %v1970, %v1987
        %v1989 = vsub.f32 1.0, %v1988
        %v1990 = vmul.f32 %v1987, %v1989
        %v1991 = vadd.f32 %v1987, %v1990
        %vm1992 = vweird.f32 %v1970
        %vm1993 = vweird.f32 %v1987
        %vm1994 = vmor %vm1992, %vm1993
        %v1995 = vsel %vm1994, %v1987, %v1991
        %v1996 = vand.u32 2147483647, %v1970
        %vm1997 = vcmp.eq.f32.partialorder %v1996, 8.507059e+37
        %v1998 = vand.u32 %v1970, 2147483648
        %v1999 = vor.u32 1.1754944e-38, %v1998
        %v2000 = vsel %vm1997, %v1999, %v1995
        %v2001 = vmul.f32 1.0, %v2000
        %v2002 = vrcp.pop %v1971
        %v2003 = vmul.f32 %v1971, %v2002
        %v2004 = vsub.f32 1.0, %v2003
        %v2005 = vmul.f32 %v2002, %v2004
        %v2006 = vadd.f32 %v2002, %v2005
        %vm2007 = vweird.f32 %v1971
        %vm2008 = vweird.f32 %v2002
        %vm2009 = vmor %vm2007, %vm2008
        %v2010 = vsel %vm2009, %v2002, %v2006
        %v2011 = vand.u32 2147483647, %v1971
        %vm2012 = vcmp.eq.f32.partialorder %v2011, 8.507059e+37
        %v2013 = vand.u32 %v1971, 2147483648
        %v2014 = vor.u32 1.1754944e-38, %v2013
        %v2015 = vsel %vm2012, %v2014, %v2010
        %v2016 = vmul.f32 1.0, %v2015
        %v2017 = vmul.f32 %v1952, %v1986
        %v2018 = vmul.f32 %v1955, %v2001
        %v2019 = vmul.f32 %v1958, %v2016
        %v2020 = vld [vmem:[%s11] sm:$0xff]
        %v2021 = vld [vmem:[%s11 + $0x8] sm:$0xff]
        %v2022 = vld [vmem:[%s12] sm:$0x1]
        %v2024 = vperm.slane %v2022, 0
        %vm2026 = vcmask 130048
        %v2028 = vsel %vm2026, %v2017, 0
        %v2031 = vsel %vm2026, %v2018, 0
        %v2034 = vsel %vm2026, %v2019, 0
        %2036 = vmatpush.msra.mxu0 0.0
        %2037 = vmatpush.msra.mxu0 0.0
        %2038 = vmatpush.msra.mxu0 0.0
        %2039 = vmatpush.msra.mxu0 0.0
        %2040 = vmatpush.msra.mxu0 0.0
        %2041 = vmatpush.msra.mxu0 0.0
        %2042 = vmatpush.msra.mxu0 0.0
        %2043 = vmatpush.msra.mxu0 0.0
        %2044 = vmatpush.msra.mxu0 0.0
        %2045 = vmatpush.msra.mxu0 0.0
        %2046 = vmatpush.msra.mxu0 0.0
        %2047 = vmatpush.msra.mxu0 0.0
        %2048 = vmatpush.msra.mxu0 0.0
        %2049 = vmatpush.msra.mxu0 0.0
        %2050 = vmatpush.msra.mxu0 %v2021
        %2051 = vmatpush.msra.mxu0 %v2020
        %2052 = vmatmul.f32.gmra.mxu0 %v2028
        %v2053 = vpop.f32.mrf.mxu0
        %v2054 = vadd.f32 %v2024, %v2053
        %2055 = vmatmul.f32.gmra.mxu0 %v2031
        %v2056 = vpop.f32.mrf.mxu0
        %v2057 = vadd.f32 %v2024, %v2056
        %2058 = vmatmul.f32.gmra.mxu0 %v2034
        %v2059 = vpop.f32.mrf.mxu0
        %v2060 = vadd.f32 %v2024, %v2059
        %2061 = vdwg.mxu0
        %v2062 = vxor.u32 %v2054, 2147483648
        %v2063 = vxor.u32 %v2057, 2147483648
        %v2064 = vxor.u32 %v2060, 2147483648
        %v2065 = vmul.f32 %v2062, 1.442695
        %v2066 = vpow.pop %v2065
        %v2067 = vmul.f32 %v2063, 1.442695
        %v2068 = vpow.pop %v2067
        %v2069 = vmul.f32 %v2064, 1.442695
        %v2070 = vpow.pop %v2069
        %v2071 = vadd.f32 %v2066, 1.0
        %v2072 = vadd.f32 %v2068, 1.0
        %v2073 = vadd.f32 %v2070, 1.0
        %v2074 = vrcp.pop %v2071
        %v2075 = vmul.f32 %v2071, %v2074
        %v2076 = vsub.f32 1.0, %v2075
        %v2077 = vmul.f32 %v2074, %v2076
        %v2078 = vadd.f32 %v2074, %v2077
        %vm2079 = vweird.f32 %v2071
        %vm2080 = vweird.f32 %v2074
        %vm2081 = vmor %vm2079, %vm2080
        %v2082 = vsel %vm2081, %v2074, %v2078
        %v2083 = vand.u32 2147483647, %v2071
        %vm2084 = vcmp.eq.f32.partialorder %v2083, 8.507059e+37
        %v2085 = vand.u32 %v2071, 2147483648
        %v2086 = vor.u32 1.1754944e-38, %v2085
        %v2087 = vsel %vm2084, %v2086, %v2082
        %v2088 = vmul.f32 1.0, %v2087
        %v2089 = vrcp.pop %v2072
        %v2090 = vmul.f32 %v2072, %v2089
        %v2091 = vsub.f32 1.0, %v2090
        %v2092 = vmul.f32 %v2089, %v2091
        %v2093 = vadd.f32 %v2089, %v2092
        %vm2094 = vweird.f32 %v2072
        %vm2095 = vweird.f32 %v2089
        %vm2096 = vmor %vm2094, %vm2095
        %v2097 = vsel %vm2096, %v2089, %v2093
        %v2098 = vand.u32 2147483647, %v2072
        %vm2099 = vcmp.eq.f32.partialorder %v2098, 8.507059e+37
        %v2100 = vand.u32 %v2072, 2147483648
        %v2101 = vor.u32 1.1754944e-38, %v2100
        %v2102 = vsel %vm2099, %v2101, %v2097
        %v2103 = vmul.f32 1.0, %v2102
        %v2104 = vrcp.pop %v2073
        %v2105 = vmul.f32 %v2073, %v2104
        %v2106 = vsub.f32 1.0, %v2105
        %v2107 = vmul.f32 %v2104, %v2106
        %v2108 = vadd.f32 %v2104, %v2107
        %vm2109 = vweird.f32 %v2073
        %vm2110 = vweird.f32 %v2104
        %vm2111 = vmor %vm2109, %vm2110
        %v2112 = vsel %vm2111, %v2104, %v2108
        %v2113 = vand.u32 2147483647, %v2073
        %vm2114 = vcmp.eq.f32.partialorder %v2113, 8.507059e+37
        %v2115 = vand.u32 %v2073, 2147483648
        %v2116 = vor.u32 1.1754944e-38, %v2115
        %v2117 = vsel %vm2114, %v2116, %v2112
        %v2118 = vmul.f32 1.0, %v2117
        %v2119 = vmul.f32 %v2054, %v2088
        %v2120 = vmul.f32 %v2057, %v2103
        %v2121 = vmul.f32 %v2060, %v2118
        loop: start=0, step=1, limit=4
        $region137: #{tpu_custom_call.1} parent=131 // loop_pre_header
          _
        $region138: #{tpu_custom_call.1} parent=131 // loop_header
          %s2123 = sphi 0, %s2127
          %p2124 = scmp.ge.s32.totalorder %s2123, 4
          %v2128 = vphi %v1071, %v3697
          %v2129 = vphi %v1074, %v3390
        $region139: #{tpu_custom_call.1} parent=131 // loop_header_branch
          %2126 = sbr.rel (%p2124) target = $region143
        $region140: #{tpu_custom_call.1} parent=131 // loop_body
          %v2130 = vpack.c.bf16 %v2128, %v2128
          %v2132 = vsel %vm1075, %v1011, 0
          %v2135 = vsel %vm1075, %v1012, 0
          %vm2137 = vcmask 1042432
          %v2138 = vsel %vm1057, 4294967295, 65535
          %v2139 = vsel %vm2137, %v2138, 0
          %v2141 = vand.u32 %v2130, %v2139
          %2143 = vmatpush.bf16.msra.mxu0 0
          %2144 = vmatpush.bf16.msra.mxu0 0
          %2145 = vmatpush.bf16.msra.mxu0 0
          %2146 = vmatpush.bf16.msra.mxu0 0
          %2147 = vmatpush.bf16.msra.mxu0 0
          %2148 = vmatpush.bf16.msra.mxu0 0
          %2149 = vmatpush.bf16.msra.mxu0 0
          %2150 = vmatpush.bf16.msra.mxu0 %v2141
          %2151 = vmatmul.bf16.gmra.mxu0 %v2132
          %v2152 = vpop.f32.mrf.mxu0
          %v2153 = vadd.f32 0.0, %v2152
          %v2154 = vpop.f32.mrf.mxu0
          %v2155 = vadd.f32 0.0, %v2154
          %2156 = vmatmul.bf16.gmra.mxu0 %v2135
          %v2157 = vpop.f32.mrf.mxu0
          %v2158 = vadd.f32 0.0, %v2157
          %v2159 = vpop.f32.mrf.mxu0
          %2160 = vdwg.mxu0
          %v2162 = vsel %vm1075, %v1013, 0
          %v2165 = vsel %vm1075, %v1014, 0
          %2167 = vmatpush.bf16.msra.mxu0 0
          %2168 = vmatpush.bf16.msra.mxu0 0
          %2169 = vmatpush.bf16.msra.mxu0 0
          %2170 = vmatpush.bf16.msra.mxu0 0
          %2171 = vmatpush.bf16.msra.mxu0 0
          %2172 = vmatpush.bf16.msra.mxu0 0
          %2173 = vmatpush.bf16.msra.mxu0 0
          %2174 = vmatpush.bf16.msra.mxu0 %v2141
          %2175 = vmatmul.bf16.gmra.mxu0 %v2162
          %v2176 = vpop.f32.mrf.mxu0
          %v2177 = vadd.f32 0.0, %v2176
          %v2178 = vpop.f32.mrf.mxu0
          %v2179 = vadd.f32 0.0, %v2178
          %2180 = vmatmul.bf16.gmra.mxu0 %v2165
          %v2181 = vpop.f32.mrf.mxu0
          %v2182 = vadd.f32 0.0, %v2181
          %v2183 = vpop.f32.mrf.mxu0
          %2184 = vdwg.mxu0
          %v2186 = vsel %vm1085, %v2129, 0
          %2188 = vmatpush.msra.mxu0 0.0
          %2189 = vmatpush.msra.mxu0 0.0
          %2190 = vmatpush.msra.mxu0 0.0
          %2191 = vmatpush.msra.mxu0 0.0
          %2192 = vmatpush.msra.mxu0 0.0
          %2193 = vmatpush.msra.mxu0 0.0
          %2194 = vmatpush.msra.mxu0 0.0
          %2195 = vmatpush.msra.mxu0 0.0
          %2196 = vmatpush.msra.mxu0 0.0
          %2197 = vmatpush.msra.mxu0 0.0
          %2198 = vmatpush.msra.mxu0 0.0
          %2199 = vmatpush.msra.mxu0 0.0
          %2200 = vmatpush.msra.mxu0 0.0
          %2201 = vmatpush.msra.mxu0 0.0
          %2202 = vmatpush.msra.mxu0 0.0
          %2203 = vmatpush.msra.mxu0 %v2186
          %2204 = vmatmul.f32.gmra.mxu0 %v1077
          %v2205 = vpop.f32.mrf.mxu0
          %v2206 = vadd.f32 0.0, %v2205
          %2207 = vmatmul.f32.gmra.mxu0 %v1080
          %v2208 = vpop.f32.mrf.mxu0
          %v2209 = vadd.f32 0.0, %v2208
          %2210 = vmatmul.f32.gmra.mxu0 %v1083
          %v2211 = vpop.f32.mrf.mxu0
          %v2212 = vadd.f32 0.0, %v2211
          %2213 = vdwg.mxu0
          %2214 = vmatpush.msra.mxu0 0.0
          %2215 = vmatpush.msra.mxu0 0.0
          %2216 = vmatpush.msra.mxu0 0.0
          %2217 = vmatpush.msra.mxu0 0.0
          %2218 = vmatpush.msra.mxu0 0.0
          %2219 = vmatpush.msra.mxu0 0.0
          %2220 = vmatpush.msra.mxu0 0.0
          %2221 = vmatpush.msra.mxu0 0.0
          %2222 = vmatpush.msra.mxu0 0.0
          %2223 = vmatpush.msra.mxu0 0.0
          %2224 = vmatpush.msra.mxu0 0.0
          %2225 = vmatpush.msra.mxu0 0.0
          %2226 = vmatpush.msra.mxu0 0.0
          %2227 = vmatpush.msra.mxu0 0.0
          %2228 = vmatpush.msra.mxu0 0.0
          %2229 = vmatpush.msra.mxu0 %v2186
          %2230 = vmatmul.f32.gmra.mxu0 %v1116
          %v2231 = vpop.f32.mrf.mxu0
          %v2232 = vadd.f32 0.0, %v2231
          %2233 = vmatmul.f32.gmra.mxu0 %v1119
          %v2234 = vpop.f32.mrf.mxu0
          %v2235 = vadd.f32 0.0, %v2234
          %2236 = vmatmul.f32.gmra.mxu0 %v1122
          %v2237 = vpop.f32.mrf.mxu0
          %v2238 = vadd.f32 0.0, %v2237
          %2239 = vdwg.mxu0
          %v2240 = vsub.f32 %v2206, %v2232
          %v2241 = vsub.f32 %v2209, %v2235
          %v2242 = vsub.f32 %v2212, %v2238
          %v2243 = vmul.f32 %v2240, %v2240
          %v2244 = vmul.f32 %v2241, %v2241
          %v2245 = vmul.f32 %v2242, %v2242
          %v2246 = vsel %vm1156, %v2243, 0.0
          %2247 = vadd.xlane.f32.xlu0 %v2246
          %v2248 = vpop.xlane.xlu0 %2247
          %v2249 = vsel %vm1156, %v2244, 0.0
          %2250 = vadd.xlane.f32.xlu0 %v2249
          %v2251 = vpop.xlane.xlu0 %2250
          %v2252 = vsel %vm1163, %v2245, 0.0
          %2253 = vadd.xlane.f32.xlu0 %v2252
          %v2254 = vpop.xlane.xlu0 %2253
          %2258 = vrot.lane.b32.xlu0 %v2232, 127
          %v2259 = vpop.permute.xlu0 %2258
          %2260 = vrot.lane.b32.xlu0 %v2235, 127
          %v2261 = vpop.permute.xlu0 %2260
          %2262 = vrot.lane.b32.xlu0 %v2238, 127
          %v2263 = vpop.permute.xlu0 %2262
          %v2267 = vmul.f32 %v2206, %v2259
          %v2268 = vmul.f32 %v2209, %v2261
          %v2269 = vmul.f32 %v2212, %v2263
          %2270 = vrot.lane.b32.xlu0 %v2232, 1
          %v2271 = vpop.permute.xlu0 %2270
          %2272 = vrot.lane.b32.xlu0 %v2235, 1
          %v2273 = vpop.permute.xlu0 %2272
          %2274 = vrot.lane.b32.xlu0 %v2238, 1
          %v2275 = vpop.permute.xlu0 %2274
          %v2279 = vmul.f32 %v2206, %v2271
          %v2280 = vmul.f32 %v2209, %v2273
          %v2281 = vmul.f32 %v2212, %v2275
          %2285 = vrot.lane.b32.xlu0 %v2279, 127
          %v2286 = vpop.permute.xlu0 %2285
          %2287 = vrot.lane.b32.xlu0 %v2280, 127
          %v2288 = vpop.permute.xlu0 %2287
          %2289 = vrot.lane.b32.xlu0 %v2281, 127
          %v2290 = vpop.permute.xlu0 %2289
          %v2294 = vsub.f32 %v2267, %v2286
          %v2295 = vsub.f32 %v2268, %v2288
          %v2296 = vsub.f32 %v2269, %v2290
          %2297 = vrot.lane.b32.xlu0 %v2232, 2
          %v2298 = vpop.permute.xlu0 %2297
          %2299 = vrot.lane.b32.xlu0 %v2235, 2
          %v2300 = vpop.permute.xlu0 %2299
          %2301 = vrot.lane.b32.xlu0 %v2238, 2
          %v2302 = vpop.permute.xlu0 %2301
          %v2306 = vmul.f32 %v2206, %v2298
          %v2307 = vmul.f32 %v2209, %v2300
          %v2308 = vmul.f32 %v2212, %v2302
          %2309 = vrot.lane.b32.xlu0 %v2232, 126
          %v2310 = vpop.permute.xlu0 %2309
          %2311 = vrot.lane.b32.xlu0 %v2235, 126
          %v2312 = vpop.permute.xlu0 %2311
          %2313 = vrot.lane.b32.xlu0 %v2238, 126
          %v2314 = vpop.permute.xlu0 %2313
          %v2318 = vmul.f32 %v2206, %v2310
          %v2319 = vmul.f32 %v2209, %v2312
          %v2320 = vmul.f32 %v2212, %v2314
          %2324 = vrot.lane.b32.xlu0 %v2318, 2
          %v2325 = vpop.permute.xlu0 %2324
          %2326 = vrot.lane.b32.xlu0 %v2319, 2
          %v2327 = vpop.permute.xlu0 %2326
          %2328 = vrot.lane.b32.xlu0 %v2320, 2
          %v2329 = vpop.permute.xlu0 %2328
          %v2333 = vsub.f32 %v2306, %v2325
          %v2334 = vsub.f32 %v2307, %v2327
          %v2335 = vsub.f32 %v2308, %v2329
          %2339 = vrot.lane.b32.xlu0 %v2294, 127
          %v2340 = vpop.permute.xlu0 %2339
          %2341 = vrot.lane.b32.xlu0 %v2295, 127
          %v2342 = vpop.permute.xlu0 %2341
          %2343 = vrot.lane.b32.xlu0 %v2296, 127
          %v2344 = vpop.permute.xlu0 %2343
          %2351 = vrot.lane.b32.xlu0 %v2333, 127
          %v2352 = vpop.permute.xlu0 %2351
          %2353 = vrot.lane.b32.xlu0 %v2334, 127
          %v2354 = vpop.permute.xlu0 %2353
          %2355 = vrot.lane.b32.xlu0 %v2335, 127
          %v2356 = vpop.permute.xlu0 %2355
          %2360 = vrot.lane.b32.xlu0 %v2294, 2
          %v2361 = vpop.permute.xlu0 %2360
          %2362 = vrot.lane.b32.xlu0 %v2295, 2
          %v2363 = vpop.permute.xlu0 %2362
          %2364 = vrot.lane.b32.xlu0 %v2296, 2
          %v2365 = vpop.permute.xlu0 %2364
          %v2369 = vsel %vm1281, %v2340, %v2352
          %v2370 = vsel %vm1281, %v2342, %v2354
          %v2371 = vsel %vm1281, %v2344, %v2356
          %v2372 = vsel %vm1285, %v2369, %v2361
          %v2373 = vsel %vm1285, %v2370, %v2363
          %v2374 = vsel %vm1285, %v2371, %v2365
          %v2375 = vadd.f32 %v2248, 1e-08
          %v2376 = vadd.f32 %v2251, 1e-08
          %v2377 = vadd.f32 %v2254, 1e-08
          %v2378 = vrsqrt.pop %v2375
          %v2379 = vmul.f32 %v2378, %v2375
          %v2380 = vmul.f32 %v2379, %v2378
          %v2381 = vmul.f32 0.5, %v2380
          %v2382 = vsub.f32 1.5, %v2381
          %v2383 = vmul.f32 %v2378, %v2382
          %v2384 = vmul.f32 %v2375, %v2383
          %vm2385 = vcmp.eq.f32.partialorder %v2375, inf
          %v2386 = vsel %vm2385, %v2375, %v2384
          %vm2387 = vcmp.eq.f32.partialorder %v2375, 0.0
          %v2388 = vand.u32 %v2375, 2147483648
          %v2389 = vsel %vm2387, %v2388, %v2386
          %v2390 = vrsqrt.pop %v2376
          %v2391 = vmul.f32 %v2390, %v2376
          %v2392 = vmul.f32 %v2391, %v2390
          %v2393 = vmul.f32 0.5, %v2392
          %v2394 = vsub.f32 1.5, %v2393
          %v2395 = vmul.f32 %v2390, %v2394
          %v2396 = vmul.f32 %v2376, %v2395
          %vm2397 = vcmp.eq.f32.partialorder %v2376, inf
          %v2398 = vsel %vm2397, %v2376, %v2396
          %vm2399 = vcmp.eq.f32.partialorder %v2376, 0.0
          %v2400 = vand.u32 %v2376, 2147483648
          %v2401 = vsel %vm2399, %v2400, %v2398
          %v2402 = vrsqrt.pop %v2377
          %v2403 = vmul.f32 %v2402, %v2377
          %v2404 = vmul.f32 %v2403, %v2402
          %v2405 = vmul.f32 0.5, %v2404
          %v2406 = vsub.f32 1.5, %v2405
          %v2407 = vmul.f32 %v2402, %v2406
          %v2408 = vmul.f32 %v2377, %v2407
          %vm2409 = vcmp.eq.f32.partialorder %v2377, inf
          %v2410 = vsel %vm2409, %v2377, %v2408
          %vm2411 = vcmp.eq.f32.partialorder %v2377, 0.0
          %v2412 = vand.u32 %v2377, 2147483648
          %v2413 = vsel %vm2411, %v2412, %v2410
          %v2414 = vadd.f32 %v2389, 1.0
          %v2415 = vadd.f32 %v2401, 1.0
          %v2416 = vadd.f32 %v2413, 1.0
          %v2417 = vrcp.pop %v2414
          %v2418 = vrcp.pop %v2415
          %v2419 = vrcp.pop %v2416
          %v2420 = vmul.f32 %v2240, %v2417
          %v2421 = vmul.f32 %v2241, %v2418
          %v2422 = vmul.f32 %v2242, %v2419
          %v2423 = vmul.f32 %v2372, %v2372
          %v2424 = vmul.f32 %v2373, %v2373
          %v2425 = vmul.f32 %v2374, %v2374
          %v2426 = vsel %vm1156, %v2423, 0.0
          %2427 = vadd.xlane.f32.xlu0 %v2426
          %v2428 = vpop.xlane.xlu0 %2427
          %v2429 = vsel %vm1156, %v2424, 0.0
          %2430 = vadd.xlane.f32.xlu0 %v2429
          %v2431 = vpop.xlane.xlu0 %2430
          %v2432 = vsel %vm1163, %v2425, 0.0
          %2433 = vadd.xlane.f32.xlu0 %v2432
          %v2434 = vpop.xlane.xlu0 %2433
          %v2435 = vadd.f32 %v2428, 1e-08
          %v2436 = vadd.f32 %v2431, 1e-08
          %v2437 = vadd.f32 %v2434, 1e-08
          %v2438 = vrsqrt.pop %v2435
          %v2439 = vmul.f32 %v2438, %v2435
          %v2440 = vmul.f32 %v2439, %v2438
          %v2441 = vmul.f32 0.5, %v2440
          %v2442 = vsub.f32 1.5, %v2441
          %v2443 = vmul.f32 %v2438, %v2442
          %v2444 = vmul.f32 %v2435, %v2443
          %vm2445 = vcmp.eq.f32.partialorder %v2435, inf
          %v2446 = vsel %vm2445, %v2435, %v2444
          %vm2447 = vcmp.eq.f32.partialorder %v2435, 0.0
          %v2448 = vand.u32 %v2435, 2147483648
          %v2449 = vsel %vm2447, %v2448, %v2446
          %v2450 = vrsqrt.pop %v2436
          %v2451 = vmul.f32 %v2450, %v2436
          %v2452 = vmul.f32 %v2451, %v2450
          %v2453 = vmul.f32 0.5, %v2452
          %v2454 = vsub.f32 1.5, %v2453
          %v2455 = vmul.f32 %v2450, %v2454
          %v2456 = vmul.f32 %v2436, %v2455
          %vm2457 = vcmp.eq.f32.partialorder %v2436, inf
          %v2458 = vsel %vm2457, %v2436, %v2456
          %vm2459 = vcmp.eq.f32.partialorder %v2436, 0.0
          %v2460 = vand.u32 %v2436, 2147483648
          %v2461 = vsel %vm2459, %v2460, %v2458
          %v2462 = vrsqrt.pop %v2437
          %v2463 = vmul.f32 %v2462, %v2437
          %v2464 = vmul.f32 %v2463, %v2462
          %v2465 = vmul.f32 0.5, %v2464
          %v2466 = vsub.f32 1.5, %v2465
          %v2467 = vmul.f32 %v2462, %v2466
          %v2468 = vmul.f32 %v2437, %v2467
          %vm2469 = vcmp.eq.f32.partialorder %v2437, inf
          %v2470 = vsel %vm2469, %v2437, %v2468
          %vm2471 = vcmp.eq.f32.partialorder %v2437, 0.0
          %v2472 = vand.u32 %v2437, 2147483648
          %v2473 = vsel %vm2471, %v2472, %v2470
          %v2474 = vadd.f32 %v2449, 1.0
          %v2475 = vadd.f32 %v2461, 1.0
          %v2476 = vadd.f32 %v2473, 1.0
          %v2477 = vrcp.pop %v2474
          %v2478 = vrcp.pop %v2475
          %v2479 = vrcp.pop %v2476
          %v2480 = vmul.f32 %v2372, %v2477
          %v2481 = vmul.f32 %v2373, %v2478
          %v2482 = vmul.f32 %v2374, %v2479
          %2486 = vrot.lane.b32.xlu0 %v2480, 127
          %v2487 = vpop.permute.xlu0 %2486
          %2488 = vrot.lane.b32.xlu0 %v2481, 127
          %v2489 = vpop.permute.xlu0 %2488
          %2490 = vrot.lane.b32.xlu0 %v2482, 127
          %v2491 = vpop.permute.xlu0 %2490
          %v2495 = vmul.f32 %v2420, %v2487
          %v2496 = vmul.f32 %v2421, %v2489
          %v2497 = vmul.f32 %v2422, %v2491
          %2498 = vrot.lane.b32.xlu0 %v2480, 1
          %v2499 = vpop.permute.xlu0 %2498
          %2500 = vrot.lane.b32.xlu0 %v2481, 1
          %v2501 = vpop.permute.xlu0 %2500
          %2502 = vrot.lane.b32.xlu0 %v2482, 1
          %v2503 = vpop.permute.xlu0 %2502
          %v2507 = vmul.f32 %v2420, %v2499
          %v2508 = vmul.f32 %v2421, %v2501
          %v2509 = vmul.f32 %v2422, %v2503
          %2513 = vrot.lane.b32.xlu0 %v2507, 127
          %v2514 = vpop.permute.xlu0 %2513
          %2515 = vrot.lane.b32.xlu0 %v2508, 127
          %v2516 = vpop.permute.xlu0 %2515
          %2517 = vrot.lane.b32.xlu0 %v2509, 127
          %v2518 = vpop.permute.xlu0 %2517
          %v2522 = vsub.f32 %v2495, %v2514
          %v2523 = vsub.f32 %v2496, %v2516
          %v2524 = vsub.f32 %v2497, %v2518
          %2525 = vrot.lane.b32.xlu0 %v2480, 2
          %v2526 = vpop.permute.xlu0 %2525
          %2527 = vrot.lane.b32.xlu0 %v2481, 2
          %v2528 = vpop.permute.xlu0 %2527
          %2529 = vrot.lane.b32.xlu0 %v2482, 2
          %v2530 = vpop.permute.xlu0 %2529
          %v2534 = vmul.f32 %v2420, %v2526
          %v2535 = vmul.f32 %v2421, %v2528
          %v2536 = vmul.f32 %v2422, %v2530
          %2537 = vrot.lane.b32.xlu0 %v2480, 126
          %v2538 = vpop.permute.xlu0 %2537
          %2539 = vrot.lane.b32.xlu0 %v2481, 126
          %v2540 = vpop.permute.xlu0 %2539
          %2541 = vrot.lane.b32.xlu0 %v2482, 126
          %v2542 = vpop.permute.xlu0 %2541
          %v2546 = vmul.f32 %v2420, %v2538
          %v2547 = vmul.f32 %v2421, %v2540
          %v2548 = vmul.f32 %v2422, %v2542
          %2552 = vrot.lane.b32.xlu0 %v2546, 2
          %v2553 = vpop.permute.xlu0 %2552
          %2554 = vrot.lane.b32.xlu0 %v2547, 2
          %v2555 = vpop.permute.xlu0 %2554
          %2556 = vrot.lane.b32.xlu0 %v2548, 2
          %v2557 = vpop.permute.xlu0 %2556
          %v2561 = vsub.f32 %v2534, %v2553
          %v2562 = vsub.f32 %v2535, %v2555
          %v2563 = vsub.f32 %v2536, %v2557
          %2567 = vrot.lane.b32.xlu0 %v2522, 127
          %v2568 = vpop.permute.xlu0 %2567
          %2569 = vrot.lane.b32.xlu0 %v2523, 127
          %v2570 = vpop.permute.xlu0 %2569
          %2571 = vrot.lane.b32.xlu0 %v2524, 127
          %v2572 = vpop.permute.xlu0 %2571
          %2579 = vrot.lane.b32.xlu0 %v2561, 127
          %v2580 = vpop.permute.xlu0 %2579
          %2581 = vrot.lane.b32.xlu0 %v2562, 127
          %v2582 = vpop.permute.xlu0 %2581
          %2583 = vrot.lane.b32.xlu0 %v2563, 127
          %v2584 = vpop.permute.xlu0 %2583
          %2588 = vrot.lane.b32.xlu0 %v2522, 2
          %v2589 = vpop.permute.xlu0 %2588
          %2590 = vrot.lane.b32.xlu0 %v2523, 2
          %v2591 = vpop.permute.xlu0 %2590
          %2592 = vrot.lane.b32.xlu0 %v2524, 2
          %v2593 = vpop.permute.xlu0 %2592
          %v2597 = vsel %vm1281, %v2568, %v2580
          %v2598 = vsel %vm1281, %v2570, %v2582
          %v2599 = vsel %vm1281, %v2572, %v2584
          %v2600 = vsel %vm1285, %v2597, %v2589
          %v2601 = vsel %vm1285, %v2598, %v2591
          %v2602 = vsel %vm1285, %v2599, %v2593
          %2606 = vrot.lane.b32.xlu0 %v2119, 1
          %v2607 = vpop.permute.xlu0 %2606
          %2608 = vrot.lane.b32.xlu0 %v2120, 1
          %v2609 = vpop.permute.xlu0 %2608
          %2610 = vrot.lane.b32.xlu0 %v2121, 1
          %v2611 = vpop.permute.xlu0 %2610
          %v2615 = vsel %vm1281, %v2248, %v2607
          %v2616 = vsel %vm1281, %v2251, %v2609
          %v2617 = vsel %vm1281, %v2254, %v2611
          %s2618 = smul.u32 %s2123, 35
          %s2619 = smul.addr %s2618, 4
          %s2620 = scalar_lea.vmem %s13, %s2619
          %v2621 = vld [vmem:[%s2620] sm:$0xf]
          %v2622 = vld [vmem:[%s2620 + $0x4] sm:$0xf]
          %v2623 = vld [vmem:[%s2620 + $0x8] sm:$0xf]
          %v2624 = vld [vmem:[%s2620 + $0xc] sm:$0xf]
          %v2625 = vld [vmem:[%s2620 + $0x10] sm:$0xf]
          %v2626 = vld [vmem:[%s2620 + $0x14] sm:$0xf]
          %v2627 = vld [vmem:[%s2620 + $0x18] sm:$0xf]
          %v2628 = vld [vmem:[%s2620 + $0x1c] sm:$0xf]
          %v2629 = vld [vmem:[%s2620 + $0x20] sm:$0xf]
          %v2630 = vld [vmem:[%s2620 + $0x24] sm:$0xf]
          %v2631 = vld [vmem:[%s2620 + $0x28] sm:$0xf]
          %v2632 = vld [vmem:[%s2620 + $0x2c] sm:$0xf]
          %v2633 = vld [vmem:[%s2620 + $0x30] sm:$0xf]
          %v2634 = vld [vmem:[%s2620 + $0x34] sm:$0xf]
          %v2635 = vld [vmem:[%s2620 + $0x38] sm:$0xf]
          %v2636 = vld [vmem:[%s2620 + $0x3c] sm:$0xf]
          %v2637 = vld [vmem:[%s2620 + $0x40] sm:$0xf]
          %v2638 = vld [vmem:[%s2620 + $0x44] sm:$0xf]
          %v2639 = vld [vmem:[%s2620 + $0x48] sm:$0xf]
          %v2640 = vld [vmem:[%s2620 + $0x4c] sm:$0xf]
          %v2641 = vld [vmem:[%s2620 + $0x50] sm:$0xf]
          %v2642 = vld [vmem:[%s2620 + $0x54] sm:$0xf]
          %v2643 = vld [vmem:[%s2620 + $0x58] sm:$0xf]
          %v2644 = vld [vmem:[%s2620 + $0x5c] sm:$0xf]
          %v2645 = vld [vmem:[%s2620 + $0x60] sm:$0xf]
          %v2646 = vld [vmem:[%s2620 + $0x64] sm:$0xf]
          %v2647 = vld [vmem:[%s2620 + $0x68] sm:$0xf]
          %v2648 = vld [vmem:[%s2620 + $0x6c] sm:$0xf]
          %v2649 = vld [vmem:[%s2620 + $0x70] sm:$0xf]
          %v2650 = vld [vmem:[%s2620 + $0x74] sm:$0xf]
          %v2651 = vld [vmem:[%s2620 + $0x78] sm:$0xf]
          %v2652 = vld [vmem:[%s2620 + $0x7c] sm:$0xf]
          %v2653 = vld [vmem:[%s2620 + $0x80] sm:$0xf]
          %v2654 = vld [vmem:[%s2620 + $0x84] sm:$0xf]
          %v2655 = vld [vmem:[%s2620 + $0x88] sm:$0x1]
          %v2656 = vpack.c.bf16 %v2155, %v2153
          %v2657 = vpack.c.bf16 %v2179, %v2177
          %v2658 = vpack.c.bf16 %v2616, %v2615
          %v2659 = vpack.c.bf16 %v2158, %v2158
          %v2660 = vpack.c.bf16 %v2182, %v2182
          %v2661 = vpack.c.bf16 %v2617, %v2617
          %s2662 = scalar_lea.vmem %s14, %s2123
          %v2663 = vld [vmem:[%s2662] sm:$0x1]
          %v2665 = vperm.slane %v2663, 0
          %v2702 = vunpack.c.l.b16 %v2621
          %v2703 = vunpack.c.l.b16 %v2622
          %v2704 = vunpack.c.l.b16 %v2623
          %v2705 = vunpack.c.l.b16 %v2624
          %v2706 = vunpack.c.l.b16 %v2625
          %v2707 = vunpack.c.l.b16 %v2626
          %v2708 = vunpack.c.l.b16 %v2627
          %v2709 = vunpack.c.l.b16 %v2628
          %v2710 = vunpack.c.l.b16 %v2629
          %v2711 = vunpack.c.l.b16 %v2630
          %v2712 = vunpack.c.l.b16 %v2631
          %v2713 = vunpack.c.l.b16 %v2632
          %v2714 = vunpack.c.l.b16 %v2633
          %v2715 = vunpack.c.l.b16 %v2634
          %v2716 = vunpack.c.l.b16 %v2635
          %v2717 = vunpack.c.l.b16 %v2636
          %v2718 = vunpack.c.l.b16 %v2637
          %v2719 = vunpack.c.l.b16 %v2638
          %v2720 = vunpack.c.l.b16 %v2639
          %v2721 = vunpack.c.l.b16 %v2640
          %v2722 = vunpack.c.l.b16 %v2641
          %v2723 = vunpack.c.l.b16 %v2642
          %v2724 = vunpack.c.l.b16 %v2643
          %v2725 = vunpack.c.l.b16 %v2644
          %v2726 = vunpack.c.l.b16 %v2645
          %v2727 = vunpack.c.l.b16 %v2646
          %v2728 = vunpack.c.l.b16 %v2647
          %v2729 = vunpack.c.l.b16 %v2648
          %v2730 = vunpack.c.l.b16 %v2649
          %v2731 = vunpack.c.l.b16 %v2650
          %v2732 = vunpack.c.l.b16 %v2651
          %v2733 = vunpack.c.l.b16 %v2652
          %v2734 = vunpack.c.l.b16 %v2653
          %v2735 = vunpack.c.l.b16 %v2654
          %v2736 = vunpack.c.l.b16 %v2655
          %v2737 = vpack.c.b16 %v2703, %v2702
          %v2738 = vpack.c.b16 %v2705, %v2704
          %v2739 = vpack.c.b16 %v2707, %v2706
          %v2740 = vpack.c.b16 %v2709, %v2708
          %v2741 = vpack.c.b16 %v2711, %v2710
          %v2742 = vpack.c.b16 %v2713, %v2712
          %v2743 = vpack.c.b16 %v2715, %v2714
          %v2744 = vpack.c.b16 %v2717, %v2716
          %v2745 = vpack.c.b16 %v2719, %v2718
          %v2746 = vpack.c.b16 %v2721, %v2720
          %v2747 = vpack.c.b16 %v2723, %v2722
          %v2748 = vpack.c.b16 %v2725, %v2724
          %v2749 = vpack.c.b16 %v2727, %v2726
          %v2750 = vpack.c.b16 %v2729, %v2728
          %v2751 = vpack.c.b16 %v2731, %v2730
          %v2752 = vpack.c.b16 %v2733, %v2732
          %v2753 = vpack.c.b16 %v2735, %v2734
          %v2754 = vpack.c.b16 %v2736, %v2736
          %vm2772 = vcmask 138240
          %v2774 = vsel %vm2772, %v2658, 0
          %v2777 = vsel %vm2772, %v2661, 0
          %vm2779 = vcmask 1040384
          %v2780 = vsel 0, 4294967295, 65535
          %v2781 = vsel %vm2779, %v2780, 0
          %v2783 = vand.u32 %v2754, %v2781
          %2785 = vmatpush.bf16.msra.mxu0 %v2744
          %2786 = vmatpush.bf16.msra.mxu0 %v2743
          %2787 = vmatpush.bf16.msra.mxu0 %v2742
          %2788 = vmatpush.bf16.msra.mxu0 %v2741
          %2789 = vmatpush.bf16.msra.mxu0 %v2740
          %2790 = vmatpush.bf16.msra.mxu0 %v2739
          %2791 = vmatpush.bf16.msra.mxu0 %v2738
          %2792 = vmatpush.bf16.msra.mxu0 %v2737
          %2793 = vmatmul.bf16.gmra.mxu0 %v2656
          %v2794 = vpop.f32.mrf.mxu0
          %v2795 = vadd.f32 %v2665, %v2794
          %v2796 = vpop.f32.mrf.mxu0
          %v2797 = vadd.f32 %v2665, %v2796
          %2798 = vmatmul.bf16.gmra.mxu0 %v2659
          %v2799 = vpop.f32.mrf.mxu0
          %v2800 = vadd.f32 %v2665, %v2799
          %v2801 = vpop.f32.mrf.mxu0
          %2802 = vdwg.mxu0
          %2803 = vmatpush.bf16.msra.mxu0 %v2752
          %2804 = vmatpush.bf16.msra.mxu0 %v2751
          %2805 = vmatpush.bf16.msra.mxu0 %v2750
          %2806 = vmatpush.bf16.msra.mxu0 %v2749
          %2807 = vmatpush.bf16.msra.mxu0 %v2748
          %2808 = vmatpush.bf16.msra.mxu0 %v2747
          %2809 = vmatpush.bf16.msra.mxu0 %v2746
          %2810 = vmatpush.bf16.msra.mxu0 %v2745
          %2811 = vmatmul.bf16.gmra.mxu0 %v2657
          %v2812 = vpop.f32.mrf.mxu0
          %v2813 = vadd.f32 %v2795, %v2812
          %v2814 = vpop.f32.mrf.mxu0
          %v2815 = vadd.f32 %v2797, %v2814
          %2816 = vmatmul.bf16.gmra.mxu0 %v2660
          %v2817 = vpop.f32.mrf.mxu0
          %v2818 = vadd.f32 %v2800, %v2817
          %v2819 = vpop.f32.mrf.mxu0
          %2820 = vdwg.mxu0
          %2821 = vmatpush.bf16.msra.mxu0 0
          %2822 = vmatpush.bf16.msra.mxu0 0
          %2823 = vmatpush.bf16.msra.mxu0 0
          %2824 = vmatpush.bf16.msra.mxu0 0
          %2825 = vmatpush.bf16.msra.mxu0 0
          %2826 = vmatpush.bf16.msra.mxu0 0
          %2827 = vmatpush.bf16.msra.mxu0 %v2783
          %2828 = vmatpush.bf16.msra.mxu0 %v2753
          %2829 = vmatmul.bf16.gmra.mxu0 %v2774
          %v2830 = vpop.f32.mrf.mxu0
          %v2831 = vadd.f32 %v2813, %v2830
          %v2832 = vpop.f32.mrf.mxu0
          %v2833 = vadd.f32 %v2815, %v2832
          %2834 = vmatmul.bf16.gmra.mxu0 %v2777
          %v2835 = vpop.f32.mrf.mxu0
          %v2836 = vadd.f32 %v2818, %v2835
          %v2837 = vpop.f32.mrf.mxu0
          %2838 = vdwg.mxu0
          %v2839 = vxor.u32 %v2831, 2147483648
          %v2840 = vxor.u32 %v2833, 2147483648
          %v2841 = vxor.u32 %v2836, 2147483648
          %v2842 = vmul.f32 %v2839, 1.442695
          %v2843 = vpow.pop %v2842
          %v2844 = vmul.f32 %v2840, 1.442695
          %v2845 = vpow.pop %v2844
          %v2846 = vmul.f32 %v2841, 1.442695
          %v2847 = vpow.pop %v2846
          %v2848 = vadd.f32 %v2843, 1.0
          %v2849 = vadd.f32 %v2845, 1.0
          %v2850 = vadd.f32 %v2847, 1.0
          %v2851 = vrcp.pop %v2848
          %v2852 = vmul.f32 %v2848, %v2851
          %v2853 = vsub.f32 1.0, %v2852
          %v2854 = vmul.f32 %v2851, %v2853
          %v2855 = vadd.f32 %v2851, %v2854
          %vm2856 = vweird.f32 %v2848
          %vm2857 = vweird.f32 %v2851
          %vm2858 = vmor %vm2856, %vm2857
          %v2859 = vsel %vm2858, %v2851, %v2855
          %v2860 = vand.u32 2147483647, %v2848
          %vm2861 = vcmp.eq.f32.partialorder %v2860, 8.507059e+37
          %v2862 = vand.u32 %v2848, 2147483648
          %v2863 = vor.u32 1.1754944e-38, %v2862
          %v2864 = vsel %vm2861, %v2863, %v2859
          %v2865 = vmul.f32 1.0, %v2864
          %v2866 = vrcp.pop %v2849
          %v2867 = vmul.f32 %v2849, %v2866
          %v2868 = vsub.f32 1.0, %v2867
          %v2869 = vmul.f32 %v2866, %v2868
          %v2870 = vadd.f32 %v2866, %v2869
          %vm2871 = vweird.f32 %v2849
          %vm2872 = vweird.f32 %v2866
          %vm2873 = vmor %vm2871, %vm2872
          %v2874 = vsel %vm2873, %v2866, %v2870
          %v2875 = vand.u32 2147483647, %v2849
          %vm2876 = vcmp.eq.f32.partialorder %v2875, 8.507059e+37
          %v2877 = vand.u32 %v2849, 2147483648
          %v2878 = vor.u32 1.1754944e-38, %v2877
          %v2879 = vsel %vm2876, %v2878, %v2874
          %v2880 = vmul.f32 1.0, %v2879
          %v2881 = vrcp.pop %v2850
          %v2882 = vmul.f32 %v2850, %v2881
          %v2883 = vsub.f32 1.0, %v2882
          %v2884 = vmul.f32 %v2881, %v2883
          %v2885 = vadd.f32 %v2881, %v2884
          %vm2886 = vweird.f32 %v2850
          %vm2887 = vweird.f32 %v2881
          %vm2888 = vmor %vm2886, %vm2887
          %v2889 = vsel %vm2888, %v2881, %v2885
          %v2890 = vand.u32 2147483647, %v2850
          %vm2891 = vcmp.eq.f32.partialorder %v2890, 8.507059e+37
          %v2892 = vand.u32 %v2850, 2147483648
          %v2893 = vor.u32 1.1754944e-38, %v2892
          %v2894 = vsel %vm2891, %v2893, %v2889
          %v2895 = vmul.f32 1.0, %v2894
          %v2896 = vmul.f32 %v2831, %v2865
          %v2897 = vmul.f32 %v2833, %v2880
          %v2898 = vmul.f32 %v2836, %v2895
          %s2899 = smul.u32 %s2123, 16
          %s2900 = smul.addr %s2899, 4
          %s2901 = scalar_lea.vmem %s15, %s2900
          %v2902 = vld [vmem:[%s2901] sm:$0xf]
          %v2903 = vld [vmem:[%s2901 + $0x4] sm:$0xf]
          %v2904 = vld [vmem:[%s2901 + $0x8] sm:$0xf]
          %v2905 = vld [vmem:[%s2901 + $0xc] sm:$0xf]
          %v2906 = vld [vmem:[%s2901 + $0x10] sm:$0xf]
          %v2907 = vld [vmem:[%s2901 + $0x14] sm:$0xf]
          %v2908 = vld [vmem:[%s2901 + $0x18] sm:$0xf]
          %v2909 = vld [vmem:[%s2901 + $0x1c] sm:$0xf]
          %v2910 = vld [vmem:[%s2901 + $0x20] sm:$0xf]
          %v2911 = vld [vmem:[%s2901 + $0x24] sm:$0xf]
          %v2912 = vld [vmem:[%s2901 + $0x28] sm:$0xf]
          %v2913 = vld [vmem:[%s2901 + $0x2c] sm:$0xf]
          %v2914 = vld [vmem:[%s2901 + $0x30] sm:$0xf]
          %v2915 = vld [vmem:[%s2901 + $0x34] sm:$0xf]
          %v2916 = vld [vmem:[%s2901 + $0x38] sm:$0xf]
          %v2917 = vld [vmem:[%s2901 + $0x3c] sm:$0xf]
          %v2918 = vpack.c.bf16 %v2897, %v2896
          %v2919 = vpack.c.bf16 %v2898, %v2898
          %s2920 = scalar_lea.vmem %s16, %s2123
          %v2921 = vld [vmem:[%s2920] sm:$0x1]
          %v2923 = vperm.slane %v2921, 0
          %v2941 = vunpack.c.l.b16 %v2902
          %v2942 = vunpack.c.l.b16 %v2903
          %v2943 = vunpack.c.l.b16 %v2904
          %v2944 = vunpack.c.l.b16 %v2905
          %v2945 = vunpack.c.l.b16 %v2906
          %v2946 = vunpack.c.l.b16 %v2907
          %v2947 = vunpack.c.l.b16 %v2908
          %v2948 = vunpack.c.l.b16 %v2909
          %v2949 = vunpack.c.l.b16 %v2910
          %v2950 = vunpack.c.l.b16 %v2911
          %v2951 = vunpack.c.l.b16 %v2912
          %v2952 = vunpack.c.l.b16 %v2913
          %v2953 = vunpack.c.l.b16 %v2914
          %v2954 = vunpack.c.l.b16 %v2915
          %v2955 = vunpack.c.l.b16 %v2916
          %v2956 = vunpack.c.l.b16 %v2917
          %v2957 = vpack.c.b16 %v2942, %v2941
          %v2958 = vpack.c.b16 %v2944, %v2943
          %v2959 = vpack.c.b16 %v2946, %v2945
          %v2960 = vpack.c.b16 %v2948, %v2947
          %v2961 = vpack.c.b16 %v2950, %v2949
          %v2962 = vpack.c.b16 %v2952, %v2951
          %v2963 = vpack.c.b16 %v2954, %v2953
          %v2964 = vpack.c.b16 %v2956, %v2955
          %2973 = vmatpush.bf16.msra.mxu0 %v2964
          %2974 = vmatpush.bf16.msra.mxu0 %v2963
          %2975 = vmatpush.bf16.msra.mxu0 %v2962
          %2976 = vmatpush.bf16.msra.mxu0 %v2961
          %2977 = vmatpush.bf16.msra.mxu0 %v2960
          %2978 = vmatpush.bf16.msra.mxu0 %v2959
          %2979 = vmatpush.bf16.msra.mxu0 %v2958
          %2980 = vmatpush.bf16.msra.mxu0 %v2957
          %2981 = vmatmul.bf16.gmra.mxu0 %v2918
          %v2982 = vpop.f32.mrf.mxu0
          %v2983 = vadd.f32 %v2923, %v2982
          %v2984 = vpop.f32.mrf.mxu0
          %v2985 = vadd.f32 %v2923, %v2984
          %2986 = vmatmul.bf16.gmra.mxu0 %v2919
          %v2987 = vpop.f32.mrf.mxu0
          %v2988 = vadd.f32 %v2923, %v2987
          %v2989 = vpop.f32.mrf.mxu0
          %2990 = vdwg.mxu0
          %v2991 = vxor.u32 %v2983, 2147483648
          %v2992 = vxor.u32 %v2985, 2147483648
          %v2993 = vxor.u32 %v2988, 2147483648
          %v2994 = vmul.f32 %v2991, 1.442695
          %v2995 = vpow.pop %v2994
          %v2996 = vmul.f32 %v2992, 1.442695
          %v2997 = vpow.pop %v2996
          %v2998 = vmul.f32 %v2993, 1.442695
          %v2999 = vpow.pop %v2998
          %v3000 = vadd.f32 %v2995, 1.0
          %v3001 = vadd.f32 %v2997, 1.0
          %v3002 = vadd.f32 %v2999, 1.0
          %v3003 = vrcp.pop %v3000
          %v3004 = vmul.f32 %v3000, %v3003
          %v3005 = vsub.f32 1.0, %v3004
          %v3006 = vmul.f32 %v3003, %v3005
          %v3007 = vadd.f32 %v3003, %v3006
          %vm3008 = vweird.f32 %v3000
          %vm3009 = vweird.f32 %v3003
          %vm3010 = vmor %vm3008, %vm3009
          %v3011 = vsel %vm3010, %v3003, %v3007
          %v3012 = vand.u32 2147483647, %v3000
          %vm3013 = vcmp.eq.f32.partialorder %v3012, 8.507059e+37
          %v3014 = vand.u32 %v3000, 2147483648
          %v3015 = vor.u32 1.1754944e-38, %v3014
          %v3016 = vsel %vm3013, %v3015, %v3011
          %v3017 = vmul.f32 1.0, %v3016
          %v3018 = vrcp.pop %v3001
          %v3019 = vmul.f32 %v3001, %v3018
          %v3020 = vsub.f32 1.0, %v3019
          %v3021 = vmul.f32 %v3018, %v3020
          %v3022 = vadd.f32 %v3018, %v3021
          %vm3023 = vweird.f32 %v3001
          %vm3024 = vweird.f32 %v3018
          %vm3025 = vmor %vm3023, %vm3024
          %v3026 = vsel %vm3025, %v3018, %v3022
          %v3027 = vand.u32 2147483647, %v3001
          %vm3028 = vcmp.eq.f32.partialorder %v3027, 8.507059e+37
          %v3029 = vand.u32 %v3001, 2147483648
          %v3030 = vor.u32 1.1754944e-38, %v3029
          %v3031 = vsel %vm3028, %v3030, %v3026
          %v3032 = vmul.f32 1.0, %v3031
          %v3033 = vrcp.pop %v3002
          %v3034 = vmul.f32 %v3002, %v3033
          %v3035 = vsub.f32 1.0, %v3034
          %v3036 = vmul.f32 %v3033, %v3035
          %v3037 = vadd.f32 %v3033, %v3036
          %vm3038 = vweird.f32 %v3002
          %vm3039 = vweird.f32 %v3033
          %vm3040 = vmor %vm3038, %vm3039
          %v3041 = vsel %vm3040, %v3033, %v3037
          %v3042 = vand.u32 2147483647, %v3002
          %vm3043 = vcmp.eq.f32.partialorder %v3042, 8.507059e+37
          %v3044 = vand.u32 %v3002, 2147483648
          %v3045 = vor.u32 1.1754944e-38, %v3044
          %v3046 = vsel %vm3043, %v3045, %v3041
          %v3047 = vmul.f32 1.0, %v3046
          %v3048 = vmul.f32 %v2983, %v3017
          %v3049 = vmul.f32 %v2985, %v3032
          %v3050 = vmul.f32 %v2988, %v3047
          %v3051 = vmul.f32 %v3048, %v1034
          %v3052 = vmul.f32 %v3049, %v1039
          %v3053 = vmul.f32 %v3050, %v1044
          %s3054 = smul.addr %s2899, 4
          %s3055 = scalar_lea.vmem %s17, %s3054
          %v3056 = vld [vmem:[%s3055] sm:$0xf]
          %v3057 = vld [vmem:[%s3055 + $0x4] sm:$0xf]
          %v3058 = vld [vmem:[%s3055 + $0x8] sm:$0xf]
          %v3059 = vld [vmem:[%s3055 + $0xc] sm:$0xf]
          %v3060 = vld [vmem:[%s3055 + $0x10] sm:$0xf]
          %v3061 = vld [vmem:[%s3055 + $0x14] sm:$0xf]
          %v3062 = vld [vmem:[%s3055 + $0x18] sm:$0xf]
          %v3063 = vld [vmem:[%s3055 + $0x1c] sm:$0xf]
          %v3064 = vld [vmem:[%s3055 + $0x20] sm:$0xf]
          %v3065 = vld [vmem:[%s3055 + $0x24] sm:$0xf]
          %v3066 = vld [vmem:[%s3055 + $0x28] sm:$0xf]
          %v3067 = vld [vmem:[%s3055 + $0x2c] sm:$0xf]
          %v3068 = vld [vmem:[%s3055 + $0x30] sm:$0xf]
          %v3069 = vld [vmem:[%s3055 + $0x34] sm:$0xf]
          %v3070 = vld [vmem:[%s3055 + $0x38] sm:$0xf]
          %v3071 = vld [vmem:[%s3055 + $0x3c] sm:$0xf]
          %v3072 = vpack.c.bf16 %v3052, %v3051
          %v3073 = vpack.c.bf16 %v3053, %v3053
          %s3074 = scalar_lea.vmem %s18, %s2123
          %v3075 = vld [vmem:[%s3074] sm:$0x1]
          %v3077 = vperm.slane %v3075, 0
          %v3095 = vunpack.c.l.b16 %v3056
          %v3096 = vunpack.c.l.b16 %v3057
          %v3097 = vunpack.c.l.b16 %v3058
          %v3098 = vunpack.c.l.b16 %v3059
          %v3099 = vunpack.c.l.b16 %v3060
          %v3100 = vunpack.c.l.b16 %v3061
          %v3101 = vunpack.c.l.b16 %v3062
          %v3102 = vunpack.c.l.b16 %v3063
          %v3103 = vunpack.c.l.b16 %v3064
          %v3104 = vunpack.c.l.b16 %v3065
          %v3105 = vunpack.c.l.b16 %v3066
          %v3106 = vunpack.c.l.b16 %v3067
          %v3107 = vunpack.c.l.b16 %v3068
          %v3108 = vunpack.c.l.b16 %v3069
          %v3109 = vunpack.c.l.b16 %v3070
          %v3110 = vunpack.c.l.b16 %v3071
          %v3111 = vpack.c.b16 %v3096, %v3095
          %v3112 = vpack.c.b16 %v3098, %v3097
          %v3113 = vpack.c.b16 %v3100, %v3099
          %v3114 = vpack.c.b16 %v3102, %v3101
          %v3115 = vpack.c.b16 %v3104, %v3103
          %v3116 = vpack.c.b16 %v3106, %v3105
          %v3117 = vpack.c.b16 %v3108, %v3107
          %v3118 = vpack.c.b16 %v3110, %v3109
          %3127 = vmatpush.bf16.msra.mxu0 %v3118
          %3128 = vmatpush.bf16.msra.mxu0 %v3117
          %3129 = vmatpush.bf16.msra.mxu0 %v3116
          %3130 = vmatpush.bf16.msra.mxu0 %v3115
          %3131 = vmatpush.bf16.msra.mxu0 %v3114
          %3132 = vmatpush.bf16.msra.mxu0 %v3113
          %3133 = vmatpush.bf16.msra.mxu0 %v3112
          %3134 = vmatpush.bf16.msra.mxu0 %v3111
          %3135 = vmatmul.bf16.gmra.mxu0 %v3072
          %v3136 = vpop.f32.mrf.mxu0
          %v3137 = vadd.f32 %v3077, %v3136
          %v3138 = vpop.f32.mrf.mxu0
          %v3139 = vadd.f32 %v3077, %v3138
          %3140 = vmatmul.bf16.gmra.mxu0 %v3073
          %v3141 = vpop.f32.mrf.mxu0
          %v3142 = vadd.f32 %v3077, %v3141
          %v3143 = vpop.f32.mrf.mxu0
          %3144 = vdwg.mxu0
          %v3145 = vxor.u32 %v3137, 2147483648
          %v3146 = vxor.u32 %v3139, 2147483648
          %v3147 = vxor.u32 %v3142, 2147483648
          %v3148 = vmul.f32 %v3145, 1.442695
          %v3149 = vpow.pop %v3148
          %v3150 = vmul.f32 %v3146, 1.442695
          %v3151 = vpow.pop %v3150
          %v3152 = vmul.f32 %v3147, 1.442695
          %v3153 = vpow.pop %v3152
          %v3154 = vadd.f32 %v3149, 1.0
          %v3155 = vadd.f32 %v3151, 1.0
          %v3156 = vadd.f32 %v3153, 1.0
          %v3157 = vrcp.pop %v3154
          %v3158 = vmul.f32 %v3154, %v3157
          %v3159 = vsub.f32 1.0, %v3158
          %v3160 = vmul.f32 %v3157, %v3159
          %v3161 = vadd.f32 %v3157, %v3160
          %vm3162 = vweird.f32 %v3154
          %vm3163 = vweird.f32 %v3157
          %vm3164 = vmor %vm3162, %vm3163
          %v3165 = vsel %vm3164, %v3157, %v3161
          %v3166 = vand.u32 2147483647, %v3154
          %vm3167 = vcmp.eq.f32.partialorder %v3166, 8.507059e+37
          %v3168 = vand.u32 %v3154, 2147483648
          %v3169 = vor.u32 1.1754944e-38, %v3168
          %v3170 = vsel %vm3167, %v3169, %v3165
          %v3171 = vmul.f32 1.0, %v3170
          %v3172 = vrcp.pop %v3155
          %v3173 = vmul.f32 %v3155, %v3172
          %v3174 = vsub.f32 1.0, %v3173
          %v3175 = vmul.f32 %v3172, %v3174
          %v3176 = vadd.f32 %v3172, %v3175
          %vm3177 = vweird.f32 %v3155
          %vm3178 = vweird.f32 %v3172
          %vm3179 = vmor %vm3177, %vm3178
          %v3180 = vsel %vm3179, %v3172, %v3176
          %v3181 = vand.u32 2147483647, %v3155
          %vm3182 = vcmp.eq.f32.partialorder %v3181, 8.507059e+37
          %v3183 = vand.u32 %v3155, 2147483648
          %v3184 = vor.u32 1.1754944e-38, %v3183
          %v3185 = vsel %vm3182, %v3184, %v3180
          %v3186 = vmul.f32 1.0, %v3185
          %v3187 = vrcp.pop %v3156
          %v3188 = vmul.f32 %v3156, %v3187
          %v3189 = vsub.f32 1.0, %v3188
          %v3190 = vmul.f32 %v3187, %v3189
          %v3191 = vadd.f32 %v3187, %v3190
          %vm3192 = vweird.f32 %v3156
          %vm3193 = vweird.f32 %v3187
          %vm3194 = vmor %vm3192, %vm3193
          %v3195 = vsel %vm3194, %v3187, %v3191
          %v3196 = vand.u32 2147483647, %v3156
          %vm3197 = vcmp.eq.f32.partialorder %v3196, 8.507059e+37
          %v3198 = vand.u32 %v3156, 2147483648
          %v3199 = vor.u32 1.1754944e-38, %v3198
          %v3200 = vsel %vm3197, %v3199, %v3195
          %v3201 = vmul.f32 1.0, %v3200
          %v3202 = vmul.f32 %v3137, %v3171
          %v3203 = vmul.f32 %v3139, %v3186
          %v3204 = vmul.f32 %v3142, %v3201
          %s3205 = smul.addr %s2899, 4
          %s3206 = scalar_lea.vmem %s19, %s3205
          %v3207 = vld [vmem:[%s3206] sm:$0xf]
          %v3208 = vld [vmem:[%s3206 + $0x4] sm:$0xf]
          %v3209 = vld [vmem:[%s3206 + $0x8] sm:$0xf]
          %v3210 = vld [vmem:[%s3206 + $0xc] sm:$0xf]
          %v3211 = vld [vmem:[%s3206 + $0x10] sm:$0xf]
          %v3212 = vld [vmem:[%s3206 + $0x14] sm:$0xf]
          %v3213 = vld [vmem:[%s3206 + $0x18] sm:$0xf]
          %v3214 = vld [vmem:[%s3206 + $0x1c] sm:$0xf]
          %v3215 = vld [vmem:[%s3206 + $0x20] sm:$0xf]
          %v3216 = vld [vmem:[%s3206 + $0x24] sm:$0xf]
          %v3217 = vld [vmem:[%s3206 + $0x28] sm:$0xf]
          %v3218 = vld [vmem:[%s3206 + $0x2c] sm:$0xf]
          %v3219 = vld [vmem:[%s3206 + $0x30] sm:$0xf]
          %v3220 = vld [vmem:[%s3206 + $0x34] sm:$0xf]
          %v3221 = vld [vmem:[%s3206 + $0x38] sm:$0xf]
          %v3222 = vld [vmem:[%s3206 + $0x3c] sm:$0xf]
          %v3223 = vpack.c.bf16 %v3203, %v3202
          %v3224 = vpack.c.bf16 %v3204, %v3204
          %v3241 = vunpack.c.l.b16 %v3207
          %v3242 = vunpack.c.l.b16 %v3208
          %v3243 = vunpack.c.l.b16 %v3209
          %v3244 = vunpack.c.l.b16 %v3210
          %v3245 = vunpack.c.l.b16 %v3211
          %v3246 = vunpack.c.l.b16 %v3212
          %v3247 = vunpack.c.l.b16 %v3213
          %v3248 = vunpack.c.l.b16 %v3214
          %v3249 = vunpack.c.l.b16 %v3215
          %v3250 = vunpack.c.l.b16 %v3216
          %v3251 = vunpack.c.l.b16 %v3217
          %v3252 = vunpack.c.l.b16 %v3218
          %v3253 = vunpack.c.l.b16 %v3219
          %v3254 = vunpack.c.l.b16 %v3220
          %v3255 = vunpack.c.l.b16 %v3221
          %v3256 = vunpack.c.l.b16 %v3222
          %v3257 = vpack.c.b16 %v3242, %v3241
          %v3258 = vpack.c.b16 %v3244, %v3243
          %v3259 = vpack.c.b16 %v3246, %v3245
          %v3260 = vpack.c.b16 %v3248, %v3247
          %v3261 = vpack.c.b16 %v3250, %v3249
          %v3262 = vpack.c.b16 %v3252, %v3251
          %v3263 = vpack.c.b16 %v3254, %v3253
          %v3264 = vpack.c.b16 %v3256, %v3255
          %3273 = vmatpush.bf16.msra.mxu0 %v3264
          %3274 = vmatpush.bf16.msra.mxu0 %v3263
          %3275 = vmatpush.bf16.msra.mxu0 %v3262
          %3276 = vmatpush.bf16.msra.mxu0 %v3261
          %3277 = vmatpush.bf16.msra.mxu0 %v3260
          %3278 = vmatpush.bf16.msra.mxu0 %v3259
          %3279 = vmatpush.bf16.msra.mxu0 %v3258
          %3280 = vmatpush.bf16.msra.mxu0 %v3257
          %3281 = vmatmul.bf16.gmra.mxu0 %v3223
          %v3282 = vpop.f32.mrf.mxu0
          %v3283 = vadd.f32 0.0, %v3282
          %v3284 = vpop.f32.mrf.mxu0
          %v3285 = vadd.f32 0.0, %v3284
          %3286 = vmatmul.bf16.gmra.mxu0 %v3224
          %v3287 = vpop.f32.mrf.mxu0
          %v3288 = vadd.f32 0.0, %v3287
          %v3289 = vpop.f32.mrf.mxu0
          %3290 = vdwg.mxu0
          %3292 = vset.pattern.permute.xlu0 0
          %3293 = vperm.xlu0 %3292, %v3283
          %v3294 = vpop.permute.xlu0 %3293
          %3297 = vset.pattern.permute.xlu0 0
          %3298 = vperm.xlu0 %3297, %v3285
          %v3299 = vpop.permute.xlu0 %3298
          %3302 = vset.pattern.permute.xlu0 0
          %3303 = vperm.xlu0 %3302, %v3288
          %v3304 = vpop.permute.xlu0 %3303
          %v3306 = vmul.f32 %v2420, %v3294
          %v3307 = vmul.f32 %v2421, %v3299
          %v3308 = vmul.f32 %v2422, %v3304
          %3309 = vset.pattern.permute.xlu0 1
          %3310 = vperm.xlu0 %3309, %v3283
          %v3311 = vpop.permute.xlu0 %3310
          %3313 = vset.pattern.permute.xlu0 1
          %3314 = vperm.xlu0 %3313, %v3285
          %v3315 = vpop.permute.xlu0 %3314
          %3317 = vset.pattern.permute.xlu0 1
          %3318 = vperm.xlu0 %3317, %v3288
          %v3319 = vpop.permute.xlu0 %3318
          %v3321 = vmul.f32 %v2480, %v3311
          %v3322 = vmul.f32 %v2481, %v3315
          %v3323 = vmul.f32 %v2482, %v3319
          %v3324 = vadd.f32 %v3306, %v3321
          %v3325 = vadd.f32 %v3307, %v3322
          %v3326 = vadd.f32 %v3308, %v3323
          %3327 = vset.pattern.permute.xlu0 2
          %3328 = vperm.xlu0 %3327, %v3283
          %v3329 = vpop.permute.xlu0 %3328
          %3331 = vset.pattern.permute.xlu0 2
          %3332 = vperm.xlu0 %3331, %v3285
          %v3333 = vpop.permute.xlu0 %3332
          %3335 = vset.pattern.permute.xlu0 2
          %3336 = vperm.xlu0 %3335, %v3288
          %v3337 = vpop.permute.xlu0 %3336
          %v3339 = vmul.f32 %v2600, %v3329
          %v3340 = vmul.f32 %v2601, %v3333
          %v3341 = vmul.f32 %v2602, %v3337
          %v3342 = vadd.f32 %v3324, %v3339
          %v3343 = vadd.f32 %v3325, %v3340
          %v3344 = vadd.f32 %v3326, %v3341
          %v3345 = vmax.f32 %v3342, -100.0
          %v3346 = vmax.f32 %v3343, -100.0
          %v3347 = vmax.f32 %v3344, -100.0
          %v3348 = vmin.f32 %v3345, 100.0
          %v3349 = vmin.f32 %v3346, 100.0
          %v3350 = vmin.f32 %v3347, 100.0
          %v3351 = vpack.c.bf16 %v3349, %v3348
          %v3352 = vpack.c.bf16 %v3350, %v3350
          %vm3353 = vcmask 162816
          %v3355 = vsel %vm3353, %v1015, 0
          %v3358 = vsel %vm1057, %v3073, 0
          %v3361 = vsel %vm1057, %v3352, 0
          %3363 = vmatpush.bf16.msra.mxu0 0
          %3364 = vmatpush.bf16.msra.mxu0 0
          %3365 = vmatpush.bf16.msra.mxu0 0
          %3366 = vmatpush.bf16.msra.mxu0 0
          %3367 = vmatpush.bf16.msra.mxu0 0
          %3368 = vmatpush.bf16.msra.mxu0 0
          %3369 = vmatpush.bf16.msra.mxu0 %v3358
          %3370 = vmatpush.bf16.msra.mxu0 %v3072
          %3371 = vmatmul.bf16.gmra.mxu0 %v3355
          %v3372 = vpop.f32.mrf.mxu0
          %v3373 = vadd.f32 0.0, %v3372
          %v3374 = vpop.f32.mrf.mxu0
          %3375 = vdwg.mxu0
          %3376 = vmatpush.bf16.msra.mxu0 0
          %3377 = vmatpush.bf16.msra.mxu0 0
          %3378 = vmatpush.bf16.msra.mxu0 0
          %3379 = vmatpush.bf16.msra.mxu0 0
          %3380 = vmatpush.bf16.msra.mxu0 0
          %3381 = vmatpush.bf16.msra.mxu0 0
          %3382 = vmatpush.bf16.msra.mxu0 %v3361
          %3383 = vmatpush.bf16.msra.mxu0 %v3351
          %3384 = vmatmul.bf16.gmra.mxu0 %v3355
          %v3385 = vpop.f32.mrf.mxu0
          %v3386 = vadd.f32 0.0, %v3385
          %v3387 = vpop.f32.mrf.mxu0
          %3388 = vdwg.mxu0
          %v3389 = vmul.f32 %v3386, %v1021
          %v3390 = vadd.f32 %v2129, %v3389
          %s3391 = smul.u32 %s2123, 32
          %s3392 = smul.addr %s3391, 4
          %s3393 = scalar_lea.vmem %s20, %s3392
          %v3394 = vld [vmem:[%s3393] sm:$0xf]
          %v3395 = vld [vmem:[%s3393 + $0x4] sm:$0xf]
          %v3396 = vld [vmem:[%s3393 + $0x8] sm:$0xf]
          %v3397 = vld [vmem:[%s3393 + $0xc] sm:$0xf]
          %v3398 = vld [vmem:[%s3393 + $0x10] sm:$0xf]
          %v3399 = vld [vmem:[%s3393 + $0x14] sm:$0xf]
          %v3400 = vld [vmem:[%s3393 + $0x18] sm:$0xf]
          %v3401 = vld [vmem:[%s3393 + $0x1c] sm:$0xf]
          %v3402 = vld [vmem:[%s3393 + $0x20] sm:$0xf]
          %v3403 = vld [vmem:[%s3393 + $0x24] sm:$0xf]
          %v3404 = vld [vmem:[%s3393 + $0x28] sm:$0xf]
          %v3405 = vld [vmem:[%s3393 + $0x2c] sm:$0xf]
          %v3406 = vld [vmem:[%s3393 + $0x30] sm:$0xf]
          %v3407 = vld [vmem:[%s3393 + $0x34] sm:$0xf]
          %v3408 = vld [vmem:[%s3393 + $0x38] sm:$0xf]
          %v3409 = vld [vmem:[%s3393 + $0x3c] sm:$0xf]
          %v3410 = vld [vmem:[%s3393 + $0x40] sm:$0xf]
          %v3411 = vld [vmem:[%s3393 + $0x44] sm:$0xf]
          %v3412 = vld [vmem:[%s3393 + $0x48] sm:$0xf]
          %v3413 = vld [vmem:[%s3393 + $0x4c] sm:$0xf]
          %v3414 = vld [vmem:[%s3393 + $0x50] sm:$0xf]
          %v3415 = vld [vmem:[%s3393 + $0x54] sm:$0xf]
          %v3416 = vld [vmem:[%s3393 + $0x58] sm:$0xf]
          %v3417 = vld [vmem:[%s3393 + $0x5c] sm:$0xf]
          %v3418 = vld [vmem:[%s3393 + $0x60] sm:$0xf]
          %v3419 = vld [vmem:[%s3393 + $0x64] sm:$0xf]
          %v3420 = vld [vmem:[%s3393 + $0x68] sm:$0xf]
          %v3421 = vld [vmem:[%s3393 + $0x6c] sm:$0xf]
          %v3422 = vld [vmem:[%s3393 + $0x70] sm:$0xf]
          %v3423 = vld [vmem:[%s3393 + $0x74] sm:$0xf]
          %v3424 = vld [vmem:[%s3393 + $0x78] sm:$0xf]
          %v3425 = vld [vmem:[%s3393 + $0x7c] sm:$0xf]
          %v3426 = vpack.c.bf16 %v3373, %v3373
          %s3427 = scalar_lea.vmem %s21, %s2123
          %v3428 = vld [vmem:[%s3427] sm:$0x1]
          %v3430 = vperm.slane %v3428, 0
          %v3464 = vunpack.c.l.b16 %v3394
          %v3465 = vunpack.c.l.b16 %v3395
          %v3466 = vunpack.c.l.b16 %v3396
          %v3467 = vunpack.c.l.b16 %v3397
          %v3468 = vunpack.c.l.b16 %v3398
          %v3469 = vunpack.c.l.b16 %v3399
          %v3470 = vunpack.c.l.b16 %v3400
          %v3471 = vunpack.c.l.b16 %v3401
          %v3472 = vunpack.c.l.b16 %v3402
          %v3473 = vunpack.c.l.b16 %v3403
          %v3474 = vunpack.c.l.b16 %v3404
          %v3475 = vunpack.c.l.b16 %v3405
          %v3476 = vunpack.c.l.b16 %v3406
          %v3477 = vunpack.c.l.b16 %v3407
          %v3478 = vunpack.c.l.b16 %v3408
          %v3479 = vunpack.c.l.b16 %v3409
          %v3480 = vunpack.c.l.b16 %v3410
          %v3481 = vunpack.c.l.b16 %v3411
          %v3482 = vunpack.c.l.b16 %v3412
          %v3483 = vunpack.c.l.b16 %v3413
          %v3484 = vunpack.c.l.b16 %v3414
          %v3485 = vunpack.c.l.b16 %v3415
          %v3486 = vunpack.c.l.b16 %v3416
          %v3487 = vunpack.c.l.b16 %v3417
          %v3488 = vunpack.c.l.b16 %v3418
          %v3489 = vunpack.c.l.b16 %v3419
          %v3490 = vunpack.c.l.b16 %v3420
          %v3491 = vunpack.c.l.b16 %v3421
          %v3492 = vunpack.c.l.b16 %v3422
          %v3493 = vunpack.c.l.b16 %v3423
          %v3494 = vunpack.c.l.b16 %v3424
          %v3495 = vunpack.c.l.b16 %v3425
          %v3496 = vpack.c.b16 %v3465, %v3464
          %v3497 = vpack.c.b16 %v3467, %v3466
          %v3498 = vpack.c.b16 %v3469, %v3468
          %v3499 = vpack.c.b16 %v3471, %v3470
          %v3500 = vpack.c.b16 %v3473, %v3472
          %v3501 = vpack.c.b16 %v3475, %v3474
          %v3502 = vpack.c.b16 %v3477, %v3476
          %v3503 = vpack.c.b16 %v3479, %v3478
          %v3504 = vpack.c.b16 %v3481, %v3480
          %v3505 = vpack.c.b16 %v3483, %v3482
          %v3506 = vpack.c.b16 %v3485, %v3484
          %v3507 = vpack.c.b16 %v3487, %v3486
          %v3508 = vpack.c.b16 %v3489, %v3488
          %v3509 = vpack.c.b16 %v3491, %v3490
          %v3510 = vpack.c.b16 %v3493, %v3492
          %v3511 = vpack.c.b16 %v3495, %v3494
          %3528 = vmatpush.bf16.msra.mxu0 %v3503
          %3529 = vmatpush.bf16.msra.mxu0 %v3502
          %3530 = vmatpush.bf16.msra.mxu0 %v3501
          %3531 = vmatpush.bf16.msra.mxu0 %v3500
          %3532 = vmatpush.bf16.msra.mxu0 %v3499
          %3533 = vmatpush.bf16.msra.mxu0 %v3498
          %3534 = vmatpush.bf16.msra.mxu0 %v3497
          %3535 = vmatpush.bf16.msra.mxu0 %v3496
          %3536 = vmatmul.bf16.gmra.mxu0 %v2130
          %v3537 = vpop.f32.mrf.mxu0
          %v3538 = vadd.f32 %v3430, %v3537
          %v3539 = vpop.f32.mrf.mxu0
          %3540 = vdwg.mxu0
          %3541 = vmatpush.bf16.msra.mxu0 %v3511
          %3542 = vmatpush.bf16.msra.mxu0 %v3510
          %3543 = vmatpush.bf16.msra.mxu0 %v3509
          %3544 = vmatpush.bf16.msra.mxu0 %v3508
          %3545 = vmatpush.bf16.msra.mxu0 %v3507
          %3546 = vmatpush.bf16.msra.mxu0 %v3506
          %3547 = vmatpush.bf16.msra.mxu0 %v3505
          %3548 = vmatpush.bf16.msra.mxu0 %v3504
          %3549 = vmatmul.bf16.gmra.mxu0 %v3426
          %v3550 = vpop.f32.mrf.mxu0
          %v3551 = vadd.f32 %v3538, %v3550
          %v3552 = vpop.f32.mrf.mxu0
          %3553 = vdwg.mxu0
          %v3554 = vxor.u32 %v3551, 2147483648
          %v3555 = vmul.f32 %v3554, 1.442695
          %v3556 = vpow.pop %v3555
          %v3557 = vadd.f32 %v3556, 1.0
          %v3558 = vrcp.pop %v3557
          %v3559 = vmul.f32 %v3557, %v3558
          %v3560 = vsub.f32 1.0, %v3559
          %v3561 = vmul.f32 %v3558, %v3560
          %v3562 = vadd.f32 %v3558, %v3561
          %vm3563 = vweird.f32 %v3557
          %vm3564 = vweird.f32 %v3558
          %vm3565 = vmor %vm3563, %vm3564
          %v3566 = vsel %vm3565, %v3558, %v3562
          %v3567 = vand.u32 2147483647, %v3557
          %vm3568 = vcmp.eq.f32.partialorder %v3567, 8.507059e+37
          %v3569 = vand.u32 %v3557, 2147483648
          %v3570 = vor.u32 1.1754944e-38, %v3569
          %v3571 = vsel %vm3568, %v3570, %v3566
          %v3572 = vmul.f32 1.0, %v3571
          %v3573 = vmul.f32 %v3551, %v3572
          %s3574 = smul.addr %s2899, 4
          %s3575 = scalar_lea.vmem [#allocation2], %s3574
          %v3576 = vld [vmem:[%s3575] sm:$0xf]
          %v3577 = vld [vmem:[%s3575 + $0x4] sm:$0xf]
          %v3578 = vld [vmem:[%s3575 + $0x8] sm:$0xf]
          %v3579 = vld [vmem:[%s3575 + $0xc] sm:$0xf]
          %v3580 = vld [vmem:[%s3575 + $0x10] sm:$0xf]
          %v3581 = vld [vmem:[%s3575 + $0x14] sm:$0xf]
          %v3582 = vld [vmem:[%s3575 + $0x18] sm:$0xf]
          %v3583 = vld [vmem:[%s3575 + $0x1c] sm:$0xf]
          %v3584 = vld [vmem:[%s3575 + $0x20] sm:$0xf]
          %v3585 = vld [vmem:[%s3575 + $0x24] sm:$0xf]
          %v3586 = vld [vmem:[%s3575 + $0x28] sm:$0xf]
          %v3587 = vld [vmem:[%s3575 + $0x2c] sm:$0xf]
          %v3588 = vld [vmem:[%s3575 + $0x30] sm:$0xf]
          %v3589 = vld [vmem:[%s3575 + $0x34] sm:$0xf]
          %v3590 = vld [vmem:[%s3575 + $0x38] sm:$0xf]
          %v3591 = vld [vmem:[%s3575 + $0x3c] sm:$0xf]
          %v3592 = vpack.c.bf16 %v3573, %v3573
          %v3609 = vunpack.c.l.b16 %v3576
          %v3610 = vunpack.c.l.b16 %v3577
          %v3611 = vunpack.c.l.b16 %v3578
          %v3612 = vunpack.c.l.b16 %v3579
          %v3613 = vunpack.c.l.b16 %v3580
          %v3614 = vunpack.c.l.b16 %v3581
          %v3615 = vunpack.c.l.b16 %v3582
          %v3616 = vunpack.c.l.b16 %v3583
          %v3617 = vunpack.c.l.b16 %v3584
          %v3618 = vunpack.c.l.b16 %v3585
          %v3619 = vunpack.c.l.b16 %v3586
          %v3620 = vunpack.c.l.b16 %v3587
          %v3621 = vunpack.c.l.b16 %v3588
          %v3622 = vunpack.c.l.b16 %v3589
          %v3623 = vunpack.c.l.b16 %v3590
          %v3624 = vunpack.c.l.b16 %v3591
          %v3625 = vpack.c.b16 %v3610, %v3609
          %v3626 = vpack.c.b16 %v3612, %v3611
          %v3627 = vpack.c.b16 %v3614, %v3613
          %v3628 = vpack.c.b16 %v3616, %v3615
          %v3629 = vpack.c.b16 %v3618, %v3617
          %v3630 = vpack.c.b16 %v3620, %v3619
          %v3631 = vpack.c.b16 %v3622, %v3621
          %v3632 = vpack.c.b16 %v3624, %v3623
          %3641 = vmatpush.bf16.msra.mxu0 %v3632
          %3642 = vmatpush.bf16.msra.mxu0 %v3631
          %3643 = vmatpush.bf16.msra.mxu0 %v3630
          %3644 = vmatpush.bf16.msra.mxu0 %v3629
          %3645 = vmatpush.bf16.msra.mxu0 %v3628
          %3646 = vmatpush.bf16.msra.mxu0 %v3627
          %3647 = vmatpush.bf16.msra.mxu0 %v3626
          %3648 = vmatpush.bf16.msra.mxu0 %v3625
          %3649 = vmatmul.bf16.gmra.mxu0 %v3592
          %v3650 = vpop.f32.mrf.mxu0
          %v3651 = vadd.f32 0.0, %v3650
          %v3652 = vpop.f32.mrf.mxu0
          %3653 = vdwg.mxu0
          %v3654 = vadd.f32 %v2128, %v3651
          %s3655 = scalar_lea.vmem %s23, %s2123
          %v3656 = vld [vmem:[%s3655] sm:$0x1]
          %v3658 = vperm.slane %v3656, 0
          %v3660 = vadd.f32 %v3654, %v3658
          %v3661 = vsel %vm1085, %v3660, 0.0
          %3662 = vadd.xlane.f32.xlu0 %v3661
          %v3663 = vpop.xlane.xlu0 %3662
          %v3664 = vmul.f32 %v3663, 0.03125
          %v3665 = vmul.f32 %v3660, %v3660
          %v3666 = vsel %vm1085, %v3665, 0.0
          %3667 = vadd.xlane.f32.xlu0 %v3666
          %v3668 = vpop.xlane.xlu0 %3667
          %v3669 = vmul.f32 %v3668, 0.03125
          %v3670 = vmul.f32 %v3664, %v3664
          %v3671 = vsub.f32 %v3669, %v3670
          %v3672 = vsub.f32 %v3660, %v3664
          %v3673 = vadd.f32 %v3671, 1e-05
          %v3674 = vrsqrt.pop %v3673
          %v3675 = vmul.f32 %v3674, %v3673
          %v3676 = vmul.f32 %v3675, %v3674
          %v3677 = vmul.f32 0.5, %v3676
          %v3678 = vsub.f32 1.5, %v3677
          %v3679 = vmul.f32 %v3674, %v3678
          %vm3680 = vweird.f32 %v3673
          %vm3681 = vweird.f32 %v3674
          %vm3682 = vmor %vm3680, %vm3681
          %v3683 = vsel %vm3682, %v3674, %v3679
          %v3684 = vmul.f32 %v3672, %v3683
          %s3685 = scalar_lea.vmem %s24, %s2123
          %v3686 = vld [vmem:[%s3685] sm:$0x1]
          %v3688 = vperm.slane %v3686, 0
          %v3690 = vmul.f32 %v3684, %v3688
          %s3691 = scalar_lea.vmem %s25, %s2123
          %v3692 = vld [vmem:[%s3691] sm:$0x1]
          %v3694 = vperm.slane %v3692, 0
          %v3696 = vadd.f32 %v3690, %v3694
          %v3697 = vmul.f32 %v3696, %v1026
        $region141: #{tpu_custom_call.1} parent=131 // loop_footer
          %s2127 = sadd.s32 1, %s2123
        $region142: #{tpu_custom_call.1} parent=131 // loop_footer_branch
          %2122 = sbr.rel target = $region138
        $region143: #{tpu_custom_call.1} parent=131 // loop_exit
          _
        %v3698 = vld [vmem:[%s26] sm:$0xf]
        %v3699 = vld [vmem:[%s26 + $0x4] sm:$0xf]
        %v3700 = vld [vmem:[%s26 + $0x8] sm:$0xf]
        %v3701 = vld [vmem:[%s26 + $0xc] sm:$0xf]
        %v3702 = vld [vmem:[%s26 + $0x10] sm:$0xf]
        %v3703 = vld [vmem:[%s26 + $0x14] sm:$0xf]
        %v3704 = vld [vmem:[%s26 + $0x18] sm:$0xf]
        %v3705 = vld [vmem:[%s26 + $0x1c] sm:$0xf]
        %v3706 = vld [vmem:[%s26 + $0x20] sm:$0xf]
        %v3707 = vld [vmem:[%s26 + $0x24] sm:$0xf]
        %v3708 = vld [vmem:[%s26 + $0x28] sm:$0xf]
        %v3709 = vld [vmem:[%s26 + $0x2c] sm:$0xf]
        %v3710 = vld [vmem:[%s26 + $0x30] sm:$0xf]
        %v3711 = vld [vmem:[%s26 + $0x34] sm:$0xf]
        %v3712 = vld [vmem:[%s26 + $0x38] sm:$0xf]
        %v3713 = vld [vmem:[%s26 + $0x3c] sm:$0xf]
        %v3714 = vpack.c.bf16 %v2128, %v2128
        %v3715 = vld [vmem:[%s27] sm:$0x1]
        %v3717 = vperm.slane %v3715, 0
        %v3735 = vunpack.c.l.b16 %v3698
        %v3736 = vunpack.c.l.b16 %v3699
        %v3737 = vunpack.c.l.b16 %v3700
        %v3738 = vunpack.c.l.b16 %v3701
        %v3739 = vunpack.c.l.b16 %v3702
        %v3740 = vunpack.c.l.b16 %v3703
        %v3741 = vunpack.c.l.b16 %v3704
        %v3742 = vunpack.c.l.b16 %v3705
        %v3743 = vunpack.c.l.b16 %v3706
        %v3744 = vunpack.c.l.b16 %v3707
        %v3745 = vunpack.c.l.b16 %v3708
        %v3746 = vunpack.c.l.b16 %v3709
        %v3747 = vunpack.c.l.b16 %v3710
        %v3748 = vunpack.c.l.b16 %v3711
        %v3749 = vunpack.c.l.b16 %v3712
        %v3750 = vunpack.c.l.b16 %v3713
        %v3751 = vpack.c.b16 %v3736, %v3735
        %v3752 = vpack.c.b16 %v3738, %v3737
        %v3753 = vpack.c.b16 %v3740, %v3739
        %v3754 = vpack.c.b16 %v3742, %v3741
        %v3755 = vpack.c.b16 %v3744, %v3743
        %v3756 = vpack.c.b16 %v3746, %v3745
        %v3757 = vpack.c.b16 %v3748, %v3747
        %v3758 = vpack.c.b16 %v3750, %v3749
        %3767 = vmatpush.bf16.msra.mxu0 %v3758
        %3768 = vmatpush.bf16.msra.mxu0 %v3757
        %3769 = vmatpush.bf16.msra.mxu0 %v3756
        %3770 = vmatpush.bf16.msra.mxu0 %v3755
        %3771 = vmatpush.bf16.msra.mxu0 %v3754
        %3772 = vmatpush.bf16.msra.mxu0 %v3753
        %3773 = vmatpush.bf16.msra.mxu0 %v3752
        %3774 = vmatpush.bf16.msra.mxu0 %v3751
        %3775 = vmatmul.bf16.gmra.mxu0 %v3714
        %v3776 = vpop.f32.mrf.mxu0
        %v3777 = vadd.f32 %v3717, %v3776
        %v3778 = vpop.f32.mrf.mxu0
        %3779 = vdwg.mxu0
        %v3780 = vmul.f32 %v3777, %v1026
        %3782 = vrot.lane.b32.xlu0 %v2129, 4
        %v3783 = vpop.permute.xlu0 %3782
        %v3785 = vsel %vm1053, %v3780, %v3783
        %vm3786 = vcmask 53248
        %3787 = vst.msk [vmem:[%s965] sm:$0x1f] %vm3786, %v3785
        %p3788 = scmp.lt.s32.totalorder %s40, 1
        %s3789 = scalar_select %p3788, %s40, 1
        %s3790 = smul.addr %s3789, 8
        %s3791 = scalar_lea.vmem %s28, %s3790
        // Predicated region
        $region144: #{tpu_custom_call.1} parent=131 // pred_check
          %p3792 = pneg %p681
        $region145: #{tpu_custom_call.1} parent=131 // pred_check_branch
          %3794 = sbr.rel (%p3792) target = $region147
        $region146: #{tpu_custom_call.1} parent=131 // pred_region
          _
        $region147: #{tpu_custom_call.1} parent=131 // pred_fallthru
          _
      $region132: #{tpu_custom_call.1} parent=5 // pred_fallthru
        _
      %p3795 = scmp.le.s32.totalorder 2, %s35
      // Predicated region
      $region148: #{tpu_custom_call.1} parent=5 // pred_check
        %p3796 = pneg %p3795
      $region149: #{tpu_custom_call.1} parent=5 // pred_check_branch
        %3798 = sbr.rel (%p3796) target = $region151
      $region150: #{tpu_custom_call.1} parent=5 // pred_region
        %s3799 = ssub.s32 %s35, 2
        // Predicated region
        $region152: #{tpu_custom_call.1} parent=150 // pred_check
          %p3800 = pneg %p687
        $region153: #{tpu_custom_call.1} parent=150 // pred_check_branch
          %3802 = sbr.rel (%p3800) target = $region155
        $region154: #{tpu_custom_call.1} parent=150 // pred_region
          %p3803 = scmp.lt.s32.totalorder %s41, 1
          %s3804 = scalar_select %p3803, %s41, 1
          %s3805 = smul.addr %s3804, 8
          %s3806 = scalar_lea.vmem %s28, %s3805
        $region155: #{tpu_custom_call.1} parent=150 // pred_fallthru
          _
      $region151: #{tpu_custom_call.1} parent=5 // pred_fallthru
        _
    $region6: #{tpu_custom_call.1} parent=1 // loop_footer
      %s39 = sadd.s32 1, %s35
    $region7: #{tpu_custom_call.1} parent=1 // loop_footer_branch
      %34 = sbr.rel target = $region3
    $region8: #{tpu_custom_call.1} parent=1 // loop_exit
      _
    %3807 = vsyncpa [#allocation3], 1
    %s3808 = scalar_lea.sflag [#allocation3], 1
    %3809 = vsyncpa %s3808, 1

</llo_original>
